<compile_context>
chip_gen: v6e
topology: v6e:2x2x1
jax: 0.10.0
libtpu: 0.0.40
codegen_flags: <defaults>
</compile_context>

<pallas_src>
import jax
import jax.numpy as jnp
from jax.experimental import pallas as pl
from jax.experimental.pallas import tpu as pltpu


# ----------------------------- Pallas kernel --------------------------------


def _make_kernel(TB1, T2, T3, T4):
    """Fused WavEncoder kernel for fixed (static) sequence lengths.

    TB1 = T2 + 2 rows of the blocked layer-1 activation (6 time steps per row).
    """
    neg = 0.3  # LeakyReLU slope

    def kernel(x_ref, a1_ref, b1w_ref, bias1_ref, v2_ref, bias2_ref,
               w3_ref, bias3_ref, w4_ref, bias4_ref, o_ref,
               h1_ref, h2_ref, h3_ref):
        # ---- layer 1: Conv1d(1,16,15,stride=5,pad=1600) + BN + LeakyReLU ------
        # Input: padded waveform blocked 30 samples/row.  Output: activation blocked
        # 6 time steps/row (96 lanes).  Two matmuls over contiguous row slices; the
        # 15 taps x 6 phases are folded into the (30,96) weight matrices.
        xv = x_ref[0]                                        # (TB1+1, 30)
        pre1 = (jnp.dot(xv[:TB1], a1_ref[...], preferred_element_type=jnp.float32)
                + jnp.dot(xv[1:], b1w_ref[...], preferred_element_type=jnp.float32)
                + bias1_ref[...])
        h1_ref[...] = jnp.maximum(pre1, neg * pre1)          # (TB1, 96) blocked h1

        # ---- layer 2: Conv1d(16,32,15,stride=6) + BN + LeakyReLU --------------
        # Blocked input => 3 contiguous-slice matmuls with K = 6*16 = 96 (taps with
        # index >= 15 are zero in the packed weights, so the extra lanes are inert).
        acc2 = jnp.zeros((T2, 32), jnp.float32)
        for q in range(3):                                   # static unroll
            acc2 = acc2 + jnp.dot(h1_ref[pl.ds(q, T2), :], v2_ref[q],
                                  preferred_element_type=jnp.float32)
        pre2 = acc2 + bias2_ref[...]
        h2_ref[...] = jnp.maximum(pre2, neg * pre2)          # (T2, 32) natural layout

        # ---- layers 3/4: tiny -> 15 accumulating matmuls over stride-6 views --
        def conv_s6(src_ref, w_ref, b_ref, t_out, cout):
            acc = jnp.zeros((t_out, cout), jnp.float32)
            for k in range(15):                              # static unroll over taps
                acc = acc + jnp.dot(src_ref[pl.ds(k, t_out, stride=6), :], w_ref[k],
                                    preferred_element_type=jnp.float32)
            return acc + b_ref[...]

        h3 = conv_s6(h2_ref, w3_ref, bias3_ref, T3, 64)      # conv3 + BN folded
        h3_ref[...] = jnp.maximum(h3, neg * h3)
        o_ref[0] = conv_s6(h3_ref, w4_ref, bias4_ref, T4, 32)  # conv4 (no BN / act)

    return kernel


# ------------------------------ JAX wrapper ----------------------------------


def wav_encoder_forward(wav, params):
    """wav: (B, L) float32 -> (B, T_out, 32) float32  (== out.transpose(1, 2))."""
    B, L = wav.shape
    K, PAD = 15, 1600
    Lp = L + 2 * PAD
    T1 = (Lp - K) // 5 + 1
    T2 = (T1 - K) // 6 + 1
    T3 = (T2 - K) // 6 + 1
    T4 = (T3 - K) // 6 + 1
    TB1 = T2 + 2                    # blocked layer-1 rows (6 time steps per row)
    Ltot = 30 * (TB1 + 1)           # waveform length consumed by the blocked layout

    # Only HBM-side prep: symmetric conv padding + right zero-pad to a multiple of 30,
    # then a free reshape.  (Ltot >= Lp always; the extra zeros only feed lanes that hit
    # zero-padded weight taps, so they never affect valid outputs.)
    xp = jnp.pad(wav, ((0, 0), (PAD, PAD + (Ltot - Lp))))
    x30 = xp.reshape(B, TB1 + 1, 30)

    kernel = _make_kernel(TB1, T2, T3, T4)

    def full(shape):                # whole-array (grid-invariant) block
        return pl.BlockSpec(shape, lambda b: (0,) * len(shape))

    return pl.pallas_call(
        kernel,
        out_shape=jax.ShapeDtypeStruct((B, T4, 32), jnp.float32),
        grid=(B,),
        in_specs=[
            pl.BlockSpec((1, TB1 + 1, 30), lambda b: (b, 0, 0)),  # blocked waveform
            full((30, 96)), full((30, 96)), full((1, 96)),        # layer 1 packed (BN folded)
            full((3, 96, 32)), full((1, 32)),                     # layer 2 packed (BN folded)
            full((K, 32, 64)), full((1, 64)),                     # layer 3 (tap, Cin, Cout)
            full((K, 64, 32)), full((1, 32)),                     # layer 4
        ],
        out_specs=pl.BlockSpec((1, T4, 32), lambda b: (b, 0, 0)),
        scratch_shapes=[                                          # VMEM-resident activations
            pltpu.VMEM((TB1, 96), jnp.float32),                   # blocked h1
            pltpu.VMEM((T2, 32), jnp.float32),                    # h2
            pltpu.VMEM((T3, 64), jnp.float32),                    # h3
        ],
        compiler_params=pltpu.CompilerParams(
            dimension_semantics=("parallel",)),
    )(x30, params["a1"], params["b1w"], params["bias1"], params["v2"],
      params["bias2"], params["w3"], params["bias3"], params["w4"], params["bias4"])


# ------------------ parameter prep (done once, not per forward) ---------------


def prepare_params(raw):
    """Fold eval-mode BatchNorm into the convs and pack weights for the kernel."""
    # TODO(synk): BatchNorm uses eval-mode running statistics; train-mode batch stats
    # are not computed in-kernel.
    def fold(w, b, bn):
        s = bn["gamma"] * jax.lax.rsqrt(bn["var"] + 1e-5)
        return w * s[:, None, None], s * (b - bn["mean"]) + bn["beta"]

    w1, b1 = fold(raw["w1"], raw["b1"], raw["bn1"])
    w2, b2 = fold(raw["w2"], raw["b2"], raw["bn2"])
    w3, b3 = fold(raw["w3"], raw["b3"], raw["bn3"])
    w4, b4 = raw["w4"], raw["b4"]

    # Layer-1 packing: h1_blocked[t, 16p+c] = sum_k x[30t + 5p + k] * w1[c,0,k]
    #   => two (30, 96) matrices A1/B1 applied to waveform rows t and t+1.
    w1t = jnp.transpose(w1[:, 0, :])                           # (15, 16) tap-major
    cols = [jnp.pad(w1t, ((5 * p, 45 - 5 * p), (0, 0))) for p in range(6)]
    C = jnp.concatenate(cols, axis=1)                          # (60, 96)
    A1, B1 = C[:30], C[30:]

    # Layer-2 packing: V2[q, 16r+cin, cout] = w2[cout, cin, 6q+r] (0 for taps >= 15).
    w2t = jnp.transpose(w2, (2, 1, 0))                         # (15, 16, 32)
    w2p = jnp.pad(w2t, ((0, 3), (0, 0), (0, 0)))               # (18, 16, 32)
    V2 = w2p.reshape(3, 6 * 16, 32)                            # (3, 96, 32)

    return {
        "a1": A1, "b1w": B1, "bias1": jnp.tile(b1, 6)[None, :],   # (1, 96) blocked bias
        "v2": V2, "bias2": b2[None, :],
        "w3": jnp.transpose(w3, (2, 1, 0)), "bias3": b3[None, :],  # (15, 32, 64)
        "w4": jnp.transpose(w4, (2, 1, 0)), "bias4": b4[None, :],  # (15, 64, 32)
    }


def init_raw_params(key):
    def conv_init(k, cout, cin, ksz, scale):
        kw, kb = jax.random.split(k)
        return (scale * jax.random.normal(kw, (cout, cin, ksz), jnp.float32),
                0.05 * jax.random.normal(kb, (cout,), jnp.float32))

    def bn_init(k, c):
        kg, kb, km, kv = jax.random.split(k, 4)
        return {"gamma": 1.0 + 0.1 * jax.random.normal(kg, (c,), jnp.float32),
                "beta": 0.1 * jax.random.normal(kb, (c,), jnp.float32),
                "mean": 0.05 * jax.random.normal(km, (c,), jnp.float32),
                "var": 0.8 + 0.4 * jax.random.uniform(kv, (c,), jnp.float32)}

    ks = jax.random.split(key, 7)
    w1, b1 = conv_init(ks[0], 16, 1, 15, 0.25)
    w2, b2 = conv_init(ks[1], 32, 16, 15, 0.10)
    w3, b3 = conv_init(ks[2], 64, 32, 15, 0.08)
    w4, b4 = conv_init(ks[3], 32, 64, 15, 0.06)
    return {"w1": w1, "b1": b1, "bn1": bn_init(ks[4], 16),
            "w2": w2, "b2": b2, "bn2": bn_init(ks[5], 32),
            "w3": w3, "b3": b3, "bn3": bn_init(ks[6], 64),
            "w4": w4, "b4": b4}


# ------------------------------ pure-JAX reference ----------------------------


def ref_forward(wav, raw):
    x = wav[:, None, :]  # (B, 1, L)

    def conv(v, w, b, stride, pad):
        y = jax.lax.conv_general_dilated(
            v, w, window_strides=(stride,), padding=[(pad, pad)],
            dimension_numbers=("NCH", "OIH", "NCH"),
            precision=jax.lax.Precision.HIGHEST)
        return y + b[None, :, None]

    def bn(v, p):
        s = p["gamma"] * jax.lax.rsqrt(p["var"] + 1e-5)
        return (v - p["mean"][None, :, None]) * s[None, :, None] + p["beta"][None, :, None]

    lrelu = lambda v: jnp.maximum(v, 0.3 * v)
    x = lrelu(bn(conv(x, raw["w1"], raw["b1"], 5, 1600), raw["bn1"]))
    x = lrelu(bn(conv(x, raw["w2"], raw["b2"], 6, 0), raw["bn2"]))
    x = lrelu(bn(conv(x, raw["w3"], raw["b3"], 6, 0), raw["bn3"]))
    x = conv(x, raw["w4"], raw["b4"], 6, 0)
    return jnp.transpose(x, (0, 2, 1))  # (B, T_out, 32)


# ----------------------------------- main --------------------------------------


if __name__ == "__main__":
    # Small synthetic waveform: B=2, L=4000 samples (~0.25 s at 16 kHz).
    # Sequence lengths: 7200 -> 1438 -> 238 -> 38 -> 4, so y is (2, 4, 32).
    B, L = 2, 4000
    key = jax.random.PRNGKey(0)
    pkey, wkey = jax.random.split(key)
    raw = init_raw_params(pkey)
    wav = 0.5 * jax.random.normal(wkey, (B, L), jnp.float32)

    params = prepare_params(raw)
    fwd = jax.jit(wav_encoder_forward)
    y = jax.block_until_ready(fwd(wav, params))

    y_ref = jax.block_until_ready(ref_forward(wav, raw))
    assert y.shape == y_ref.shape == (B, 4, 32) and y.dtype == jnp.float32
    # Tolerance accounts for MXU f32 pass-decomposition / summation-order differences vs
    # the XLA HIGHEST-precision reference over sums of up to 15*64 terms.
    max_err = float(jnp.max(jnp.abs(y - y_ref)))
    assert jnp.allclose(y, y_ref, rtol=2e-2, atol=2e-2), max_err

    print("KERNEL_OK")
</pallas_src>

<mosaic_0001>
module attributes {stable_mosaic.version = 11 : i64} {
  func.func @kernel(%arg0: i32, %arg1: memref<1x241x30xf32, #tpu.memory_space<vmem>>, %arg2: memref<30x96xf32, #tpu.memory_space<vmem>>, %arg3: memref<30x96xf32, #tpu.memory_space<vmem>>, %arg4: memref<1x96xf32, #tpu.memory_space<vmem>>, %arg5: memref<3x96x32xf32, #tpu.memory_space<vmem>>, %arg6: memref<1x32xf32, #tpu.memory_space<vmem>>, %arg7: memref<15x32x64xf32, #tpu.memory_space<vmem>>, %arg8: memref<1x64xf32, #tpu.memory_space<vmem>>, %arg9: memref<15x64x32xf32, #tpu.memory_space<vmem>>, %arg10: memref<1x32xf32, #tpu.memory_space<vmem>>, %arg11: memref<1x4x32xf32, #tpu.memory_space<vmem>>, %arg12: memref<240x96xf32, #tpu.memory_space<vmem>>, %arg13: memref<238x32xf32, #tpu.memory_space<vmem>>, %arg14: memref<38x64xf32, #tpu.memory_space<vmem>>) attributes {dimension_semantics = [#tpu.dimension_semantics<parallel>], iteration_bounds = array<i64: 2>, scalar_prefetch = 0 : i64, scratch_operands = 3 : i64, tpu.core_type = #tpu.core_type<tc>, window_params = [{transform_indices = @transform_0, window_bounds = array<i64: 1, 241, 30>}, {pipeline_mode = #tpu.pipeline_mode<synchronous>, transform_indices = @transform_1, window_bounds = array<i64: 30, 96>}, {pipeline_mode = #tpu.pipeline_mode<synchronous>, transform_indices = @transform_2, window_bounds = array<i64: 30, 96>}, {pipeline_mode = #tpu.pipeline_mode<synchronous>, transform_indices = @transform_3, window_bounds = array<i64: 1, 96>}, {pipeline_mode = #tpu.pipeline_mode<synchronous>, transform_indices = @transform_4, window_bounds = array<i64: 3, 96, 32>}, {pipeline_mode = #tpu.pipeline_mode<synchronous>, transform_indices = @transform_5, window_bounds = array<i64: 1, 32>}, {pipeline_mode = #tpu.pipeline_mode<synchronous>, transform_indices = @transform_6, window_bounds = array<i64: 15, 32, 64>}, {pipeline_mode = #tpu.pipeline_mode<synchronous>, transform_indices = @transform_7, window_bounds = array<i64: 1, 64>}, {pipeline_mode = #tpu.pipeline_mode<synchronous>, transform_indices = @transform_8, window_bounds = array<i64: 15, 64, 32>}, {pipeline_mode = #tpu.pipeline_mode<synchronous>, transform_indices = @transform_9, window_bounds = array<i64: 1, 32>}, {transform_indices = @transform_10, window_bounds = array<i64: 1, 4, 32>}]} {
    %c0 = arith.constant 0 : index
    %c0_0 = arith.constant 0 : index
    %c0_1 = arith.constant 0 : index
    %0 = vector.load %arg1[%c0, %c0_0, %c0_1] : memref<1x241x30xf32, #tpu.memory_space<vmem>>, vector<1x241x30xf32>
    %1 = vector.shape_cast %0 : vector<1x241x30xf32> to vector<241x30xf32>
    %2 = vector.extract_strided_slice %1 {offsets = [0, 0], sizes = [240, 30], strides = [1, 1]} : vector<241x30xf32> to vector<240x30xf32>
    %c0_2 = arith.constant 0 : index
    %c0_3 = arith.constant 0 : index
    %3 = vector.load %arg2[%c0_2, %c0_3] : memref<30x96xf32, #tpu.memory_space<vmem>>, vector<30x96xf32>
    %cst = arith.constant dense<0.000000e+00> : vector<240x96xf32>
    %4 = tpu.matmul %2, %3, %cst {dimension_numbers = #tpu.dot_dimension_numbers<[1], [0], [0], [1], [0, 0, 1, 1], [], []>} : vector<240x30xf32>, vector<30x96xf32>, vector<240x96xf32> -> vector<240x96xf32>
    %5 = vector.extract_strided_slice %1 {offsets = [1, 0], sizes = [240, 30], strides = [1, 1]} : vector<241x30xf32> to vector<240x30xf32>
    %c0_4 = arith.constant 0 : index
    %c0_5 = arith.constant 0 : index
    %6 = vector.load %arg3[%c0_4, %c0_5] : memref<30x96xf32, #tpu.memory_space<vmem>>, vector<30x96xf32>
    %cst_6 = arith.constant dense<0.000000e+00> : vector<240x96xf32>
    %7 = tpu.matmul %5, %6, %cst_6 {dimension_numbers = #tpu.dot_dimension_numbers<[1], [0], [0], [1], [0, 0, 1, 1], [], []>} : vector<240x30xf32>, vector<30x96xf32>, vector<240x96xf32> -> vector<240x96xf32>
    %8 = arith.addf %4, %7 : vector<240x96xf32>
    %c0_7 = arith.constant 0 : index
    %c0_8 = arith.constant 0 : index
    %9 = vector.load %arg4[%c0_7, %c0_8] : memref<1x96xf32, #tpu.memory_space<vmem>>, vector<1x96xf32>
    %10 = vector.broadcast %9 : vector<1x96xf32> to vector<240x96xf32>
    %11 = arith.addf %8, %10 : vector<240x96xf32>
    %cst_9 = arith.constant 3.000000e-01 : f32
    %12 = vector.broadcast %cst_9 : f32 to vector<240x96xf32>
    %13 = arith.mulf %12, %11 : vector<240x96xf32>
    %14 = arith.maximumf %11, %13 : vector<240x96xf32>
    %c0_10 = arith.constant 0 : index
    %c0_11 = arith.constant 0 : index
    %15 = vector.load %arg12[%c0_10, %c0_11] : memref<240x96xf32, #tpu.memory_space<vmem>>, vector<240x96xf32>
    tpu.vector_store %arg12[%c0_10, %c0_11], %14 {strides = array<i32>} : memref<240x96xf32, #tpu.memory_space<vmem>>, vector<240x96xf32>,
    %cst_12 = arith.constant 0.000000e+00 : f32
    %16 = vector.broadcast %cst_12 : f32 to vector<238x32xf32>
    %c0_13 = arith.constant 0 : index
    %c0_14 = arith.constant 0 : index
    %17 = vector.load %arg12[%c0_13, %c0_14] : memref<240x96xf32, #tpu.memory_space<vmem>>, vector<238x96xf32>
    %c0_15 = arith.constant 0 : index
    %c0_16 = arith.constant 0 : index
    %c0_17 = arith.constant 0 : index
    %18 = vector.load %arg5[%c0_15, %c0_16, %c0_17] : memref<3x96x32xf32, #tpu.memory_space<vmem>>, vector<1x96x32xf32>
    %19 = vector.shape_cast %18 : vector<1x96x32xf32> to vector<96x32xf32>
    %cst_18 = arith.constant dense<0.000000e+00> : vector<238x32xf32>
    %20 = tpu.matmul %17, %19, %cst_18 {dimension_numbers = #tpu.dot_dimension_numbers<[1], [0], [0], [1], [0, 0, 1, 1], [], []>} : vector<238x96xf32>, vector<96x32xf32>, vector<238x32xf32> -> vector<238x32xf32>
    %21 = arith.addf %16, %20 : vector<238x32xf32>
    %c1 = arith.constant 1 : index
    %c0_19 = arith.constant 0 : index
    %22 = vector.load %arg12[%c1, %c0_19] : memref<240x96xf32, #tpu.memory_space<vmem>>, vector<238x96xf32>
    %c1_20 = arith.constant 1 : index
    %c0_21 = arith.constant 0 : index
    %c0_22 = arith.constant 0 : index
    %23 = vector.load %arg5[%c1_20, %c0_21, %c0_22] : memref<3x96x32xf32, #tpu.memory_space<vmem>>, vector<1x96x32xf32>
    %24 = vector.shape_cast %23 : vector<1x96x32xf32> to vector<96x32xf32>
    %cst_23 = arith.constant dense<0.000000e+00> : vector<238x32xf32>
    %25 = tpu.matmul %22, %24, %cst_23 {dimension_numbers = #tpu.dot_dimension_numbers<[1], [0], [0], [1], [0, 0, 1, 1], [], []>} : vector<238x96xf32>, vector<96x32xf32>, vector<238x32xf32> -> vector<238x32xf32>
    %26 = arith.addf %21, %25 : vector<238x32xf32>
    %c2 = arith.constant 2 : index
    %c0_24 = arith.constant 0 : index
    %27 = vector.load %arg12[%c2, %c0_24] : memref<240x96xf32, #tpu.memory_space<vmem>>, vector<238x96xf32>
    %c2_25 = arith.constant 2 : index
    %c0_26 = arith.constant 0 : index
    %c0_27 = arith.constant 0 : index
    %28 = vector.load %arg5[%c2_25, %c0_26, %c0_27] : memref<3x96x32xf32, #tpu.memory_space<vmem>>, vector<1x96x32xf32>
    %29 = vector.shape_cast %28 : vector<1x96x32xf32> to vector<96x32xf32>
    %cst_28 = arith.constant dense<0.000000e+00> : vector<238x32xf32>
    %30 = tpu.matmul %27, %29, %cst_28 {dimension_numbers = #tpu.dot_dimension_numbers<[1], [0], [0], [1], [0, 0, 1, 1], [], []>} : vector<238x96xf32>, vector<96x32xf32>, vector<238x32xf32> -> vector<238x32xf32>
    %31 = arith.addf %26, %30 : vector<238x32xf32>
    %c0_29 = arith.constant 0 : index
    %c0_30 = arith.constant 0 : index
    %32 = vector.load %arg6[%c0_29, %c0_30] : memref<1x32xf32, #tpu.memory_space<vmem>>, vector<1x32xf32>
    %33 = vector.broadcast %32 : vector<1x32xf32> to vector<238x32xf32>
    %34 = arith.addf %31, %33 : vector<238x32xf32>
    %cst_31 = arith.constant 3.000000e-01 : f32
    %35 = vector.broadcast %cst_31 : f32 to vector<238x32xf32>
    %36 = arith.mulf %35, %34 : vector<238x32xf32>
    %37 = arith.maximumf %34, %36 : vector<238x32xf32>
    %c0_32 = arith.constant 0 : index
    %c0_33 = arith.constant 0 : index
    %38 = vector.load %arg13[%c0_32, %c0_33] : memref<238x32xf32, #tpu.memory_space<vmem>>, vector<238x32xf32>
    tpu.vector_store %arg13[%c0_32, %c0_33], %37 {strides = array<i32>} : memref<238x32xf32, #tpu.memory_space<vmem>>, vector<238x32xf32>,
    %cst_34 = arith.constant 0.000000e+00 : f32
    %39 = vector.broadcast %cst_34 : f32 to vector<38x64xf32>
    %c0_35 = arith.constant 0 : index
    %c0_36 = arith.constant 0 : index
    %40 = tpu.strided_load %arg13[%c0_35, %c0_36] {strides = array<i32: 6, 1>} : memref<238x32xf32, #tpu.memory_space<vmem>>, vector<38x32xf32>
    %c0_37 = arith.constant 0 : index
    %c0_38 = arith.constant 0 : index
    %c0_39 = arith.constant 0 : index
    %41 = vector.load %arg7[%c0_37, %c0_38, %c0_39] : memref<15x32x64xf32, #tpu.memory_space<vmem>>, vector<1x32x64xf32>
    %42 = vector.shape_cast %41 : vector<1x32x64xf32> to vector<32x64xf32>
    %cst_40 = arith.constant dense<0.000000e+00> : vector<38x64xf32>
    %43 = tpu.matmul %40, %42, %cst_40 {dimension_numbers = #tpu.dot_dimension_numbers<[1], [0], [0], [1], [0, 0, 1, 1], [], []>} : vector<38x32xf32>, vector<32x64xf32>, vector<38x64xf32> -> vector<38x64xf32>
    %44 = arith.addf %39, %43 : vector<38x64xf32>
    %c1_41 = arith.constant 1 : index
    %c0_42 = arith.constant 0 : index
    %45 = tpu.strided_load %arg13[%c1_41, %c0_42] {strides = array<i32: 6, 1>} : memref<238x32xf32, #tpu.memory_space<vmem>>, vector<38x32xf32>
    %c1_43 = arith.constant 1 : index
    %c0_44 = arith.constant 0 : index
    %c0_45 = arith.constant 0 : index
    %46 = vector.load %arg7[%c1_43, %c0_44, %c0_45] : memref<15x32x64xf32, #tpu.memory_space<vmem>>, vector<1x32x64xf32>
    %47 = vector.shape_cast %46 : vector<1x32x64xf32> to vector<32x64xf32>
    %cst_46 = arith.constant dense<0.000000e+00> : vector<38x64xf32>
    %48 = tpu.matmul %45, %47, %cst_46 {dimension_numbers = #tpu.dot_dimension_numbers<[1], [0], [0], [1], [0, 0, 1, 1], [], []>} : vector<38x32xf32>, vector<32x64xf32>, vector<38x64xf32> -> vector<38x64xf32>
    %49 = arith.addf %44, %48 : vector<38x64xf32>
    %c2_47 = arith.constant 2 : index
    %c0_48 = arith.constant 0 : index
    %50 = tpu.strided_load %arg13[%c2_47, %c0_48] {strides = array<i32: 6, 1>} : memref<238x32xf32, #tpu.memory_space<vmem>>, vector<38x32xf32>
    %c2_49 = arith.constant 2 : index
    %c0_50 = arith.constant 0 : index
    %c0_51 = arith.constant 0 : index
    %51 = vector.load %arg7[%c2_49, %c0_50, %c0_51] : memref<15x32x64xf32, #tpu.memory_space<vmem>>, vector<1x32x64xf32>
    %52 = vector.shape_cast %51 : vector<1x32x64xf32> to vector<32x64xf32>
    %cst_52 = arith.constant dense<0.000000e+00> : vector<38x64xf32>
    %53 = tpu.matmul %50, %52, %cst_52 {dimension_numbers = #tpu.dot_dimension_numbers<[1], [0], [0], [1], [0, 0, 1, 1], [], []>} : vector<38x32xf32>, vector<32x64xf32>, vector<38x64xf32> -> vector<38x64xf32>
    %54 = arith.addf %49, %53 : vector<38x64xf32>
    %c3 = arith.constant 3 : index
    %c0_53 = arith.constant 0 : index
    %55 = tpu.strided_load %arg13[%c3, %c0_53] {strides = array<i32: 6, 1>} : memref<238x32xf32, #tpu.memory_space<vmem>>, vector<38x32xf32>
    %c3_54 = arith.constant 3 : index
    %c0_55 = arith.constant 0 : index
    %c0_56 = arith.constant 0 : index
    %56 = vector.load %arg7[%c3_54, %c0_55, %c0_56] : memref<15x32x64xf32, #tpu.memory_space<vmem>>, vector<1x32x64xf32>
    %57 = vector.shape_cast %56 : vector<1x32x64xf32> to vector<32x64xf32>
    %cst_57 = arith.constant dense<0.000000e+00> : vector<38x64xf32>
    %58 = tpu.matmul %55, %57, %cst_57 {dimension_numbers = #tpu.dot_dimension_numbers<[1], [0], [0], [1], [0, 0, 1, 1], [], []>} : vector<38x32xf32>, vector<32x64xf32>, vector<38x64xf32> -> vector<38x64xf32>
    %59 = arith.addf %54, %58 : vector<38x64xf32>
    %c4 = arith.constant 4 : index
    %c0_58 = arith.constant 0 : index
    %60 = tpu.strided_load %arg13[%c4, %c0_58] {strides = array<i32: 6, 1>} : memref<238x32xf32, #tpu.memory_space<vmem>>, vector<38x32xf32>
    %c4_59 = arith.constant 4 : index
    %c0_60 = arith.constant 0 : index
    %c0_61 = arith.constant 0 : index
    %61 = vector.load %arg7[%c4_59, %c0_60, %c0_61] : memref<15x32x64xf32, #tpu.memory_space<vmem>>, vector<1x32x64xf32>
    %62 = vector.shape_cast %61 : vector<1x32x64xf32> to vector<32x64xf32>
    %cst_62 = arith.constant dense<0.000000e+00> : vector<38x64xf32>
    %63 = tpu.matmul %60, %62, %cst_62 {dimension_numbers = #tpu.dot_dimension_numbers<[1], [0], [0], [1], [0, 0, 1, 1], [], []>} : vector<38x32xf32>, vector<32x64xf32>, vector<38x64xf32> -> vector<38x64xf32>
    %64 = arith.addf %59, %63 : vector<38x64xf32>
    %c5 = arith.constant 5 : index
    %c0_63 = arith.constant 0 : index
    %65 = tpu.strided_load %arg13[%c5, %c0_63] {strides = array<i32: 6, 1>} : memref<238x32xf32, #tpu.memory_space<vmem>>, vector<38x32xf32>
    %c5_64 = arith.constant 5 : index
    %c0_65 = arith.constant 0 : index
    %c0_66 = arith.constant 0 : index
    %66 = vector.load %arg7[%c5_64, %c0_65, %c0_66] : memref<15x32x64xf32, #tpu.memory_space<vmem>>, vector<1x32x64xf32>
    %67 = vector.shape_cast %66 : vector<1x32x64xf32> to vector<32x64xf32>
    %cst_67 = arith.constant dense<0.000000e+00> : vector<38x64xf32>
    %68 = tpu.matmul %65, %67, %cst_67 {dimension_numbers = #tpu.dot_dimension_numbers<[1], [0], [0], [1], [0, 0, 1, 1], [], []>} : vector<38x32xf32>, vector<32x64xf32>, vector<38x64xf32> -> vector<38x64xf32>
    %69 = arith.addf %64, %68 : vector<38x64xf32>
    %c6 = arith.constant 6 : index
    %c0_68 = arith.constant 0 : index
    %70 = tpu.strided_load %arg13[%c6, %c0_68] {strides = array<i32: 6, 1>} : memref<238x32xf32, #tpu.memory_space<vmem>>, vector<38x32xf32>
    %c6_69 = arith.constant 6 : index
    %c0_70 = arith.constant 0 : index
    %c0_71 = arith.constant 0 : index
    %71 = vector.load %arg7[%c6_69, %c0_70, %c0_71] : memref<15x32x64xf32, #tpu.memory_space<vmem>>, vector<1x32x64xf32>
    %72 = vector.shape_cast %71 : vector<1x32x64xf32> to vector<32x64xf32>
    %cst_72 = arith.constant dense<0.000000e+00> : vector<38x64xf32>
    %73 = tpu.matmul %70, %72, %cst_72 {dimension_numbers = #tpu.dot_dimension_numbers<[1], [0], [0], [1], [0, 0, 1, 1], [], []>} : vector<38x32xf32>, vector<32x64xf32>, vector<38x64xf32> -> vector<38x64xf32>
    %74 = arith.addf %69, %73 : vector<38x64xf32>
    %c7 = arith.constant 7 : index
    %c0_73 = arith.constant 0 : index
    %75 = tpu.strided_load %arg13[%c7, %c0_73] {strides = array<i32: 6, 1>} : memref<238x32xf32, #tpu.memory_space<vmem>>, vector<38x32xf32>
    %c7_74 = arith.constant 7 : index
    %c0_75 = arith.constant 0 : index
    %c0_76 = arith.constant 0 : index
    %76 = vector.load %arg7[%c7_74, %c0_75, %c0_76] : memref<15x32x64xf32, #tpu.memory_space<vmem>>, vector<1x32x64xf32>
    %77 = vector.shape_cast %76 : vector<1x32x64xf32> to vector<32x64xf32>
    %cst_77 = arith.constant dense<0.000000e+00> : vector<38x64xf32>
    %78 = tpu.matmul %75, %77, %cst_77 {dimension_numbers = #tpu.dot_dimension_numbers<[1], [0], [0], [1], [0, 0, 1, 1], [], []>} : vector<38x32xf32>, vector<32x64xf32>, vector<38x64xf32> -> vector<38x64xf32>
    %79 = arith.addf %74, %78 : vector<38x64xf32>
    %c8 = arith.constant 8 : index
    %c0_78 = arith.constant 0 : index
    %80 = tpu.strided_load %arg13[%c8, %c0_78] {strides = array<i32: 6, 1>} : memref<238x32xf32, #tpu.memory_space<vmem>>, vector<38x32xf32>
    %c8_79 = arith.constant 8 : index
    %c0_80 = arith.constant 0 : index
    %c0_81 = arith.constant 0 : index
    %81 = vector.load %arg7[%c8_79, %c0_80, %c0_81] : memref<15x32x64xf32, #tpu.memory_space<vmem>>, vector<1x32x64xf32>
    %82 = vector.shape_cast %81 : vector<1x32x64xf32> to vector<32x64xf32>
    %cst_82 = arith.constant dense<0.000000e+00> : vector<38x64xf32>
    %83 = tpu.matmul %80, %82, %cst_82 {dimension_numbers = #tpu.dot_dimension_numbers<[1], [0], [0], [1], [0, 0, 1, 1], [], []>} : vector<38x32xf32>, vector<32x64xf32>, vector<38x64xf32> -> vector<38x64xf32>
    %84 = arith.addf %79, %83 : vector<38x64xf32>
    %c9 = arith.constant 9 : index
    %c0_83 = arith.constant 0 : index
    %85 = tpu.strided_load %arg13[%c9, %c0_83] {strides = array<i32: 6, 1>} : memref<238x32xf32, #tpu.memory_space<vmem>>, vector<38x32xf32>
    %c9_84 = arith.constant 9 : index
    %c0_85 = arith.constant 0 : index
    %c0_86 = arith.constant 0 : index
    %86 = vector.load %arg7[%c9_84, %c0_85, %c0_86] : memref<15x32x64xf32, #tpu.memory_space<vmem>>, vector<1x32x64xf32>
    %87 = vector.shape_cast %86 : vector<1x32x64xf32> to vector<32x64xf32>
    %cst_87 = arith.constant dense<0.000000e+00> : vector<38x64xf32>
    %88 = tpu.matmul %85, %87, %cst_87 {dimension_numbers = #tpu.dot_dimension_numbers<[1], [0], [0], [1], [0, 0, 1, 1], [], []>} : vector<38x32xf32>, vector<32x64xf32>, vector<38x64xf32> -> vector<38x64xf32>
    %89 = arith.addf %84, %88 : vector<38x64xf32>
    %c10 = arith.constant 10 : index
    %c0_88 = arith.constant 0 : index
    %90 = tpu.strided_load %arg13[%c10, %c0_88] {strides = array<i32: 6, 1>} : memref<238x32xf32, #tpu.memory_space<vmem>>, vector<38x32xf32>
    %c10_89 = arith.constant 10 : index
    %c0_90 = arith.constant 0 : index
    %c0_91 = arith.constant 0 : index
    %91 = vector.load %arg7[%c10_89, %c0_90, %c0_91] : memref<15x32x64xf32, #tpu.memory_space<vmem>>, vector<1x32x64xf32>
    %92 = vector.shape_cast %91 : vector<1x32x64xf32> to vector<32x64xf32>
    %cst_92 = arith.constant dense<0.000000e+00> : vector<38x64xf32>
    %93 = tpu.matmul %90, %92, %cst_92 {dimension_numbers = #tpu.dot_dimension_numbers<[1], [0], [0], [1], [0, 0, 1, 1], [], []>} : vector<38x32xf32>, vector<32x64xf32>, vector<38x64xf32> -> vector<38x64xf32>
    %94 = arith.addf %89, %93 : vector<38x64xf32>
    %c11 = arith.constant 11 : index
    %c0_93 = arith.constant 0 : index
    %95 = tpu.strided_load %arg13[%c11, %c0_93] {strides = array<i32: 6, 1>} : memref<238x32xf32, #tpu.memory_space<vmem>>, vector<38x32xf32>
    %c11_94 = arith.constant 11 : index
    %c0_95 = arith.constant 0 : index
    %c0_96 = arith.constant 0 : index
    %96 = vector.load %arg7[%c11_94, %c0_95, %c0_96] : memref<15x32x64xf32, #tpu.memory_space<vmem>>, vector<1x32x64xf32>
    %97 = vector.shape_cast %96 : vector<1x32x64xf32> to vector<32x64xf32>
    %cst_97 = arith.constant dense<0.000000e+00> : vector<38x64xf32>
    %98 = tpu.matmul %95, %97, %cst_97 {dimension_numbers = #tpu.dot_dimension_numbers<[1], [0], [0], [1], [0, 0, 1, 1], [], []>} : vector<38x32xf32>, vector<32x64xf32>, vector<38x64xf32> -> vector<38x64xf32>
    %99 = arith.addf %94, %98 : vector<38x64xf32>
    %c12 = arith.constant 12 : index
    %c0_98 = arith.constant 0 : index
    %100 = tpu.strided_load %arg13[%c12, %c0_98] {strides = array<i32: 6, 1>} : memref<238x32xf32, #tpu.memory_space<vmem>>, vector<38x32xf32>
    %c12_99 = arith.constant 12 : index
    %c0_100 = arith.constant 0 : index
    %c0_101 = arith.constant 0 : index
    %101 = vector.load %arg7[%c12_99, %c0_100, %c0_101] : memref<15x32x64xf32, #tpu.memory_space<vmem>>, vector<1x32x64xf32>
    %102 = vector.shape_cast %101 : vector<1x32x64xf32> to vector<32x64xf32>
    %cst_102 = arith.constant dense<0.000000e+00> : vector<38x64xf32>
    %103 = tpu.matmul %100, %102, %cst_102 {dimension_numbers = #tpu.dot_dimension_numbers<[1], [0], [0], [1], [0, 0, 1, 1], [], []>} : vector<38x32xf32>, vector<32x64xf32>, vector<38x64xf32> -> vector<38x64xf32>
    %104 = arith.addf %99, %103 : vector<38x64xf32>
    %c13 = arith.constant 13 : index
    %c0_103 = arith.constant 0 : index
    %105 = tpu.strided_load %arg13[%c13, %c0_103] {strides = array<i32: 6, 1>} : memref<238x32xf32, #tpu.memory_space<vmem>>, vector<38x32xf32>
    %c13_104 = arith.constant 13 : index
    %c0_105 = arith.constant 0 : index
    %c0_106 = arith.constant 0 : index
    %106 = vector.load %arg7[%c13_104, %c0_105, %c0_106] : memref<15x32x64xf32, #tpu.memory_space<vmem>>, vector<1x32x64xf32>
    %107 = vector.shape_cast %106 : vector<1x32x64xf32> to vector<32x64xf32>
    %cst_107 = arith.constant dense<0.000000e+00> : vector<38x64xf32>
    %108 = tpu.matmul %105, %107, %cst_107 {dimension_numbers = #tpu.dot_dimension_numbers<[1], [0], [0], [1], [0, 0, 1, 1], [], []>} : vector<38x32xf32>, vector<32x64xf32>, vector<38x64xf32> -> vector<38x64xf32>
    %109 = arith.addf %104, %108 : vector<38x64xf32>
    %c14 = arith.constant 14 : index
    %c0_108 = arith.constant 0 : index
    %110 = tpu.strided_load %arg13[%c14, %c0_108] {strides = array<i32: 6, 1>} : memref<238x32xf32, #tpu.memory_space<vmem>>, vector<38x32xf32>
    %c14_109 = arith.constant 14 : index
    %c0_110 = arith.constant 0 : index
    %c0_111 = arith.constant 0 : index
    %111 = vector.load %arg7[%c14_109, %c0_110, %c0_111] : memref<15x32x64xf32, #tpu.memory_space<vmem>>, vector<1x32x64xf32>
    %112 = vector.shape_cast %111 : vector<1x32x64xf32> to vector<32x64xf32>
    %cst_112 = arith.constant dense<0.000000e+00> : vector<38x64xf32>
    %113 = tpu.matmul %110, %112, %cst_112 {dimension_numbers = #tpu.dot_dimension_numbers<[1], [0], [0], [1], [0, 0, 1, 1], [], []>} : vector<38x32xf32>, vector<32x64xf32>, vector<38x64xf32> -> vector<38x64xf32>
    %114 = arith.addf %109, %113 : vector<38x64xf32>
    %c0_113 = arith.constant 0 : index
    %c0_114 = arith.constant 0 : index
    %115 = vector.load %arg8[%c0_113, %c0_114] : memref<1x64xf32, #tpu.memory_space<vmem>>, vector<1x64xf32>
    %116 = vector.broadcast %115 : vector<1x64xf32> to vector<38x64xf32>
    %117 = arith.addf %114, %116 : vector<38x64xf32>
    %cst_115 = arith.constant 3.000000e-01 : f32
    %118 = vector.broadcast %cst_115 : f32 to vector<38x64xf32>
    %119 = arith.mulf %118, %117 : vector<38x64xf32>
    %120 = arith.maximumf %117, %119 : vector<38x64xf32>
    %c0_116 = arith.constant 0 : index
    %c0_117 = arith.constant 0 : index
    %121 = vector.load %arg14[%c0_116, %c0_117] : memref<38x64xf32, #tpu.memory_space<vmem>>, vector<38x64xf32>
    tpu.vector_store %arg14[%c0_116, %c0_117], %120 {strides = array<i32>} : memref<38x64xf32, #tpu.memory_space<vmem>>, vector<38x64xf32>,
    %cst_118 = arith.constant 0.000000e+00 : f32
    %122 = vector.broadcast %cst_118 : f32 to vector<4x32xf32>
    %c0_119 = arith.constant 0 : index
    %c0_120 = arith.constant 0 : index
    %123 = tpu.strided_load %arg14[%c0_119, %c0_120] {strides = array<i32: 6, 1>} : memref<38x64xf32, #tpu.memory_space<vmem>>, vector<4x64xf32>
    %c0_121 = arith.constant 0 : index
    %c0_122 = arith.constant 0 : index
    %c0_123 = arith.constant 0 : index
    %124 = vector.load %arg9[%c0_121, %c0_122, %c0_123] : memref<15x64x32xf32, #tpu.memory_space<vmem>>, vector<1x64x32xf32>
    %125 = vector.shape_cast %124 : vector<1x64x32xf32> to vector<64x32xf32>
    %cst_124 = arith.constant dense<0.000000e+00> : vector<4x32xf32>
    %126 = tpu.matmul %123, %125, %cst_124 {dimension_numbers = #tpu.dot_dimension_numbers<[1], [0], [0], [1], [0, 0, 1, 1], [], []>} : vector<4x64xf32>, vector<64x32xf32>, vector<4x32xf32> -> vector<4x32xf32>
    %127 = arith.addf %122, %126 : vector<4x32xf32>
    %c1_125 = arith.constant 1 : index
    %c0_126 = arith.constant 0 : index
    %128 = tpu.strided_load %arg14[%c1_125, %c0_126] {strides = array<i32: 6, 1>} : memref<38x64xf32, #tpu.memory_space<vmem>>, vector<4x64xf32>
    %c1_127 = arith.constant 1 : index
    %c0_128 = arith.constant 0 : index
    %c0_129 = arith.constant 0 : index
    %129 = vector.load %arg9[%c1_127, %c0_128, %c0_129] : memref<15x64x32xf32, #tpu.memory_space<vmem>>, vector<1x64x32xf32>
    %130 = vector.shape_cast %129 : vector<1x64x32xf32> to vector<64x32xf32>
    %cst_130 = arith.constant dense<0.000000e+00> : vector<4x32xf32>
    %131 = tpu.matmul %128, %130, %cst_130 {dimension_numbers = #tpu.dot_dimension_numbers<[1], [0], [0], [1], [0, 0, 1, 1], [], []>} : vector<4x64xf32>, vector<64x32xf32>, vector<4x32xf32> -> vector<4x32xf32>
    %132 = arith.addf %127, %131 : vector<4x32xf32>
    %c2_131 = arith.constant 2 : index
    %c0_132 = arith.constant 0 : index
    %133 = tpu.strided_load %arg14[%c2_131, %c0_132] {strides = array<i32: 6, 1>} : memref<38x64xf32, #tpu.memory_space<vmem>>, vector<4x64xf32>
    %c2_133 = arith.constant 2 : index
    %c0_134 = arith.constant 0 : index
    %c0_135 = arith.constant 0 : index
    %134 = vector.load %arg9[%c2_133, %c0_134, %c0_135] : memref<15x64x32xf32, #tpu.memory_space<vmem>>, vector<1x64x32xf32>
    %135 = vector.shape_cast %134 : vector<1x64x32xf32> to vector<64x32xf32>
    %cst_136 = arith.constant dense<0.000000e+00> : vector<4x32xf32>
    %136 = tpu.matmul %133, %135, %cst_136 {dimension_numbers = #tpu.dot_dimension_numbers<[1], [0], [0], [1], [0, 0, 1, 1], [], []>} : vector<4x64xf32>, vector<64x32xf32>, vector<4x32xf32> -> vector<4x32xf32>
    %137 = arith.addf %132, %136 : vector<4x32xf32>
    %c3_137 = arith.constant 3 : index
    %c0_138 = arith.constant 0 : index
    %138 = tpu.strided_load %arg14[%c3_137, %c0_138] {strides = array<i32: 6, 1>} : memref<38x64xf32, #tpu.memory_space<vmem>>, vector<4x64xf32>
    %c3_139 = arith.constant 3 : index
    %c0_140 = arith.constant 0 : index
    %c0_141 = arith.constant 0 : index
    %139 = vector.load %arg9[%c3_139, %c0_140, %c0_141] : memref<15x64x32xf32, #tpu.memory_space<vmem>>, vector<1x64x32xf32>
    %140 = vector.shape_cast %139 : vector<1x64x32xf32> to vector<64x32xf32>
    %cst_142 = arith.constant dense<0.000000e+00> : vector<4x32xf32>
    %141 = tpu.matmul %138, %140, %cst_142 {dimension_numbers = #tpu.dot_dimension_numbers<[1], [0], [0], [1], [0, 0, 1, 1], [], []>} : vector<4x64xf32>, vector<64x32xf32>, vector<4x32xf32> -> vector<4x32xf32>
    %142 = arith.addf %137, %141 : vector<4x32xf32>
    %c4_143 = arith.constant 4 : index
    %c0_144 = arith.constant 0 : index
    %143 = tpu.strided_load %arg14[%c4_143, %c0_144] {strides = array<i32: 6, 1>} : memref<38x64xf32, #tpu.memory_space<vmem>>, vector<4x64xf32>
    %c4_145 = arith.constant 4 : index
    %c0_146 = arith.constant 0 : index
    %c0_147 = arith.constant 0 : index
    %144 = vector.load %arg9[%c4_145, %c0_146, %c0_147] : memref<15x64x32xf32, #tpu.memory_space<vmem>>, vector<1x64x32xf32>
    %145 = vector.shape_cast %144 : vector<1x64x32xf32> to vector<64x32xf32>
    %cst_148 = arith.constant dense<0.000000e+00> : vector<4x32xf32>
    %146 = tpu.matmul %143, %145, %cst_148 {dimension_numbers = #tpu.dot_dimension_numbers<[1], [0], [0], [1], [0, 0, 1, 1], [], []>} : vector<4x64xf32>, vector<64x32xf32>, vector<4x32xf32> -> vector<4x32xf32>
    %147 = arith.addf %142, %146 : vector<4x32xf32>
    %c5_149 = arith.constant 5 : index
    %c0_150 = arith.constant 0 : index
    %148 = tpu.strided_load %arg14[%c5_149, %c0_150] {strides = array<i32: 6, 1>} : memref<38x64xf32, #tpu.memory_space<vmem>>, vector<4x64xf32>
    %c5_151 = arith.constant 5 : index
    %c0_152 = arith.constant 0 : index
    %c0_153 = arith.constant 0 : index
    %149 = vector.load %arg9[%c5_151, %c0_152, %c0_153] : memref<15x64x32xf32, #tpu.memory_space<vmem>>, vector<1x64x32xf32>
    %150 = vector.shape_cast %149 : vector<1x64x32xf32> to vector<64x32xf32>
    %cst_154 = arith.constant dense<0.000000e+00> : vector<4x32xf32>
    %151 = tpu.matmul %148, %150, %cst_154 {dimension_numbers = #tpu.dot_dimension_numbers<[1], [0], [0], [1], [0, 0, 1, 1], [], []>} : vector<4x64xf32>, vector<64x32xf32>, vector<4x32xf32> -> vector<4x32xf32>
    %152 = arith.addf %147, %151 : vector<4x32xf32>
    %c6_155 = arith.constant 6 : index
    %c0_156 = arith.constant 0 : index
    %153 = tpu.strided_load %arg14[%c6_155, %c0_156] {strides = array<i32: 6, 1>} : memref<38x64xf32, #tpu.memory_space<vmem>>, vector<4x64xf32>
    %c6_157 = arith.constant 6 : index
    %c0_158 = arith.constant 0 : index
    %c0_159 = arith.constant 0 : index
    %154 = vector.load %arg9[%c6_157, %c0_158, %c0_159] : memref<15x64x32xf32, #tpu.memory_space<vmem>>, vector<1x64x32xf32>
    %155 = vector.shape_cast %154 : vector<1x64x32xf32> to vector<64x32xf32>
    %cst_160 = arith.constant dense<0.000000e+00> : vector<4x32xf32>
    %156 = tpu.matmul %153, %155, %cst_160 {dimension_numbers = #tpu.dot_dimension_numbers<[1], [0], [0], [1], [0, 0, 1, 1], [], []>} : vector<4x64xf32>, vector<64x32xf32>, vector<4x32xf32> -> vector<4x32xf32>
    %157 = arith.addf %152, %156 : vector<4x32xf32>
    %c7_161 = arith.constant 7 : index
    %c0_162 = arith.constant 0 : index
    %158 = tpu.strided_load %arg14[%c7_161, %c0_162] {strides = array<i32: 6, 1>} : memref<38x64xf32, #tpu.memory_space<vmem>>, vector<4x64xf32>
    %c7_163 = arith.constant 7 : index
    %c0_164 = arith.constant 0 : index
    %c0_165 = arith.constant 0 : index
    %159 = vector.load %arg9[%c7_163, %c0_164, %c0_165] : memref<15x64x32xf32, #tpu.memory_space<vmem>>, vector<1x64x32xf32>
    %160 = vector.shape_cast %159 : vector<1x64x32xf32> to vector<64x32xf32>
    %cst_166 = arith.constant dense<0.000000e+00> : vector<4x32xf32>
    %161 = tpu.matmul %158, %160, %cst_166 {dimension_numbers = #tpu.dot_dimension_numbers<[1], [0], [0], [1], [0, 0, 1, 1], [], []>} : vector<4x64xf32>, vector<64x32xf32>, vector<4x32xf32> -> vector<4x32xf32>
    %162 = arith.addf %157, %161 : vector<4x32xf32>
    %c8_167 = arith.constant 8 : index
    %c0_168 = arith.constant 0 : index
    %163 = tpu.strided_load %arg14[%c8_167, %c0_168] {strides = array<i32: 6, 1>} : memref<38x64xf32, #tpu.memory_space<vmem>>, vector<4x64xf32>
    %c8_169 = arith.constant 8 : index
    %c0_170 = arith.constant 0 : index
    %c0_171 = arith.constant 0 : index
    %164 = vector.load %arg9[%c8_169, %c0_170, %c0_171] : memref<15x64x32xf32, #tpu.memory_space<vmem>>, vector<1x64x32xf32>
    %165 = vector.shape_cast %164 : vector<1x64x32xf32> to vector<64x32xf32>
    %cst_172 = arith.constant dense<0.000000e+00> : vector<4x32xf32>
    %166 = tpu.matmul %163, %165, %cst_172 {dimension_numbers = #tpu.dot_dimension_numbers<[1], [0], [0], [1], [0, 0, 1, 1], [], []>} : vector<4x64xf32>, vector<64x32xf32>, vector<4x32xf32> -> vector<4x32xf32>
    %167 = arith.addf %162, %166 : vector<4x32xf32>
    %c9_173 = arith.constant 9 : index
    %c0_174 = arith.constant 0 : index
    %168 = tpu.strided_load %arg14[%c9_173, %c0_174] {strides = array<i32: 6, 1>} : memref<38x64xf32, #tpu.memory_space<vmem>>, vector<4x64xf32>
    %c9_175 = arith.constant 9 : index
    %c0_176 = arith.constant 0 : index
    %c0_177 = arith.constant 0 : index
    %169 = vector.load %arg9[%c9_175, %c0_176, %c0_177] : memref<15x64x32xf32, #tpu.memory_space<vmem>>, vector<1x64x32xf32>
    %170 = vector.shape_cast %169 : vector<1x64x32xf32> to vector<64x32xf32>
    %cst_178 = arith.constant dense<0.000000e+00> : vector<4x32xf32>
    %171 = tpu.matmul %168, %170, %cst_178 {dimension_numbers = #tpu.dot_dimension_numbers<[1], [0], [0], [1], [0, 0, 1, 1], [], []>} : vector<4x64xf32>, vector<64x32xf32>, vector<4x32xf32> -> vector<4x32xf32>
    %172 = arith.addf %167, %171 : vector<4x32xf32>
    %c10_179 = arith.constant 10 : index
    %c0_180 = arith.constant 0 : index
    %173 = tpu.strided_load %arg14[%c10_179, %c0_180] {strides = array<i32: 6, 1>} : memref<38x64xf32, #tpu.memory_space<vmem>>, vector<4x64xf32>
    %c10_181 = arith.constant 10 : index
    %c0_182 = arith.constant 0 : index
    %c0_183 = arith.constant 0 : index
    %174 = vector.load %arg9[%c10_181, %c0_182, %c0_183] : memref<15x64x32xf32, #tpu.memory_space<vmem>>, vector<1x64x32xf32>
    %175 = vector.shape_cast %174 : vector<1x64x32xf32> to vector<64x32xf32>
    %cst_184 = arith.constant dense<0.000000e+00> : vector<4x32xf32>
    %176 = tpu.matmul %173, %175, %cst_184 {dimension_numbers = #tpu.dot_dimension_numbers<[1], [0], [0], [1], [0, 0, 1, 1], [], []>} : vector<4x64xf32>, vector<64x32xf32>, vector<4x32xf32> -> vector<4x32xf32>
    %177 = arith.addf %172, %176 : vector<4x32xf32>
    %c11_185 = arith.constant 11 : index
    %c0_186 = arith.constant 0 : index
    %178 = tpu.strided_load %arg14[%c11_185, %c0_186] {strides = array<i32: 6, 1>} : memref<38x64xf32, #tpu.memory_space<vmem>>, vector<4x64xf32>
    %c11_187 = arith.constant 11 : index
    %c0_188 = arith.constant 0 : index
    %c0_189 = arith.constant 0 : index
    %179 = vector.load %arg9[%c11_187, %c0_188, %c0_189] : memref<15x64x32xf32, #tpu.memory_space<vmem>>, vector<1x64x32xf32>
    %180 = vector.shape_cast %179 : vector<1x64x32xf32> to vector<64x32xf32>
    %cst_190 = arith.constant dense<0.000000e+00> : vector<4x32xf32>
    %181 = tpu.matmul %178, %180, %cst_190 {dimension_numbers = #tpu.dot_dimension_numbers<[1], [0], [0], [1], [0, 0, 1, 1], [], []>} : vector<4x64xf32>, vector<64x32xf32>, vector<4x32xf32> -> vector<4x32xf32>
    %182 = arith.addf %177, %181 : vector<4x32xf32>
    %c12_191 = arith.constant 12 : index
    %c0_192 = arith.constant 0 : index
    %183 = tpu.strided_load %arg14[%c12_191, %c0_192] {strides = array<i32: 6, 1>} : memref<38x64xf32, #tpu.memory_space<vmem>>, vector<4x64xf32>
    %c12_193 = arith.constant 12 : index
    %c0_194 = arith.constant 0 : index
    %c0_195 = arith.constant 0 : index
    %184 = vector.load %arg9[%c12_193, %c0_194, %c0_195] : memref<15x64x32xf32, #tpu.memory_space<vmem>>, vector<1x64x32xf32>
    %185 = vector.shape_cast %184 : vector<1x64x32xf32> to vector<64x32xf32>
    %cst_196 = arith.constant dense<0.000000e+00> : vector<4x32xf32>
    %186 = tpu.matmul %183, %185, %cst_196 {dimension_numbers = #tpu.dot_dimension_numbers<[1], [0], [0], [1], [0, 0, 1, 1], [], []>} : vector<4x64xf32>, vector<64x32xf32>, vector<4x32xf32> -> vector<4x32xf32>
    %187 = arith.addf %182, %186 : vector<4x32xf32>
    %c13_197 = arith.constant 13 : index
    %c0_198 = arith.constant 0 : index
    %188 = tpu.strided_load %arg14[%c13_197, %c0_198] {strides = array<i32: 6, 1>} : memref<38x64xf32, #tpu.memory_space<vmem>>, vector<4x64xf32>
    %c13_199 = arith.constant 13 : index
    %c0_200 = arith.constant 0 : index
    %c0_201 = arith.constant 0 : index
    %189 = vector.load %arg9[%c13_199, %c0_200, %c0_201] : memref<15x64x32xf32, #tpu.memory_space<vmem>>, vector<1x64x32xf32>
    %190 = vector.shape_cast %189 : vector<1x64x32xf32> to vector<64x32xf32>
    %cst_202 = arith.constant dense<0.000000e+00> : vector<4x32xf32>
    %191 = tpu.matmul %188, %190, %cst_202 {dimension_numbers = #tpu.dot_dimension_numbers<[1], [0], [0], [1], [0, 0, 1, 1], [], []>} : vector<4x64xf32>, vector<64x32xf32>, vector<4x32xf32> -> vector<4x32xf32>
    %192 = arith.addf %187, %191 : vector<4x32xf32>
    %c14_203 = arith.constant 14 : index
    %c0_204 = arith.constant 0 : index
    %193 = tpu.strided_load %arg14[%c14_203, %c0_204] {strides = array<i32: 6, 1>} : memref<38x64xf32, #tpu.memory_space<vmem>>, vector<4x64xf32>
    %c14_205 = arith.constant 14 : index
    %c0_206 = arith.constant 0 : index
    %c0_207 = arith.constant 0 : index
    %194 = vector.load %arg9[%c14_205, %c0_206, %c0_207] : memref<15x64x32xf32, #tpu.memory_space<vmem>>, vector<1x64x32xf32>
    %195 = vector.shape_cast %194 : vector<1x64x32xf32> to vector<64x32xf32>
    %cst_208 = arith.constant dense<0.000000e+00> : vector<4x32xf32>
    %196 = tpu.matmul %193, %195, %cst_208 {dimension_numbers = #tpu.dot_dimension_numbers<[1], [0], [0], [1], [0, 0, 1, 1], [], []>} : vector<4x64xf32>, vector<64x32xf32>, vector<4x32xf32> -> vector<4x32xf32>
    %197 = arith.addf %192, %196 : vector<4x32xf32>
    %c0_209 = arith.constant 0 : index
    %c0_210 = arith.constant 0 : index
    %198 = vector.load %arg10[%c0_209, %c0_210] : memref<1x32xf32, #tpu.memory_space<vmem>>, vector<1x32xf32>
    %199 = vector.broadcast %198 : vector<1x32xf32> to vector<4x32xf32>
    %200 = arith.addf %197, %199 : vector<4x32xf32>
    %c0_211 = arith.constant 0 : index
    %c0_212 = arith.constant 0 : index
    %c0_213 = arith.constant 0 : index
    %201 = vector.load %arg11[%c0_211, %c0_212, %c0_213] : memref<1x4x32xf32, #tpu.memory_space<vmem>>, vector<1x4x32xf32>
    %202 = vector.shape_cast %201 : vector<1x4x32xf32> to vector<4x32xf32>
    %203 = vector.shape_cast %200 : vector<4x32xf32> to vector<1x4x32xf32>
    tpu.vector_store %arg11[%c0_211, %c0_212, %c0_213], %203 {strides = array<i32>} : memref<1x4x32xf32, #tpu.memory_space<vmem>>, vector<1x4x32xf32>,
    return
  }
  func.func @transform_0(%arg0: i32) -> (i32, i32, i32) {
    %c0_i32 = arith.constant 0 : i32
    %c0_i32_0 = arith.constant 0 : i32
    %c0_i32_1 = arith.constant 0 : i32
    return %arg0, %c0_i32, %c0_i32_0 : i32, i32, i32
  }
  func.func @transform_1(%arg0: i32) -> (i32, i32) {
    %c0_i32 = arith.constant 0 : i32
    %c0_i32_0 = arith.constant 0 : i32
    %c0_i32_1 = arith.constant 0 : i32
    return %c0_i32, %c0_i32_0 : i32, i32
  }
  func.func @transform_2(%arg0: i32) -> (i32, i32) {
    %c0_i32 = arith.constant 0 : i32
    %c0_i32_0 = arith.constant 0 : i32
    %c0_i32_1 = arith.constant 0 : i32
    return %c0_i32, %c0_i32_0 : i32, i32
  }
  func.func @transform_3(%arg0: i32) -> (i32, i32) {
    %c0_i32 = arith.constant 0 : i32
    %c0_i32_0 = arith.constant 0 : i32
    %c0_i32_1 = arith.constant 0 : i32
    return %c0_i32, %c0_i32_0 : i32, i32
  }
  func.func @transform_4(%arg0: i32) -> (i32, i32, i32) {
    %c0_i32 = arith.constant 0 : i32
    %c0_i32_0 = arith.constant 0 : i32
    %c0_i32_1 = arith.constant 0 : i32
    %c0_i32_2 = arith.constant 0 : i32
    return %c0_i32, %c0_i32_0, %c0_i32_1 : i32, i32, i32
  }
  func.func @transform_5(%arg0: i32) -> (i32, i32) {
    %c0_i32 = arith.constant 0 : i32
    %c0_i32_0 = arith.constant 0 : i32
    %c0_i32_1 = arith.constant 0 : i32
    return %c0_i32, %c0_i32_0 : i32, i32
  }
  func.func @transform_6(%arg0: i32) -> (i32, i32, i32) {
    %c0_i32 = arith.constant 0 : i32
    %c0_i32_0 = arith.constant 0 : i32
    %c0_i32_1 = arith.constant 0 : i32
    %c0_i32_2 = arith.constant 0 : i32
    return %c0_i32, %c0_i32_0, %c0_i32_1 : i32, i32, i32
  }
  func.func @transform_7(%arg0: i32) -> (i32, i32) {
    %c0_i32 = arith.constant 0 : i32
    %c0_i32_0 = arith.constant 0 : i32
    %c0_i32_1 = arith.constant 0 : i32
    return %c0_i32, %c0_i32_0 : i32, i32
  }
  func.func @transform_8(%arg0: i32) -> (i32, i32, i32) {
    %c0_i32 = arith.constant 0 : i32
    %c0_i32_0 = arith.constant 0 : i32
    %c0_i32_1 = arith.constant 0 : i32
    %c0_i32_2 = arith.constant 0 : i32
    return %c0_i32, %c0_i32_0, %c0_i32_1 : i32, i32, i32
  }
  func.func @transform_9(%arg0: i32) -> (i32, i32) {
    %c0_i32 = arith.constant 0 : i32
    %c0_i32_0 = arith.constant 0 : i32
    %c0_i32_1 = arith.constant 0 : i32
    return %c0_i32, %c0_i32_0 : i32, i32
  }
  func.func @transform_10(%arg0: i32) -> (i32, i32, i32) {
    %c0_i32 = arith.constant 0 : i32
    %c0_i32_0 = arith.constant 0 : i32
    %c0_i32_1 = arith.constant 0 : i32
    return %arg0, %c0_i32, %c0_i32_0 : i32, i32, i32
  }
}

</mosaic_0001>

<llo_original>
// kernel: wav_encoder_forward.1
$region0: #{wav_encoder_forward.1}
  #allocation0 [shape = 'u32[]', space=smem, size = 0x4, offset = 0x4, fixed_abs, tag = 'smem constant byte address 0x4 - core index']
  #allocation1 [shape = 'u32[144,128]{1,0:T(1,128)}', space=vmem, size = 0x12000, scoped, tag = 'internal scratch']
  #allocation2 [shape = 'f32[240,96]{1,0:T(8,128)}', space=vmem, size = 0x1e000, scoped, tag = 'scratch operand']
  #allocation3 [shape = 'f32[238,32]{1,0:T(8,128)}', space=vmem, size = 0x1e000, scoped, tag = 'scratch operand']
  #allocation4 [shape = 'f32[38,64]{1,0:T(8,128)}', space=vmem, size = 0x5000, scoped, tag = 'scratch operand']
  %s0 = inlined_call_operand.vmem [shape: f32[2,241,30], index: 0, kind: input, shape index: {}]
  %s1 = inlined_call_operand.vmem [shape: f32[30,96], index: 1, kind: input, shape index: {}]
  %s2 = inlined_call_operand.vmem [shape: f32[30,96], index: 2, kind: input, shape index: {}]
  %s3 = inlined_call_operand.vmem [shape: f32[1,96], index: 3, kind: input, shape index: {}]
  %s4 = inlined_call_operand.vmem [shape: f32[3,96,32], index: 4, kind: input, shape index: {}]
  %s5 = inlined_call_operand.vmem [shape: f32[1,32], index: 5, kind: input, shape index: {}]
  %s6 = inlined_call_operand.vmem [shape: f32[15,32,64], index: 6, kind: input, shape index: {}]
  %s7 = inlined_call_operand.vmem [shape: f32[1,64], index: 7, kind: input, shape index: {}]
  %s8 = inlined_call_operand.vmem [shape: f32[15,64,32], index: 8, kind: input, shape index: {}]
  %s9 = inlined_call_operand.vmem [shape: f32[1,32], index: 9, kind: input, shape index: {}]
  %s10 = inlined_call_operand.hbm [shape: f32[2,4,32], index: 10, kind: output, shape index: {}]
  %s11 = sld [smem:[#allocation0]]
  $region73: #{wav_encoder_forward.1} parent=0
    _
  %s13 = ssub.s32 1, %s11
  %s14 = scalar_select 0, %s13, %s11
  $region1: #{wav_encoder_forward.1} parent=0
    #allocation5 [shape = 'u8[4096]{0}', space=vmem, size = 0x1000, scoped, tag = 'output window, operand 0']
    #allocation6 [shape = 's32[2]{0}', space=sflag, size = 0x8, scoped, tag = 'scoped memory for wav_encoder_forward.1']
    %15 = vsyncpa [#allocation6], 0
    %s16 = scalar_lea.sflag [#allocation6], 1
    %17 = vsyncpa %s16, 0
    loop: start=0, step=1, limit=4
    $region2: #{wav_encoder_forward.1} parent=1 // loop_pre_header
      _
    $region3: #{wav_encoder_forward.1} parent=1 // loop_header
      %s19 = sphi 0, %s23
      %p20 = scmp.ge.s32.totalorder %s19, 4
      %s29 = sphi 0, %s31
      %s32 = sphi 0, %s29
      %s33 = sphi 0, %s32
      %s49 = sphi 0, %s33
      %s53 = sphi 0, %s53
      %s55 = sphi 0, %s53
      %s56 = sphi 0, %s55
      %s70 = sphi 0, %s56
      %s74 = sphi 0, %s74
      %s76 = sphi 0, %s74
      %s77 = sphi 0, %s76
      %s91 = sphi 0, %s77
      %s95 = sphi 0, %s95
      %s97 = sphi 0, %s95
      %s98 = sphi 0, %s97
      %s112 = sphi 0, %s98
      %s116 = sphi 0, %s116
      %s118 = sphi 0, %s116
      %s119 = sphi 0, %s118
      %s133 = sphi 0, %s119
      %s137 = sphi 0, %s137
      %s139 = sphi 0, %s137
      %s140 = sphi 0, %s139
      %s154 = sphi 0, %s140
      %s158 = sphi 0, %s158
      %s160 = sphi 0, %s158
      %s161 = sphi 0, %s160
      %s175 = sphi 0, %s161
      %s179 = sphi 0, %s179
      %s181 = sphi 0, %s179
      %s182 = sphi 0, %s181
      %s196 = sphi 0, %s182
      %s200 = sphi 0, %s200
      %s202 = sphi 0, %s200
      %s203 = sphi 0, %s202
      %s217 = sphi 0, %s203
      %s221 = sphi 0, %s221
      %s223 = sphi 0, %s221
      %s224 = sphi 0, %s223
      %s238 = sphi 0, %s224
      %s244 = sphi 0, %s246
      %s247 = sphi 0, %s244
      %s248 = sphi 0, %s247
      %s264 = sphi 0, %s248
    $region4: #{wav_encoder_forward.1} parent=1 // loop_header_branch
      %22 = sbr.rel (%p20) target = $region8
    $region5: #{wav_encoder_forward.1} parent=1 // loop_body
      %s24 = ssub.s32 %s19, 1
      %s25 = ssub.s32 %s19, 2
      %s26 = sadd.s32 %s19, 1
      %s27 = ssub.s32 %s19, %s26
      %p28 = scmp.eq.s32.totalorder %s27, 0
      %s30 = sadd.s32 %s29, 1
      %s31 = scalar_select %p28, %s29, %s30
      %p34 = pneg %p28
      %p35 = scmp.eq.s32.totalorder %s19, 1
      %p36 = por %p34, %p35
      %p37 = scmp.ne.s32.totalorder %s29, %s32
      %p38 = scmp.eq.s32.totalorder %s19, 0
      %p39 = por %p37, %p38
      %p40 = scmp.ne.s32.totalorder %s29, %s32
      %p41 = scmp.eq.s32.totalorder %s24, 1
      %p42 = por %p40, %p41
      %p43 = scmp.ne.s32.totalorder %s32, %s33
      %p44 = scmp.eq.s32.totalorder %s24, 0
      %p45 = por %p43, %p44
      %p46 = scmp.ne.s32.totalorder %s32, %s33
      %p47 = scmp.eq.s32.totalorder %s25, 1
      %p48 = por %p46, %p47
      %p50 = scmp.ne.s32.totalorder %s33, %s49
      %p51 = scmp.eq.s32.totalorder %s25, 0
      %p52 = por %p50, %p51
      %s54 = sadd.s32 %s53, 1
      %p57 = scmp.eq.s32.totalorder %s19, 1
      %p58 = scmp.ne.s32.totalorder %s53, %s55
      %p59 = scmp.eq.s32.totalorder %s19, 0
      %p60 = por %p58, %p59
      %p61 = scmp.ne.s32.totalorder %s53, %s55
      %p62 = scmp.eq.s32.totalorder %s24, 1
      %p63 = por %p61, %p62
      %p64 = scmp.ne.s32.totalorder %s55, %s56
      %p65 = scmp.eq.s32.totalorder %s24, 0
      %p66 = por %p64, %p65
      %p67 = scmp.ne.s32.totalorder %s55, %s56
      %p68 = scmp.eq.s32.totalorder %s25, 1
      %p69 = por %p67, %p68
      %p71 = scmp.ne.s32.totalorder %s56, %s70
      %p72 = scmp.eq.s32.totalorder %s25, 0
      %p73 = por %p71, %p72
      %s75 = sadd.s32 %s74, 1
      %p78 = scmp.eq.s32.totalorder %s19, 1
      %p79 = scmp.ne.s32.totalorder %s74, %s76
      %p80 = scmp.eq.s32.totalorder %s19, 0
      %p81 = por %p79, %p80
      %p82 = scmp.ne.s32.totalorder %s74, %s76
      %p83 = scmp.eq.s32.totalorder %s24, 1
      %p84 = por %p82, %p83
      %p85 = scmp.ne.s32.totalorder %s76, %s77
      %p86 = scmp.eq.s32.totalorder %s24, 0
      %p87 = por %p85, %p86
      %p88 = scmp.ne.s32.totalorder %s76, %s77
      %p89 = scmp.eq.s32.totalorder %s25, 1
      %p90 = por %p88, %p89
      %p92 = scmp.ne.s32.totalorder %s77, %s91
      %p93 = scmp.eq.s32.totalorder %s25, 0
      %p94 = por %p92, %p93
      %s96 = sadd.s32 %s95, 1
      %p99 = scmp.eq.s32.totalorder %s19, 1
      %p100 = scmp.ne.s32.totalorder %s95, %s97
      %p101 = scmp.eq.s32.totalorder %s19, 0
      %p102 = por %p100, %p101
      %p103 = scmp.ne.s32.totalorder %s95, %s97
      %p104 = scmp.eq.s32.totalorder %s24, 1
      %p105 = por %p103, %p104
      %p106 = scmp.ne.s32.totalorder %s97, %s98
      %p107 = scmp.eq.s32.totalorder %s24, 0
      %p108 = por %p106, %p107
      %p109 = scmp.ne.s32.totalorder %s97, %s98
      %p110 = scmp.eq.s32.totalorder %s25, 1
      %p111 = por %p109, %p110
      %p113 = scmp.ne.s32.totalorder %s98, %s112
      %p114 = scmp.eq.s32.totalorder %s25, 0
      %p115 = por %p113, %p114
      %s117 = sadd.s32 %s116, 1
      %p120 = scmp.eq.s32.totalorder %s19, 1
      %p121 = scmp.ne.s32.totalorder %s116, %s118
      %p122 = scmp.eq.s32.totalorder %s19, 0
      %p123 = por %p121, %p122
      %p124 = scmp.ne.s32.totalorder %s116, %s118
      %p125 = scmp.eq.s32.totalorder %s24, 1
      %p126 = por %p124, %p125
      %p127 = scmp.ne.s32.totalorder %s118, %s119
      %p128 = scmp.eq.s32.totalorder %s24, 0
      %p129 = por %p127, %p128
      %p130 = scmp.ne.s32.totalorder %s118, %s119
      %p131 = scmp.eq.s32.totalorder %s25, 1
      %p132 = por %p130, %p131
      %p134 = scmp.ne.s32.totalorder %s119, %s133
      %p135 = scmp.eq.s32.totalorder %s25, 0
      %p136 = por %p134, %p135
      %s138 = sadd.s32 %s137, 1
      %p141 = scmp.eq.s32.totalorder %s19, 1
      %p142 = scmp.ne.s32.totalorder %s137, %s139
      %p143 = scmp.eq.s32.totalorder %s19, 0
      %p144 = por %p142, %p143
      %p145 = scmp.ne.s32.totalorder %s137, %s139
      %p146 = scmp.eq.s32.totalorder %s24, 1
      %p147 = por %p145, %p146
      %p148 = scmp.ne.s32.totalorder %s139, %s140
      %p149 = scmp.eq.s32.totalorder %s24, 0
      %p150 = por %p148, %p149
      %p151 = scmp.ne.s32.totalorder %s139, %s140
      %p152 = scmp.eq.s32.totalorder %s25, 1
      %p153 = por %p151, %p152
      %p155 = scmp.ne.s32.totalorder %s140, %s154
      %p156 = scmp.eq.s32.totalorder %s25, 0
      %p157 = por %p155, %p156
      %s159 = sadd.s32 %s158, 1
      %p162 = scmp.eq.s32.totalorder %s19, 1
      %p163 = scmp.ne.s32.totalorder %s158, %s160
      %p164 = scmp.eq.s32.totalorder %s19, 0
      %p165 = por %p163, %p164
      %p166 = scmp.ne.s32.totalorder %s158, %s160
      %p167 = scmp.eq.s32.totalorder %s24, 1
      %p168 = por %p166, %p167
      %p169 = scmp.ne.s32.totalorder %s160, %s161
      %p170 = scmp.eq.s32.totalorder %s24, 0
      %p171 = por %p169, %p170
      %p172 = scmp.ne.s32.totalorder %s160, %s161
      %p173 = scmp.eq.s32.totalorder %s25, 1
      %p174 = por %p172, %p173
      %p176 = scmp.ne.s32.totalorder %s161, %s175
      %p177 = scmp.eq.s32.totalorder %s25, 0
      %p178 = por %p176, %p177
      %s180 = sadd.s32 %s179, 1
      %p183 = scmp.eq.s32.totalorder %s19, 1
      %p184 = scmp.ne.s32.totalorder %s179, %s181
      %p185 = scmp.eq.s32.totalorder %s19, 0
      %p186 = por %p184, %p185
      %p187 = scmp.ne.s32.totalorder %s179, %s181
      %p188 = scmp.eq.s32.totalorder %s24, 1
      %p189 = por %p187, %p188
      %p190 = scmp.ne.s32.totalorder %s181, %s182
      %p191 = scmp.eq.s32.totalorder %s24, 0
      %p192 = por %p190, %p191
      %p193 = scmp.ne.s32.totalorder %s181, %s182
      %p194 = scmp.eq.s32.totalorder %s25, 1
      %p195 = por %p193, %p194
      %p197 = scmp.ne.s32.totalorder %s182, %s196
      %p198 = scmp.eq.s32.totalorder %s25, 0
      %p199 = por %p197, %p198
      %s201 = sadd.s32 %s200, 1
      %p204 = scmp.eq.s32.totalorder %s19, 1
      %p205 = scmp.ne.s32.totalorder %s200, %s202
      %p206 = scmp.eq.s32.totalorder %s19, 0
      %p207 = por %p205, %p206
      %p208 = scmp.ne.s32.totalorder %s200, %s202
      %p209 = scmp.eq.s32.totalorder %s24, 1
      %p210 = por %p208, %p209
      %p211 = scmp.ne.s32.totalorder %s202, %s203
      %p212 = scmp.eq.s32.totalorder %s24, 0
      %p213 = por %p211, %p212
      %p214 = scmp.ne.s32.totalorder %s202, %s203
      %p215 = scmp.eq.s32.totalorder %s25, 1
      %p216 = por %p214, %p215
      %p218 = scmp.ne.s32.totalorder %s203, %s217
      %p219 = scmp.eq.s32.totalorder %s25, 0
      %p220 = por %p218, %p219
      %s222 = sadd.s32 %s221, 1
      %p225 = scmp.eq.s32.totalorder %s19, 1
      %p226 = scmp.ne.s32.totalorder %s221, %s223
      %p227 = scmp.eq.s32.totalorder %s19, 0
      %p228 = por %p226, %p227
      %p229 = scmp.ne.s32.totalorder %s221, %s223
      %p230 = scmp.eq.s32.totalorder %s24, 1
      %p231 = por %p229, %p230
      %p232 = scmp.ne.s32.totalorder %s223, %s224
      %p233 = scmp.eq.s32.totalorder %s24, 0
      %p234 = por %p232, %p233
      %p235 = scmp.ne.s32.totalorder %s223, %s224
      %p236 = scmp.eq.s32.totalorder %s25, 1
      %p237 = por %p235, %p236
      %p239 = scmp.ne.s32.totalorder %s224, %s238
      %p240 = scmp.eq.s32.totalorder %s25, 0
      %p241 = por %p239, %p240
      %s242 = ssub.s32 %s19, %s26
      %p243 = scmp.eq.s32.totalorder %s242, 0
      %s245 = sadd.s32 %s244, 1
      %s246 = scalar_select %p243, %s244, %s245
      %p249 = pneg %p243
      %p250 = scmp.eq.s32.totalorder %s19, 1
      %p251 = por %p249, %p250
      %p252 = scmp.ne.s32.totalorder %s244, %s247
      %p253 = scmp.eq.s32.totalorder %s19, 0
      %p254 = por %p252, %p253
      %p255 = scmp.ne.s32.totalorder %s244, %s247
      %p256 = scmp.eq.s32.totalorder %s24, 1
      %p257 = por %p255, %p256
      %p258 = scmp.ne.s32.totalorder %s247, %s248
      %p259 = scmp.eq.s32.totalorder %s24, 0
      %p260 = por %p258, %p259
      %p261 = scmp.ne.s32.totalorder %s247, %s248
      %p262 = scmp.eq.s32.totalorder %s25, 1
      %p263 = por %p261, %p262
      %p265 = scmp.ne.s32.totalorder %s248, %s264
      %p266 = scmp.eq.s32.totalorder %s25, 0
      %p267 = por %p265, %p266
      %p268 = scmp.le.s32.totalorder 1, %s19
      %p269 = scmp.lt.s32.totalorder %s19, 3
      %p270 = pnand %p268, %p269
      %p271 = pneg %p270
      // Predicated region
      $region9: #{wav_encoder_forward.1} parent=5 // pred_check
        _
      $region10: #{wav_encoder_forward.1} parent=5 // pred_check_branch
        %273 = sbr.rel (%p270) target = $region12
      $region11: #{wav_encoder_forward.1} parent=5 // pred_region
        %s274 = ssub.s32 %s19, 1
        // Predicated region
        $region13: #{wav_encoder_forward.1} parent=11 // pred_check
          %p275 = pneg %p66
        $region14: #{wav_encoder_forward.1} parent=11 // pred_check_branch
          %277 = sbr.rel (%p275) target = $region16
        $region15: #{wav_encoder_forward.1} parent=11 // pred_region
          _
        $region16: #{wav_encoder_forward.1} parent=11 // pred_fallthru
          _
        // Predicated region
        $region17: #{wav_encoder_forward.1} parent=11 // pred_check
          %p278 = pneg %p87
        $region18: #{wav_encoder_forward.1} parent=11 // pred_check_branch
          %280 = sbr.rel (%p278) target = $region20
        $region19: #{wav_encoder_forward.1} parent=11 // pred_region
          _
        $region20: #{wav_encoder_forward.1} parent=11 // pred_fallthru
          _
        // Predicated region
        $region21: #{wav_encoder_forward.1} parent=11 // pred_check
          %p281 = pneg %p108
        $region22: #{wav_encoder_forward.1} parent=11 // pred_check_branch
          %283 = sbr.rel (%p281) target = $region24
        $region23: #{wav_encoder_forward.1} parent=11 // pred_region
          _
        $region24: #{wav_encoder_forward.1} parent=11 // pred_fallthru
          _
        // Predicated region
        $region25: #{wav_encoder_forward.1} parent=11 // pred_check
          %p284 = pneg %p129
        $region26: #{wav_encoder_forward.1} parent=11 // pred_check_branch
          %286 = sbr.rel (%p284) target = $region28
        $region27: #{wav_encoder_forward.1} parent=11 // pred_region
          _
        $region28: #{wav_encoder_forward.1} parent=11 // pred_fallthru
          _
        // Predicated region
        $region29: #{wav_encoder_forward.1} parent=11 // pred_check
          %p287 = pneg %p150
        $region30: #{wav_encoder_forward.1} parent=11 // pred_check_branch
          %289 = sbr.rel (%p287) target = $region32
        $region31: #{wav_encoder_forward.1} parent=11 // pred_region
          _
        $region32: #{wav_encoder_forward.1} parent=11 // pred_fallthru
          _
        // Predicated region
        $region33: #{wav_encoder_forward.1} parent=11 // pred_check
          %p290 = pneg %p171
        $region34: #{wav_encoder_forward.1} parent=11 // pred_check_branch
          %292 = sbr.rel (%p290) target = $region36
        $region35: #{wav_encoder_forward.1} parent=11 // pred_region
          _
        $region36: #{wav_encoder_forward.1} parent=11 // pred_fallthru
          _
        // Predicated region
        $region37: #{wav_encoder_forward.1} parent=11 // pred_check
          %p293 = pneg %p192
        $region38: #{wav_encoder_forward.1} parent=11 // pred_check_branch
          %295 = sbr.rel (%p293) target = $region40
        $region39: #{wav_encoder_forward.1} parent=11 // pred_region
          _
        $region40: #{wav_encoder_forward.1} parent=11 // pred_fallthru
          _
        // Predicated region
        $region41: #{wav_encoder_forward.1} parent=11 // pred_check
          %p296 = pneg %p213
        $region42: #{wav_encoder_forward.1} parent=11 // pred_check_branch
          %298 = sbr.rel (%p296) target = $region44
        $region43: #{wav_encoder_forward.1} parent=11 // pred_region
          _
        $region44: #{wav_encoder_forward.1} parent=11 // pred_fallthru
          _
        // Predicated region
        $region45: #{wav_encoder_forward.1} parent=11 // pred_check
          %p299 = pneg %p234
        $region46: #{wav_encoder_forward.1} parent=11 // pred_check_branch
          %301 = sbr.rel (%p299) target = $region48
        $region47: #{wav_encoder_forward.1} parent=11 // pred_region
          _
        $region48: #{wav_encoder_forward.1} parent=11 // pred_fallthru
          _
      $region12: #{wav_encoder_forward.1} parent=5 // pred_fallthru
        _
      %p302 = scmp.lt.s32.totalorder %s19, 2
      // Predicated region
      $region49: #{wav_encoder_forward.1} parent=5 // pred_check
        %p303 = pneg %p302
      $region50: #{wav_encoder_forward.1} parent=5 // pred_check_branch
        %305 = sbr.rel (%p303) target = $region52
      $region51: #{wav_encoder_forward.1} parent=5 // pred_region
        // Predicated region
        $region53: #{wav_encoder_forward.1} parent=51 // pred_check
          %p306 = pneg %p39
        $region54: #{wav_encoder_forward.1} parent=51 // pred_check_branch
          %308 = sbr.rel (%p306) target = $region56
        $region55: #{wav_encoder_forward.1} parent=51 // pred_region
          %p309 = scmp.lt.s32.totalorder %s19, 1
          %s310 = scalar_select %p309, %s19, 1
          %s311 = smul.addr %s310, 31
          %s312 = smul.addr %s311, 8
          %s313 = scalar_lea.vmem %s0, %s312
        $region56: #{wav_encoder_forward.1} parent=51 // pred_fallthru
          _
      $region52: #{wav_encoder_forward.1} parent=5 // pred_fallthru
        _
      %p314 = scmp.le.s32.totalorder 1, %s19
      %p315 = scmp.lt.s32.totalorder %s19, 3
      %p316 = pnand %p314, %p315
      %p317 = pneg %p316
      // Predicated region
      $region57: #{wav_encoder_forward.1} parent=5 // pred_check
        _
      $region58: #{wav_encoder_forward.1} parent=5 // pred_check_branch
        %319 = sbr.rel (%p316) target = $region60
      $region59: #{wav_encoder_forward.1} parent=5 // pred_region
        %s320 = ssub.s32 %s19, 1
        %p321 = scmp.lt.s32.totalorder %s24, 1
        %s322 = scalar_select %p321, %s24, 1
        %s323 = smul.addr %s322, 31
        %s324 = smul.addr %s323, 8
        %s325 = scalar_lea.vmem %s0, %s324
        %p326 = pneg %p45
        %p327 = pneg %p42
        %p328 = pneg %p66
        %p329 = pneg %p63
        %p330 = pneg %p87
        %p331 = pneg %p84
        %p332 = pneg %p108
        %p333 = pneg %p105
        %p334 = pneg %p129
        %p335 = pneg %p126
        %p336 = pneg %p150
        %p337 = pneg %p147
        %p338 = pneg %p171
        %p339 = pneg %p168
        %p340 = pneg %p192
        %p341 = pneg %p189
        %p342 = pneg %p213
        %p343 = pneg %p210
        %p344 = pneg %p234
        %p345 = pneg %p231
        %p346 = pneg %p260
        %p347 = pneg %p257
        %s348 = sand.u32 %s247, 1
        %s349 = scalar_lea.sflag [#allocation6], %s348
        %s350 = sand.u32 %s247, 1
        %s351 = smul.addr %s350, 4
        %s352 = scalar_lea.vmem [#allocation5], %s351
        %p353 = scmp.lt.s32.totalorder %s24, 1
        %s354 = scalar_select %p353, %s24, 1
        %s355 = smul.addr %s354, 31
        %s356 = smul.addr %s355, 8
        %s357 = scalar_lea.vmem %s0, %s356
        %v358 = vld [vmem:[%s357] sm:$0xff]
        %v359 = vld [vmem:[%s357 + $0x8] sm:$0xff]
        %v360 = vld [vmem:[%s357 + $0x10] sm:$0xff]
        %v361 = vld [vmem:[%s357 + $0x18] sm:$0xff]
        %v362 = vld [vmem:[%s357 + $0x20] sm:$0xff]
        %v363 = vld [vmem:[%s357 + $0x28] sm:$0xff]
        %v364 = vld [vmem:[%s357 + $0x30] sm:$0xff]
        %v365 = vld [vmem:[%s357 + $0x38] sm:$0xff]
        %v366 = vld [vmem:[%s357 + $0x40] sm:$0xff]
        %v367 = vld [vmem:[%s357 + $0x48] sm:$0xff]
        %v368 = vld [vmem:[%s357 + $0x50] sm:$0xff]
        %v369 = vld [vmem:[%s357 + $0x58] sm:$0xff]
        %v370 = vld [vmem:[%s357 + $0x60] sm:$0xff]
        %v371 = vld [vmem:[%s357 + $0x68] sm:$0xff]
        %v372 = vld [vmem:[%s357 + $0x70] sm:$0xff]
        %v373 = vld [vmem:[%s357 + $0x78] sm:$0xff]
        %v374 = vld [vmem:[%s357 + $0x80] sm:$0xff]
        %v375 = vld [vmem:[%s357 + $0x88] sm:$0xff]
        %v376 = vld [vmem:[%s357 + $0x90] sm:$0xff]
        %v377 = vld [vmem:[%s357 + $0x98] sm:$0xff]
        %v378 = vld [vmem:[%s357 + $0xa0] sm:$0xff]
        %v379 = vld [vmem:[%s357 + $0xa8] sm:$0xff]
        %v380 = vld [vmem:[%s357 + $0xb0] sm:$0xff]
        %v381 = vld [vmem:[%s357 + $0xb8] sm:$0xff]
        %v382 = vld [vmem:[%s357 + $0xc0] sm:$0xff]
        %v383 = vld [vmem:[%s357 + $0xc8] sm:$0xff]
        %v384 = vld [vmem:[%s357 + $0xd0] sm:$0xff]
        %v385 = vld [vmem:[%s357 + $0xd8] sm:$0xff]
        %v386 = vld [vmem:[%s357 + $0xe0] sm:$0xff]
        %v387 = vld [vmem:[%s357 + $0xe8] sm:$0xff]
        %v388 = vld [vmem:[%s357 + $0xf0] sm:$0x1]
        %v389 = vld [vmem:[%s1] sm:$0xff]
        %v390 = vld [vmem:[%s1 + $0x8] sm:$0xff]
        %v391 = vld [vmem:[%s1 + $0x10] sm:$0xff]
        %v392 = vld [vmem:[%s1 + $0x18] sm:$0x3f]
        %v393 = vld [vmem:[%s2] sm:$0xff]
        %v394 = vld [vmem:[%s2 + $0x8] sm:$0xff]
        %v395 = vld [vmem:[%s2 + $0x10] sm:$0xff]
        %v396 = vld [vmem:[%s2 + $0x18] sm:$0x3f]
        %vm428 = vcmask 1046528
        %v429 = vrot.slane %v358, 1
        %v430 = vrot.slane %v359, 1
        %v431 = vsel %vm428, %v429, %v430
        %v432 = vrot.slane %v360, 1
        %v433 = vsel %vm428, %v430, %v432
        %v434 = vrot.slane %v361, 1
        %v435 = vsel %vm428, %v432, %v434
        %v436 = vrot.slane %v362, 1
        %v437 = vsel %vm428, %v434, %v436
        %v438 = vrot.slane %v363, 1
        %v439 = vsel %vm428, %v436, %v438
        %v440 = vrot.slane %v364, 1
        %v441 = vsel %vm428, %v438, %v440
        %v442 = vrot.slane %v365, 1
        %v443 = vsel %vm428, %v440, %v442
        %v444 = vrot.slane %v366, 1
        %v445 = vsel %vm428, %v442, %v444
        %v446 = vrot.slane %v367, 1
        %v447 = vsel %vm428, %v444, %v446
        %v448 = vrot.slane %v368, 1
        %v449 = vsel %vm428, %v446, %v448
        %v450 = vrot.slane %v369, 1
        %v451 = vsel %vm428, %v448, %v450
        %v452 = vrot.slane %v370, 1
        %v453 = vsel %vm428, %v450, %v452
        %v454 = vrot.slane %v371, 1
        %v455 = vsel %vm428, %v452, %v454
        %v456 = vrot.slane %v372, 1
        %v457 = vsel %vm428, %v454, %v456
        %v458 = vrot.slane %v373, 1
        %v459 = vsel %vm428, %v456, %v458
        %v460 = vrot.slane %v374, 1
        %v461 = vsel %vm428, %v458, %v460
        %v462 = vrot.slane %v375, 1
        %v463 = vsel %vm428, %v460, %v462
        %v464 = vrot.slane %v376, 1
        %v465 = vsel %vm428, %v462, %v464
        %v466 = vrot.slane %v377, 1
        %v467 = vsel %vm428, %v464, %v466
        %v468 = vrot.slane %v378, 1
        %v469 = vsel %vm428, %v466, %v468
        %v470 = vrot.slane %v379, 1
        %v471 = vsel %vm428, %v468, %v470
        %v472 = vrot.slane %v380, 1
        %v473 = vsel %vm428, %v470, %v472
        %v474 = vrot.slane %v381, 1
        %v475 = vsel %vm428, %v472, %v474
        %v476 = vrot.slane %v382, 1
        %v477 = vsel %vm428, %v474, %v476
        %v478 = vrot.slane %v383, 1
        %v479 = vsel %vm428, %v476, %v478
        %v480 = vrot.slane %v384, 1
        %v481 = vsel %vm428, %v478, %v480
        %v482 = vrot.slane %v385, 1
        %v483 = vsel %vm428, %v480, %v482
        %v484 = vrot.slane %v386, 1
        %v485 = vsel %vm428, %v482, %v484
        %v486 = vrot.slane %v387, 1
        %v487 = vsel %vm428, %v484, %v486
        %v488 = vrot.slane %v388, 1
        %v489 = vsel %vm428, %v486, %v488
        %vm490 = vcmask 244736
        %v491 = vsel %vm490, %v431, 0
        %v493 = vsel %vm490, %v433, 0
        %v495 = vsel %vm490, %v435, 0
        %v497 = vsel %vm490, %v437, 0
        %v499 = vsel %vm490, %v439, 0
        %v501 = vsel %vm490, %v441, 0
        %v503 = vsel %vm490, %v443, 0
        %v505 = vsel %vm490, %v445, 0
        %v507 = vsel %vm490, %v447, 0
        %v509 = vsel %vm490, %v449, 0
        %v511 = vsel %vm490, %v451, 0
        %v513 = vsel %vm490, %v453, 0
        %v515 = vsel %vm490, %v455, 0
        %v517 = vsel %vm490, %v457, 0
        %v519 = vsel %vm490, %v459, 0
        %v521 = vsel %vm490, %v461, 0
        %v523 = vsel %vm490, %v463, 0
        %v525 = vsel %vm490, %v465, 0
        %v527 = vsel %vm490, %v467, 0
        %v529 = vsel %vm490, %v469, 0
        %v531 = vsel %vm490, %v471, 0
        %v533 = vsel %vm490, %v473, 0
        %v535 = vsel %vm490, %v475, 0
        %v537 = vsel %vm490, %v477, 0
        %v539 = vsel %vm490, %v479, 0
        %v541 = vsel %vm490, %v481, 0
        %v543 = vsel %vm490, %v483, 0
        %v545 = vsel %vm490, %v485, 0
        %v547 = vsel %vm490, %v487, 0
        %v549 = vsel %vm490, %v489, 0
        %vm551 = vcmask 1045504
        %v553 = vsel %vm551, %v396, 0
        %555 = vmatprep.subr.mxu0 0.0
        %556 = vmatpush1.msra.mxu0 0.0
        %557 = vmatprep.subr.mxu0 0.0
        %558 = vmatpush1.msra.mxu0 0.0
        %559 = vmatprep.subr.mxu0 0.0
        %560 = vmatpush1.msra.mxu0 0.0
        %561 = vmatprep.subr.mxu0 0.0
        %562 = vmatpush1.msra.mxu0 0.0
        %563 = vmatprep.subr.mxu0 0.0
        %564 = vmatpush1.msra.mxu0 0.0
        %565 = vmatprep.subr.mxu0 0.0
        %566 = vmatpush1.msra.mxu0 0.0
        %567 = vmatprep.subr.mxu0 0.0
        %568 = vmatpush1.msra.mxu0 0.0
        %569 = vmatprep.subr.mxu0 0.0
        %570 = vmatpush1.msra.mxu0 0.0
        %571 = vmatprep.subr.mxu0 0.0
        %572 = vmatpush1.msra.mxu0 0.0
        %573 = vmatprep.subr.mxu0 0.0
        %574 = vmatpush1.msra.mxu0 0.0
        %575 = vmatprep.subr.mxu0 0.0
        %576 = vmatpush1.msra.mxu0 0.0
        %577 = vmatprep.subr.mxu0 0.0
        %578 = vmatpush1.msra.mxu0 0.0
        %579 = vmatprep.subr.mxu0 0.0
        %580 = vmatpush1.msra.mxu0 %v553
        %581 = vmatprep.subr.mxu0 0.0
        %582 = vmatpush1.msra.mxu0 %v395
        %583 = vmatprep.subr.mxu0 0.0
        %584 = vmatpush1.msra.mxu0 %v394
        %585 = vmatprep.subr.mxu0 0.0
        %586 = vmatpush1.msra.mxu0 %v393
        %587 = vmatprep.subr.mxu0 0.0
        %588 = vmatpush2.msra.mxu0 0.0
        %589 = vmatprep.subr.mxu0 0.0
        %590 = vmatpush2.msra.mxu0 0.0
        %591 = vmatprep.subr.mxu0 0.0
        %592 = vmatpush2.msra.mxu0 0.0
        %593 = vmatprep.subr.mxu0 0.0
        %594 = vmatpush2.msra.mxu0 0.0
        %595 = vmatprep.subr.mxu0 0.0
        %596 = vmatpush2.msra.mxu0 0.0
        %597 = vmatprep.subr.mxu0 0.0
        %598 = vmatpush2.msra.mxu0 0.0
        %599 = vmatprep.subr.mxu0 0.0
        %600 = vmatpush2.msra.mxu0 0.0
        %601 = vmatprep.subr.mxu0 0.0
        %602 = vmatpush2.msra.mxu0 0.0
        %603 = vmatprep.subr.mxu0 0.0
        %604 = vmatpush2.msra.mxu0 0.0
        %605 = vmatprep.subr.mxu0 0.0
        %606 = vmatpush2.msra.mxu0 0.0
        %607 = vmatprep.subr.mxu0 0.0
        %608 = vmatpush2.msra.mxu0 0.0
        %609 = vmatprep.subr.mxu0 0.0
        %610 = vmatpush2.msra.mxu0 0.0
        %611 = vmatprep.subr.mxu0 0.0
        %612 = vmatpush2.msra.mxu0 0.0
        %613 = vmatprep.subr.mxu0 0.0
        %614 = vmatpush2.msra.mxu0 0.0
        %615 = vmatprep.subr.mxu0 0.0
        %616 = vmatpush2.msra.mxu0 0.0
        %617 = vmatprep.subr.mxu0 0.0
        %618 = vmatpush2.msra.mxu0 0.0
        %619 = vmatprep.mubr.f32.mxu0 0.0
        %620 = vmatmul.mubr.f32.gmra.mxu0 %v491
        %v621 = vpop.f32.mrf.mxu0
        %v622 = vadd.f32 0.0, %v621
        %v623 = vpop.f32.mrf.mxu0
        %624 = vmatprep.mubr.f32.mxu0 0.0
        %625 = vmatmul.mubr.f32.gmra.mxu0 %v493
        %v626 = vpop.f32.mrf.mxu0
        %v627 = vadd.f32 0.0, %v626
        %v628 = vpop.f32.mrf.mxu0
        %629 = vmatprep.mubr.f32.mxu0 0.0
        %630 = vmatmul.mubr.f32.gmra.mxu0 %v495
        %v631 = vpop.f32.mrf.mxu0
        %v632 = vadd.f32 0.0, %v631
        %v633 = vpop.f32.mrf.mxu0
        %634 = vmatprep.mubr.f32.mxu0 0.0
        %635 = vmatmul.mubr.f32.gmra.mxu0 %v497
        %v636 = vpop.f32.mrf.mxu0
        %v637 = vadd.f32 0.0, %v636
        %v638 = vpop.f32.mrf.mxu0
        %639 = vmatprep.mubr.f32.mxu0 0.0
        %640 = vmatmul.mubr.f32.gmra.mxu0 %v499
        %v641 = vpop.f32.mrf.mxu0
        %v642 = vadd.f32 0.0, %v641
        %v643 = vpop.f32.mrf.mxu0
        %644 = vmatprep.mubr.f32.mxu0 0.0
        %645 = vmatmul.mubr.f32.gmra.mxu0 %v501
        %v646 = vpop.f32.mrf.mxu0
        %v647 = vadd.f32 0.0, %v646
        %v648 = vpop.f32.mrf.mxu0
        %649 = vmatprep.mubr.f32.mxu0 0.0
        %650 = vmatmul.mubr.f32.gmra.mxu0 %v503
        %v651 = vpop.f32.mrf.mxu0
        %v652 = vadd.f32 0.0, %v651
        %v653 = vpop.f32.mrf.mxu0
        %654 = vmatprep.mubr.f32.mxu0 0.0
        %655 = vmatmul.mubr.f32.gmra.mxu0 %v505
        %v656 = vpop.f32.mrf.mxu0
        %v657 = vadd.f32 0.0, %v656
        %v658 = vpop.f32.mrf.mxu0
        %659 = vmatprep.mubr.f32.mxu0 0.0
        %660 = vmatmul.mubr.f32.gmra.mxu0 %v507
        %v661 = vpop.f32.mrf.mxu0
        %v662 = vadd.f32 0.0, %v661
        %v663 = vpop.f32.mrf.mxu0
        %664 = vmatprep.mubr.f32.mxu0 0.0
        %665 = vmatmul.mubr.f32.gmra.mxu0 %v509
        %v666 = vpop.f32.mrf.mxu0
        %v667 = vadd.f32 0.0, %v666
        %v668 = vpop.f32.mrf.mxu0
        %669 = vmatprep.mubr.f32.mxu0 0.0
        %670 = vmatmul.mubr.f32.gmra.mxu0 %v511
        %v671 = vpop.f32.mrf.mxu0
        %v672 = vadd.f32 0.0, %v671
        %v673 = vpop.f32.mrf.mxu0
        %674 = vmatprep.mubr.f32.mxu0 0.0
        %675 = vmatmul.mubr.f32.gmra.mxu0 %v513
        %v676 = vpop.f32.mrf.mxu0
        %v677 = vadd.f32 0.0, %v676
        %v678 = vpop.f32.mrf.mxu0
        %679 = vmatprep.mubr.f32.mxu0 0.0
        %680 = vmatmul.mubr.f32.gmra.mxu0 %v515
        %v681 = vpop.f32.mrf.mxu0
        %v682 = vadd.f32 0.0, %v681
        %v683 = vpop.f32.mrf.mxu0
        %684 = vmatprep.mubr.f32.mxu0 0.0
        %685 = vmatmul.mubr.f32.gmra.mxu0 %v517
        %v686 = vpop.f32.mrf.mxu0
        %v687 = vadd.f32 0.0, %v686
        %v688 = vpop.f32.mrf.mxu0
        %689 = vmatprep.mubr.f32.mxu0 0.0
        %690 = vmatmul.mubr.f32.gmra.mxu0 %v519
        %v691 = vpop.f32.mrf.mxu0
        %v692 = vadd.f32 0.0, %v691
        %v693 = vpop.f32.mrf.mxu0
        %694 = vmatprep.mubr.f32.mxu0 0.0
        %695 = vmatmul.mubr.f32.gmra.mxu0 %v521
        %v696 = vpop.f32.mrf.mxu0
        %v697 = vadd.f32 0.0, %v696
        %v698 = vpop.f32.mrf.mxu0
        %699 = vmatprep.mubr.f32.mxu0 0.0
        %700 = vmatmul.mubr.f32.gmra.mxu0 %v523
        %v701 = vpop.f32.mrf.mxu0
        %v702 = vadd.f32 0.0, %v701
        %v703 = vpop.f32.mrf.mxu0
        %704 = vmatprep.mubr.f32.mxu0 0.0
        %705 = vmatmul.mubr.f32.gmra.mxu0 %v525
        %v706 = vpop.f32.mrf.mxu0
        %v707 = vadd.f32 0.0, %v706
        %v708 = vpop.f32.mrf.mxu0
        %709 = vmatprep.mubr.f32.mxu0 0.0
        %710 = vmatmul.mubr.f32.gmra.mxu0 %v527
        %v711 = vpop.f32.mrf.mxu0
        %v712 = vadd.f32 0.0, %v711
        %v713 = vpop.f32.mrf.mxu0
        %714 = vmatprep.mubr.f32.mxu0 0.0
        %715 = vmatmul.mubr.f32.gmra.mxu0 %v529
        %v716 = vpop.f32.mrf.mxu0
        %v717 = vadd.f32 0.0, %v716
        %v718 = vpop.f32.mrf.mxu0
        %719 = vmatprep.mubr.f32.mxu0 0.0
        %720 = vmatmul.mubr.f32.gmra.mxu0 %v531
        %v721 = vpop.f32.mrf.mxu0
        %v722 = vadd.f32 0.0, %v721
        %v723 = vpop.f32.mrf.mxu0
        %724 = vmatprep.mubr.f32.mxu0 0.0
        %725 = vmatmul.mubr.f32.gmra.mxu0 %v533
        %v726 = vpop.f32.mrf.mxu0
        %v727 = vadd.f32 0.0, %v726
        %v728 = vpop.f32.mrf.mxu0
        %729 = vmatprep.mubr.f32.mxu0 0.0
        %730 = vmatmul.mubr.f32.gmra.mxu0 %v535
        %v731 = vpop.f32.mrf.mxu0
        %v732 = vadd.f32 0.0, %v731
        %v733 = vpop.f32.mrf.mxu0
        %734 = vmatprep.mubr.f32.mxu0 0.0
        %735 = vmatmul.mubr.f32.gmra.mxu0 %v537
        %v736 = vpop.f32.mrf.mxu0
        %v737 = vadd.f32 0.0, %v736
        %v738 = vpop.f32.mrf.mxu0
        %739 = vmatprep.mubr.f32.mxu0 0.0
        %740 = vmatmul.mubr.f32.gmra.mxu0 %v539
        %v741 = vpop.f32.mrf.mxu0
        %v742 = vadd.f32 0.0, %v741
        %v743 = vpop.f32.mrf.mxu0
        %744 = vmatprep.mubr.f32.mxu0 0.0
        %745 = vmatmul.mubr.f32.gmra.mxu0 %v541
        %v746 = vpop.f32.mrf.mxu0
        %v747 = vadd.f32 0.0, %v746
        %v748 = vpop.f32.mrf.mxu0
        %749 = vmatprep.mubr.f32.mxu0 0.0
        %750 = vmatmul.mubr.f32.gmra.mxu0 %v543
        %v751 = vpop.f32.mrf.mxu0
        %v752 = vadd.f32 0.0, %v751
        %v753 = vpop.f32.mrf.mxu0
        %754 = vmatprep.mubr.f32.mxu0 0.0
        %755 = vmatmul.mubr.f32.gmra.mxu0 %v545
        %v756 = vpop.f32.mrf.mxu0
        %v757 = vadd.f32 0.0, %v756
        %v758 = vpop.f32.mrf.mxu0
        %759 = vmatprep.mubr.f32.mxu0 0.0
        %760 = vmatmul.mubr.f32.gmra.mxu0 %v547
        %v761 = vpop.f32.mrf.mxu0
        %v762 = vadd.f32 0.0, %v761
        %v763 = vpop.f32.mrf.mxu0
        %764 = vmatprep.mubr.f32.mxu0 0.0
        %765 = vmatmul.mubr.f32.gmra.mxu0 %v549
        %v766 = vpop.f32.mrf.mxu0
        %v767 = vadd.f32 0.0, %v766
        %v768 = vpop.f32.mrf.mxu0
        %769 = vdwg.mxu0
        %v770 = vsel %vm490, %v358, 0
        %v772 = vsel %vm490, %v359, 0
        %v774 = vsel %vm490, %v360, 0
        %v776 = vsel %vm490, %v361, 0
        %v778 = vsel %vm490, %v362, 0
        %v780 = vsel %vm490, %v363, 0
        %v782 = vsel %vm490, %v364, 0
        %v784 = vsel %vm490, %v365, 0
        %v786 = vsel %vm490, %v366, 0
        %v788 = vsel %vm490, %v367, 0
        %v790 = vsel %vm490, %v368, 0
        %v792 = vsel %vm490, %v369, 0
        %v794 = vsel %vm490, %v370, 0
        %v796 = vsel %vm490, %v371, 0
        %v798 = vsel %vm490, %v372, 0
        %v800 = vsel %vm490, %v373, 0
        %v802 = vsel %vm490, %v374, 0
        %v804 = vsel %vm490, %v375, 0
        %v806 = vsel %vm490, %v376, 0
        %v808 = vsel %vm490, %v377, 0
        %v810 = vsel %vm490, %v378, 0
        %v812 = vsel %vm490, %v379, 0
        %v814 = vsel %vm490, %v380, 0
        %v816 = vsel %vm490, %v381, 0
        %v818 = vsel %vm490, %v382, 0
        %v820 = vsel %vm490, %v383, 0
        %v822 = vsel %vm490, %v384, 0
        %v824 = vsel %vm490, %v385, 0
        %v826 = vsel %vm490, %v386, 0
        %v828 = vsel %vm490, %v387, 0
        %v831 = vsel %vm551, %v392, 0
        %833 = vmatprep.subr.mxu0 0.0
        %834 = vmatpush1.msra.mxu0 0.0
        %835 = vmatprep.subr.mxu0 0.0
        %836 = vmatpush1.msra.mxu0 0.0
        %837 = vmatprep.subr.mxu0 0.0
        %838 = vmatpush1.msra.mxu0 0.0
        %839 = vmatprep.subr.mxu0 0.0
        %840 = vmatpush1.msra.mxu0 0.0
        %841 = vmatprep.subr.mxu0 0.0
        %842 = vmatpush1.msra.mxu0 0.0
        %843 = vmatprep.subr.mxu0 0.0
        %844 = vmatpush1.msra.mxu0 0.0
        %845 = vmatprep.subr.mxu0 0.0
        %846 = vmatpush1.msra.mxu0 0.0
        %847 = vmatprep.subr.mxu0 0.0
        %848 = vmatpush1.msra.mxu0 0.0
        %849 = vmatprep.subr.mxu0 0.0
        %850 = vmatpush1.msra.mxu0 0.0
        %851 = vmatprep.subr.mxu0 0.0
        %852 = vmatpush1.msra.mxu0 0.0
        %853 = vmatprep.subr.mxu0 0.0
        %854 = vmatpush1.msra.mxu0 0.0
        %855 = vmatprep.subr.mxu0 0.0
        %856 = vmatpush1.msra.mxu0 0.0
        %857 = vmatprep.subr.mxu0 0.0
        %858 = vmatpush1.msra.mxu0 %v831
        %859 = vmatprep.subr.mxu0 0.0
        %860 = vmatpush1.msra.mxu0 %v391
        %861 = vmatprep.subr.mxu0 0.0
        %862 = vmatpush1.msra.mxu0 %v390
        %863 = vmatprep.subr.mxu0 0.0
        %864 = vmatpush1.msra.mxu0 %v389
        %865 = vmatprep.subr.mxu0 0.0
        %866 = vmatpush2.msra.mxu0 0.0
        %867 = vmatprep.subr.mxu0 0.0
        %868 = vmatpush2.msra.mxu0 0.0
        %869 = vmatprep.subr.mxu0 0.0
        %870 = vmatpush2.msra.mxu0 0.0
        %871 = vmatprep.subr.mxu0 0.0
        %872 = vmatpush2.msra.mxu0 0.0
        %873 = vmatprep.subr.mxu0 0.0
        %874 = vmatpush2.msra.mxu0 0.0
        %875 = vmatprep.subr.mxu0 0.0
        %876 = vmatpush2.msra.mxu0 0.0
        %877 = vmatprep.subr.mxu0 0.0
        %878 = vmatpush2.msra.mxu0 0.0
        %879 = vmatprep.subr.mxu0 0.0
        %880 = vmatpush2.msra.mxu0 0.0
        %881 = vmatprep.subr.mxu0 0.0
        %882 = vmatpush2.msra.mxu0 0.0
        %883 = vmatprep.subr.mxu0 0.0
        %884 = vmatpush2.msra.mxu0 0.0
        %885 = vmatprep.subr.mxu0 0.0
        %886 = vmatpush2.msra.mxu0 0.0
        %887 = vmatprep.subr.mxu0 0.0
        %888 = vmatpush2.msra.mxu0 0.0
        %889 = vmatprep.subr.mxu0 0.0
        %890 = vmatpush2.msra.mxu0 0.0
        %891 = vmatprep.subr.mxu0 0.0
        %892 = vmatpush2.msra.mxu0 0.0
        %893 = vmatprep.subr.mxu0 0.0
        %894 = vmatpush2.msra.mxu0 0.0
        %895 = vmatprep.subr.mxu0 0.0
        %896 = vmatpush2.msra.mxu0 0.0
        %897 = vmatprep.mubr.f32.mxu0 0.0
        %898 = vmatmul.mubr.f32.gmra.mxu0 %v770
        %v899 = vpop.f32.mrf.mxu0
        %v900 = vadd.f32 %v622, %v899
        %v901 = vpop.f32.mrf.mxu0
        %902 = vmatprep.mubr.f32.mxu0 0.0
        %903 = vmatmul.mubr.f32.gmra.mxu0 %v772
        %v904 = vpop.f32.mrf.mxu0
        %v905 = vadd.f32 %v627, %v904
        %v906 = vpop.f32.mrf.mxu0
        %907 = vmatprep.mubr.f32.mxu0 0.0
        %908 = vmatmul.mubr.f32.gmra.mxu0 %v774
        %v909 = vpop.f32.mrf.mxu0
        %v910 = vadd.f32 %v632, %v909
        %v911 = vpop.f32.mrf.mxu0
        %912 = vmatprep.mubr.f32.mxu0 0.0
        %913 = vmatmul.mubr.f32.gmra.mxu0 %v776
        %v914 = vpop.f32.mrf.mxu0
        %v915 = vadd.f32 %v637, %v914
        %v916 = vpop.f32.mrf.mxu0
        %917 = vmatprep.mubr.f32.mxu0 0.0
        %918 = vmatmul.mubr.f32.gmra.mxu0 %v778
        %v919 = vpop.f32.mrf.mxu0
        %v920 = vadd.f32 %v642, %v919
        %v921 = vpop.f32.mrf.mxu0
        %922 = vmatprep.mubr.f32.mxu0 0.0
        %923 = vmatmul.mubr.f32.gmra.mxu0 %v780
        %v924 = vpop.f32.mrf.mxu0
        %v925 = vadd.f32 %v647, %v924
        %v926 = vpop.f32.mrf.mxu0
        %927 = vmatprep.mubr.f32.mxu0 0.0
        %928 = vmatmul.mubr.f32.gmra.mxu0 %v782
        %v929 = vpop.f32.mrf.mxu0
        %v930 = vadd.f32 %v652, %v929
        %v931 = vpop.f32.mrf.mxu0
        %932 = vmatprep.mubr.f32.mxu0 0.0
        %933 = vmatmul.mubr.f32.gmra.mxu0 %v784
        %v934 = vpop.f32.mrf.mxu0
        %v935 = vadd.f32 %v657, %v934
        %v936 = vpop.f32.mrf.mxu0
        %937 = vmatprep.mubr.f32.mxu0 0.0
        %938 = vmatmul.mubr.f32.gmra.mxu0 %v786
        %v939 = vpop.f32.mrf.mxu0
        %v940 = vadd.f32 %v662, %v939
        %v941 = vpop.f32.mrf.mxu0
        %942 = vmatprep.mubr.f32.mxu0 0.0
        %943 = vmatmul.mubr.f32.gmra.mxu0 %v788
        %v944 = vpop.f32.mrf.mxu0
        %v945 = vadd.f32 %v667, %v944
        %v946 = vpop.f32.mrf.mxu0
        %947 = vmatprep.mubr.f32.mxu0 0.0
        %948 = vmatmul.mubr.f32.gmra.mxu0 %v790
        %v949 = vpop.f32.mrf.mxu0
        %v950 = vadd.f32 %v672, %v949
        %v951 = vpop.f32.mrf.mxu0
        %952 = vmatprep.mubr.f32.mxu0 0.0
        %953 = vmatmul.mubr.f32.gmra.mxu0 %v792
        %v954 = vpop.f32.mrf.mxu0
        %v955 = vadd.f32 %v677, %v954
        %v956 = vpop.f32.mrf.mxu0
        %957 = vmatprep.mubr.f32.mxu0 0.0
        %958 = vmatmul.mubr.f32.gmra.mxu0 %v794
        %v959 = vpop.f32.mrf.mxu0
        %v960 = vadd.f32 %v682, %v959
        %v961 = vpop.f32.mrf.mxu0
        %962 = vmatprep.mubr.f32.mxu0 0.0
        %963 = vmatmul.mubr.f32.gmra.mxu0 %v796
        %v964 = vpop.f32.mrf.mxu0
        %v965 = vadd.f32 %v687, %v964
        %v966 = vpop.f32.mrf.mxu0
        %967 = vmatprep.mubr.f32.mxu0 0.0
        %968 = vmatmul.mubr.f32.gmra.mxu0 %v798
        %v969 = vpop.f32.mrf.mxu0
        %v970 = vadd.f32 %v692, %v969
        %v971 = vpop.f32.mrf.mxu0
        %972 = vmatprep.mubr.f32.mxu0 0.0
        %973 = vmatmul.mubr.f32.gmra.mxu0 %v800
        %v974 = vpop.f32.mrf.mxu0
        %v975 = vadd.f32 %v697, %v974
        %v976 = vpop.f32.mrf.mxu0
        %977 = vmatprep.mubr.f32.mxu0 0.0
        %978 = vmatmul.mubr.f32.gmra.mxu0 %v802
        %v979 = vpop.f32.mrf.mxu0
        %v980 = vadd.f32 %v702, %v979
        %v981 = vpop.f32.mrf.mxu0
        %982 = vmatprep.mubr.f32.mxu0 0.0
        %983 = vmatmul.mubr.f32.gmra.mxu0 %v804
        %v984 = vpop.f32.mrf.mxu0
        %v985 = vadd.f32 %v707, %v984
        %v986 = vpop.f32.mrf.mxu0
        %987 = vmatprep.mubr.f32.mxu0 0.0
        %988 = vmatmul.mubr.f32.gmra.mxu0 %v806
        %v989 = vpop.f32.mrf.mxu0
        %v990 = vadd.f32 %v712, %v989
        %v991 = vpop.f32.mrf.mxu0
        %992 = vmatprep.mubr.f32.mxu0 0.0
        %993 = vmatmul.mubr.f32.gmra.mxu0 %v808
        %v994 = vpop.f32.mrf.mxu0
        %v995 = vadd.f32 %v717, %v994
        %v996 = vpop.f32.mrf.mxu0
        %997 = vmatprep.mubr.f32.mxu0 0.0
        %998 = vmatmul.mubr.f32.gmra.mxu0 %v810
        %v999 = vpop.f32.mrf.mxu0
        %v1000 = vadd.f32 %v722, %v999
        %v1001 = vpop.f32.mrf.mxu0
        %1002 = vmatprep.mubr.f32.mxu0 0.0
        %1003 = vmatmul.mubr.f32.gmra.mxu0 %v812
        %v1004 = vpop.f32.mrf.mxu0
        %v1005 = vadd.f32 %v727, %v1004
        %v1006 = vpop.f32.mrf.mxu0
        %1007 = vmatprep.mubr.f32.mxu0 0.0
        %1008 = vmatmul.mubr.f32.gmra.mxu0 %v814
        %v1009 = vpop.f32.mrf.mxu0
        %v1010 = vadd.f32 %v732, %v1009
        %v1011 = vpop.f32.mrf.mxu0
        %1012 = vmatprep.mubr.f32.mxu0 0.0
        %1013 = vmatmul.mubr.f32.gmra.mxu0 %v816
        %v1014 = vpop.f32.mrf.mxu0
        %v1015 = vadd.f32 %v737, %v1014
        %v1016 = vpop.f32.mrf.mxu0
        %1017 = vmatprep.mubr.f32.mxu0 0.0
        %1018 = vmatmul.mubr.f32.gmra.mxu0 %v818
        %v1019 = vpop.f32.mrf.mxu0
        %v1020 = vadd.f32 %v742, %v1019
        %v1021 = vpop.f32.mrf.mxu0
        %1022 = vmatprep.mubr.f32.mxu0 0.0
        %1023 = vmatmul.mubr.f32.gmra.mxu0 %v820
        %v1024 = vpop.f32.mrf.mxu0
        %v1025 = vadd.f32 %v747, %v1024
        %v1026 = vpop.f32.mrf.mxu0
        %1027 = vmatprep.mubr.f32.mxu0 0.0
        %1028 = vmatmul.mubr.f32.gmra.mxu0 %v822
        %v1029 = vpop.f32.mrf.mxu0
        %v1030 = vadd.f32 %v752, %v1029
        %v1031 = vpop.f32.mrf.mxu0
        %1032 = vmatprep.mubr.f32.mxu0 0.0
        %1033 = vmatmul.mubr.f32.gmra.mxu0 %v824
        %v1034 = vpop.f32.mrf.mxu0
        %v1035 = vadd.f32 %v757, %v1034
        %v1036 = vpop.f32.mrf.mxu0
        %1037 = vmatprep.mubr.f32.mxu0 0.0
        %1038 = vmatmul.mubr.f32.gmra.mxu0 %v826
        %v1039 = vpop.f32.mrf.mxu0
        %v1040 = vadd.f32 %v762, %v1039
        %v1041 = vpop.f32.mrf.mxu0
        %1042 = vmatprep.mubr.f32.mxu0 0.0
        %1043 = vmatmul.mubr.f32.gmra.mxu0 %v828
        %v1044 = vpop.f32.mrf.mxu0
        %v1045 = vadd.f32 %v767, %v1044
        %v1046 = vpop.f32.mrf.mxu0
        %1047 = vdwg.mxu0
        %v1048 = vld [vmem:[%s3] sm:$0x1]
        %v1050 = vlaneseq
        %v1051 = vshrl.u32 %v1050, 7
        %v1052 = vsub.s32 0, %v1051
        %v1053 = vrot.slane %v1048, %v1052
        %v1055 = vadd.f32 %v900, %v1053
        %v1056 = vadd.f32 %v905, %v1053
        %v1057 = vadd.f32 %v910, %v1053
        %v1058 = vadd.f32 %v915, %v1053
        %v1059 = vadd.f32 %v920, %v1053
        %v1060 = vadd.f32 %v925, %v1053
        %v1061 = vadd.f32 %v930, %v1053
        %v1062 = vadd.f32 %v935, %v1053
        %v1063 = vadd.f32 %v940, %v1053
        %v1064 = vadd.f32 %v945, %v1053
        %v1065 = vadd.f32 %v950, %v1053
        %v1066 = vadd.f32 %v955, %v1053
        %v1067 = vadd.f32 %v960, %v1053
        %v1068 = vadd.f32 %v965, %v1053
        %v1069 = vadd.f32 %v970, %v1053
        %v1070 = vadd.f32 %v975, %v1053
        %v1071 = vadd.f32 %v980, %v1053
        %v1072 = vadd.f32 %v985, %v1053
        %v1073 = vadd.f32 %v990, %v1053
        %v1074 = vadd.f32 %v995, %v1053
        %v1075 = vadd.f32 %v1000, %v1053
        %v1076 = vadd.f32 %v1005, %v1053
        %v1077 = vadd.f32 %v1010, %v1053
        %v1078 = vadd.f32 %v1015, %v1053
        %v1079 = vadd.f32 %v1020, %v1053
        %v1080 = vadd.f32 %v1025, %v1053
        %v1081 = vadd.f32 %v1030, %v1053
        %v1082 = vadd.f32 %v1035, %v1053
        %v1083 = vadd.f32 %v1040, %v1053
        %v1084 = vadd.f32 %v1045, %v1053
        %v1085 = vmul.f32 %v1055, 0.3
        %v1086 = vmul.f32 %v1056, 0.3
        %v1087 = vmul.f32 %v1057, 0.3
        %v1088 = vmul.f32 %v1058, 0.3
        %v1089 = vmul.f32 %v1059, 0.3
        %v1090 = vmul.f32 %v1060, 0.3
        %v1091 = vmul.f32 %v1061, 0.3
        %v1092 = vmul.f32 %v1062, 0.3
        %v1093 = vmul.f32 %v1063, 0.3
        %v1094 = vmul.f32 %v1064, 0.3
        %v1095 = vmul.f32 %v1065, 0.3
        %v1096 = vmul.f32 %v1066, 0.3
        %v1097 = vmul.f32 %v1067, 0.3
        %v1098 = vmul.f32 %v1068, 0.3
        %v1099 = vmul.f32 %v1069, 0.3
        %v1100 = vmul.f32 %v1070, 0.3
        %v1101 = vmul.f32 %v1071, 0.3
        %v1102 = vmul.f32 %v1072, 0.3
        %v1103 = vmul.f32 %v1073, 0.3
        %v1104 = vmul.f32 %v1074, 0.3
        %v1105 = vmul.f32 %v1075, 0.3
        %v1106 = vmul.f32 %v1076, 0.3
        %v1107 = vmul.f32 %v1077, 0.3
        %v1108 = vmul.f32 %v1078, 0.3
        %v1109 = vmul.f32 %v1079, 0.3
        %v1110 = vmul.f32 %v1080, 0.3
        %v1111 = vmul.f32 %v1081, 0.3
        %v1112 = vmul.f32 %v1082, 0.3
        %v1113 = vmul.f32 %v1083, 0.3
        %v1114 = vmul.f32 %v1084, 0.3
        %v1115 = vmax.f32 %v1055, %v1085
        %v1116 = vmax.f32 %v1056, %v1086
        %v1117 = vmax.f32 %v1057, %v1087
        %v1118 = vmax.f32 %v1058, %v1088
        %v1119 = vmax.f32 %v1059, %v1089
        %v1120 = vmax.f32 %v1060, %v1090
        %v1121 = vmax.f32 %v1061, %v1091
        %v1122 = vmax.f32 %v1062, %v1092
        %v1123 = vmax.f32 %v1063, %v1093
        %v1124 = vmax.f32 %v1064, %v1094
        %v1125 = vmax.f32 %v1065, %v1095
        %v1126 = vmax.f32 %v1066, %v1096
        %v1127 = vmax.f32 %v1067, %v1097
        %v1128 = vmax.f32 %v1068, %v1098
        %v1129 = vmax.f32 %v1069, %v1099
        %v1130 = vmax.f32 %v1070, %v1100
        %v1131 = vmax.f32 %v1071, %v1101
        %v1132 = vmax.f32 %v1072, %v1102
        %v1133 = vmax.f32 %v1073, %v1103
        %v1134 = vmax.f32 %v1074, %v1104
        %v1135 = vmax.f32 %v1075, %v1105
        %v1136 = vmax.f32 %v1076, %v1106
        %v1137 = vmax.f32 %v1077, %v1107
        %v1138 = vmax.f32 %v1078, %v1108
        %v1139 = vmax.f32 %v1079, %v1109
        %v1140 = vmax.f32 %v1080, %v1110
        %v1141 = vmax.f32 %v1081, %v1111
        %v1142 = vmax.f32 %v1082, %v1112
        %v1143 = vmax.f32 %v1083, %v1113
        %v1144 = vmax.f32 %v1084, %v1114
        %vm1145 = vcmask 785408
        %1146 = vst.msk [vmem:[#allocation2] sm:$0xff] %vm1145, %v1115
        %1147 = vst.msk [vmem:[#allocation2 + $0x8] sm:$0xff] %vm1145, %v1116
        %1148 = vst.msk [vmem:[#allocation2 + $0x10] sm:$0xff] %vm1145, %v1117
        %1149 = vst.msk [vmem:[#allocation2 + $0x18] sm:$0xff] %vm1145, %v1118
        %1150 = vst.msk [vmem:[#allocation2 + $0x20] sm:$0xff] %vm1145, %v1119
        %1151 = vst.msk [vmem:[#allocation2 + $0x28] sm:$0xff] %vm1145, %v1120
        %1152 = vst.msk [vmem:[#allocation2 + $0x30] sm:$0xff] %vm1145, %v1121
        %1153 = vst.msk [vmem:[#allocation2 + $0x38] sm:$0xff] %vm1145, %v1122
        %1154 = vst.msk [vmem:[#allocation2 + $0x40] sm:$0xff] %vm1145, %v1123
        %1155 = vst.msk [vmem:[#allocation2 + $0x48] sm:$0xff] %vm1145, %v1124
        %1156 = vst.msk [vmem:[#allocation2 + $0x50] sm:$0xff] %vm1145, %v1125
        %1157 = vst.msk [vmem:[#allocation2 + $0x58] sm:$0xff] %vm1145, %v1126
        %1158 = vst.msk [vmem:[#allocation2 + $0x60] sm:$0xff] %vm1145, %v1127
        %1159 = vst.msk [vmem:[#allocation2 + $0x68] sm:$0xff] %vm1145, %v1128
        %1160 = vst.msk [vmem:[#allocation2 + $0x70] sm:$0xff] %vm1145, %v1129
        %1161 = vst.msk [vmem:[#allocation2 + $0x78] sm:$0xff] %vm1145, %v1130
        %1162 = vst.msk [vmem:[#allocation2 + $0x80] sm:$0xff] %vm1145, %v1131
        %1163 = vst.msk [vmem:[#allocation2 + $0x88] sm:$0xff] %vm1145, %v1132
        %1164 = vst.msk [vmem:[#allocation2 + $0x90] sm:$0xff] %vm1145, %v1133
        %1165 = vst.msk [vmem:[#allocation2 + $0x98] sm:$0xff] %vm1145, %v1134
        %1166 = vst.msk [vmem:[#allocation2 + $0xa0] sm:$0xff] %vm1145, %v1135
        %1167 = vst.msk [vmem:[#allocation2 + $0xa8] sm:$0xff] %vm1145, %v1136
        %1168 = vst.msk [vmem:[#allocation2 + $0xb0] sm:$0xff] %vm1145, %v1137
        %1169 = vst.msk [vmem:[#allocation2 + $0xb8] sm:$0xff] %vm1145, %v1138
        %1170 = vst.msk [vmem:[#allocation2 + $0xc0] sm:$0xff] %vm1145, %v1139
        %1171 = vst.msk [vmem:[#allocation2 + $0xc8] sm:$0xff] %vm1145, %v1140
        %1172 = vst.msk [vmem:[#allocation2 + $0xd0] sm:$0xff] %vm1145, %v1141
        %1173 = vst.msk [vmem:[#allocation2 + $0xd8] sm:$0xff] %vm1145, %v1142
        %1174 = vst.msk [vmem:[#allocation2 + $0xe0] sm:$0xff] %vm1145, %v1143
        %1175 = vst.msk [vmem:[#allocation2 + $0xe8] sm:$0xff] %vm1145, %v1144
        %v1176 = vld [vmem:[#allocation2] sm:$0xff]
        %v1177 = vld [vmem:[#allocation2 + $0x8] sm:$0xff]
        %v1178 = vld [vmem:[#allocation2 + $0x10] sm:$0xff]
        %v1179 = vld [vmem:[#allocation2 + $0x18] sm:$0xff]
        %v1180 = vld [vmem:[#allocation2 + $0x20] sm:$0xff]
        %v1181 = vld [vmem:[#allocation2 + $0x28] sm:$0xff]
        %v1182 = vld [vmem:[#allocation2 + $0x30] sm:$0xff]
        %v1183 = vld [vmem:[#allocation2 + $0x38] sm:$0xff]
        %v1184 = vld [vmem:[#allocation2 + $0x40] sm:$0xff]
        %v1185 = vld [vmem:[#allocation2 + $0x48] sm:$0xff]
        %v1186 = vld [vmem:[#allocation2 + $0x50] sm:$0xff]
        %v1187 = vld [vmem:[#allocation2 + $0x58] sm:$0xff]
        %v1188 = vld [vmem:[#allocation2 + $0x60] sm:$0xff]
        %v1189 = vld [vmem:[#allocation2 + $0x68] sm:$0xff]
        %v1190 = vld [vmem:[#allocation2 + $0x70] sm:$0xff]
        %v1191 = vld [vmem:[#allocation2 + $0x78] sm:$0xff]
        %v1192 = vld [vmem:[#allocation2 + $0x80] sm:$0xff]
        %v1193 = vld [vmem:[#allocation2 + $0x88] sm:$0xff]
        %v1194 = vld [vmem:[#allocation2 + $0x90] sm:$0xff]
        %v1195 = vld [vmem:[#allocation2 + $0x98] sm:$0xff]
        %v1196 = vld [vmem:[#allocation2 + $0xa0] sm:$0xff]
        %v1197 = vld [vmem:[#allocation2 + $0xa8] sm:$0xff]
        %v1198 = vld [vmem:[#allocation2 + $0xb0] sm:$0xff]
        %v1199 = vld [vmem:[#allocation2 + $0xb8] sm:$0xff]
        %v1200 = vld [vmem:[#allocation2 + $0xc0] sm:$0xff]
        %v1201 = vld [vmem:[#allocation2 + $0xc8] sm:$0xff]
        %v1202 = vld [vmem:[#allocation2 + $0xd0] sm:$0xff]
        %v1203 = vld [vmem:[#allocation2 + $0xd8] sm:$0xff]
        %v1204 = vld [vmem:[#allocation2 + $0xe0] sm:$0xff]
        %v1205 = vld [vmem:[#allocation2 + $0xe8] sm:$0x3f]
        %v1206 = vld [vmem:[%s4] sm:$0xff]
        %v1207 = vld [vmem:[%s4 + $0x8] sm:$0xff]
        %v1208 = vld [vmem:[%s4 + $0x10] sm:$0xff]
        %v1209 = vld [vmem:[%s4 + $0x18] sm:$0xff]
        %v1210 = vld [vmem:[%s4 + $0x20] sm:$0xff]
        %v1211 = vld [vmem:[%s4 + $0x28] sm:$0xff]
        %v1212 = vld [vmem:[%s4 + $0x30] sm:$0xff]
        %v1213 = vld [vmem:[%s4 + $0x38] sm:$0xff]
        %v1214 = vld [vmem:[%s4 + $0x40] sm:$0xff]
        %v1215 = vld [vmem:[%s4 + $0x48] sm:$0xff]
        %v1216 = vld [vmem:[%s4 + $0x50] sm:$0xff]
        %v1217 = vld [vmem:[%s4 + $0x58] sm:$0xff]
        %v1218 = vld [vmem:[#allocation2 + $0x1] sm:$0xff]
        %v1219 = vld [vmem:[#allocation2 + $0x9] sm:$0xff]
        %v1220 = vld [vmem:[#allocation2 + $0x11] sm:$0xff]
        %v1221 = vld [vmem:[#allocation2 + $0x19] sm:$0xff]
        %v1222 = vld [vmem:[#allocation2 + $0x21] sm:$0xff]
        %v1223 = vld [vmem:[#allocation2 + $0x29] sm:$0xff]
        %v1224 = vld [vmem:[#allocation2 + $0x31] sm:$0xff]
        %v1225 = vld [vmem:[#allocation2 + $0x39] sm:$0xff]
        %v1226 = vld [vmem:[#allocation2 + $0x41] sm:$0xff]
        %v1227 = vld [vmem:[#allocation2 + $0x49] sm:$0xff]
        %v1228 = vld [vmem:[#allocation2 + $0x51] sm:$0xff]
        %v1229 = vld [vmem:[#allocation2 + $0x59] sm:$0xff]
        %v1230 = vld [vmem:[#allocation2 + $0x61] sm:$0xff]
        %v1231 = vld [vmem:[#allocation2 + $0x69] sm:$0xff]
        %v1232 = vld [vmem:[#allocation2 + $0x71] sm:$0xff]
        %v1233 = vld [vmem:[#allocation2 + $0x79] sm:$0xff]
        %v1234 = vld [vmem:[#allocation2 + $0x81] sm:$0xff]
        %v1235 = vld [vmem:[#allocation2 + $0x89] sm:$0xff]
        %v1236 = vld [vmem:[#allocation2 + $0x91] sm:$0xff]
        %v1237 = vld [vmem:[#allocation2 + $0x99] sm:$0xff]
        %v1238 = vld [vmem:[#allocation2 + $0xa1] sm:$0xff]
        %v1239 = vld [vmem:[#allocation2 + $0xa9] sm:$0xff]
        %v1240 = vld [vmem:[#allocation2 + $0xb1] sm:$0xff]
        %v1241 = vld [vmem:[#allocation2 + $0xb9] sm:$0xff]
        %v1242 = vld [vmem:[#allocation2 + $0xc1] sm:$0xff]
        %v1243 = vld [vmem:[#allocation2 + $0xc9] sm:$0xff]
        %v1244 = vld [vmem:[#allocation2 + $0xd1] sm:$0xff]
        %v1245 = vld [vmem:[#allocation2 + $0xd9] sm:$0xff]
        %v1246 = vld [vmem:[#allocation2 + $0xe1] sm:$0xff]
        %v1247 = vld [vmem:[#allocation2 + $0xe9] sm:$0x3f]
        %s1248 = scalar_lea.vmem %s4, 96
        %v1249 = vld [vmem:[%s1248] sm:$0xff]
        %v1250 = vld [vmem:[%s1248 + $0x8] sm:$0xff]
        %v1251 = vld [vmem:[%s1248 + $0x10] sm:$0xff]
        %v1252 = vld [vmem:[%s1248 + $0x18] sm:$0xff]
        %v1253 = vld [vmem:[%s1248 + $0x20] sm:$0xff]
        %v1254 = vld [vmem:[%s1248 + $0x28] sm:$0xff]
        %v1255 = vld [vmem:[%s1248 + $0x30] sm:$0xff]
        %v1256 = vld [vmem:[%s1248 + $0x38] sm:$0xff]
        %v1257 = vld [vmem:[%s1248 + $0x40] sm:$0xff]
        %v1258 = vld [vmem:[%s1248 + $0x48] sm:$0xff]
        %v1259 = vld [vmem:[%s1248 + $0x50] sm:$0xff]
        %v1260 = vld [vmem:[%s1248 + $0x58] sm:$0xff]
        %v1262 = vsel %vm1145, %v1218, 0
        %v1265 = vsel %vm1145, %v1219, 0
        %v1268 = vsel %vm1145, %v1220, 0
        %v1271 = vsel %vm1145, %v1221, 0
        %v1274 = vsel %vm1145, %v1222, 0
        %v1277 = vsel %vm1145, %v1223, 0
        %v1280 = vsel %vm1145, %v1224, 0
        %v1283 = vsel %vm1145, %v1225, 0
        %v1286 = vsel %vm1145, %v1226, 0
        %v1289 = vsel %vm1145, %v1227, 0
        %v1292 = vsel %vm1145, %v1228, 0
        %v1295 = vsel %vm1145, %v1229, 0
        %v1298 = vsel %vm1145, %v1230, 0
        %v1301 = vsel %vm1145, %v1231, 0
        %v1304 = vsel %vm1145, %v1232, 0
        %v1307 = vsel %vm1145, %v1233, 0
        %v1310 = vsel %vm1145, %v1234, 0
        %v1313 = vsel %vm1145, %v1235, 0
        %v1316 = vsel %vm1145, %v1236, 0
        %v1319 = vsel %vm1145, %v1237, 0
        %v1322 = vsel %vm1145, %v1238, 0
        %v1325 = vsel %vm1145, %v1239, 0
        %v1328 = vsel %vm1145, %v1240, 0
        %v1331 = vsel %vm1145, %v1241, 0
        %v1334 = vsel %vm1145, %v1242, 0
        %v1337 = vsel %vm1145, %v1243, 0
        %v1340 = vsel %vm1145, %v1244, 0
        %v1343 = vsel %vm1145, %v1245, 0
        %v1346 = vsel %vm1145, %v1246, 0
        %v1349 = vsel %vm1145, %v1247, 0
        %1351 = vmatprep.subr.mxu0 0.0
        %1352 = vmatpush1.msra.mxu0 0.0
        %1353 = vmatprep.subr.mxu0 0.0
        %1354 = vmatpush1.msra.mxu0 0.0
        %1355 = vmatprep.subr.mxu0 0.0
        %1356 = vmatpush1.msra.mxu0 0.0
        %1357 = vmatprep.subr.mxu0 0.0
        %1358 = vmatpush1.msra.mxu0 0.0
        %1359 = vmatprep.subr.mxu0 0.0
        %1360 = vmatpush1.msra.mxu0 %v1260
        %1361 = vmatprep.subr.mxu0 0.0
        %1362 = vmatpush1.msra.mxu0 %v1259
        %1363 = vmatprep.subr.mxu0 0.0
        %1364 = vmatpush1.msra.mxu0 %v1258
        %1365 = vmatprep.subr.mxu0 0.0
        %1366 = vmatpush1.msra.mxu0 %v1257
        %1367 = vmatprep.subr.mxu0 0.0
        %1368 = vmatpush1.msra.mxu0 %v1256
        %1369 = vmatprep.subr.mxu0 0.0
        %1370 = vmatpush1.msra.mxu0 %v1255
        %1371 = vmatprep.subr.mxu0 0.0
        %1372 = vmatpush1.msra.mxu0 %v1254
        %1373 = vmatprep.subr.mxu0 0.0
        %1374 = vmatpush1.msra.mxu0 %v1253
        %1375 = vmatprep.subr.mxu0 0.0
        %1376 = vmatpush1.msra.mxu0 %v1252
        %1377 = vmatprep.subr.mxu0 0.0
        %1378 = vmatpush1.msra.mxu0 %v1251
        %1379 = vmatprep.subr.mxu0 0.0
        %1380 = vmatpush1.msra.mxu0 %v1250
        %1381 = vmatprep.subr.mxu0 0.0
        %1382 = vmatpush1.msra.mxu0 %v1249
        %1383 = vmatprep.subr.mxu0 0.0
        %1384 = vmatpush2.msra.mxu0 0.0
        %1385 = vmatprep.subr.mxu0 0.0
        %1386 = vmatpush2.msra.mxu0 0.0
        %1387 = vmatprep.subr.mxu0 0.0
        %1388 = vmatpush2.msra.mxu0 0.0
        %1389 = vmatprep.subr.mxu0 0.0
        %1390 = vmatpush2.msra.mxu0 0.0
        %1391 = vmatprep.subr.mxu0 0.0
        %1392 = vmatpush2.msra.mxu0 0.0
        %1393 = vmatprep.subr.mxu0 0.0
        %1394 = vmatpush2.msra.mxu0 0.0
        %1395 = vmatprep.subr.mxu0 0.0
        %1396 = vmatpush2.msra.mxu0 0.0
        %1397 = vmatprep.subr.mxu0 0.0
        %1398 = vmatpush2.msra.mxu0 0.0
        %1399 = vmatprep.subr.mxu0 0.0
        %1400 = vmatpush2.msra.mxu0 0.0
        %1401 = vmatprep.subr.mxu0 0.0
        %1402 = vmatpush2.msra.mxu0 0.0
        %1403 = vmatprep.subr.mxu0 0.0
        %1404 = vmatpush2.msra.mxu0 0.0
        %1405 = vmatprep.subr.mxu0 0.0
        %1406 = vmatpush2.msra.mxu0 0.0
        %1407 = vmatprep.subr.mxu0 0.0
        %1408 = vmatpush2.msra.mxu0 0.0
        %1409 = vmatprep.subr.mxu0 0.0
        %1410 = vmatpush2.msra.mxu0 0.0
        %1411 = vmatprep.subr.mxu0 0.0
        %1412 = vmatpush2.msra.mxu0 0.0
        %1413 = vmatprep.subr.mxu0 0.0
        %1414 = vmatpush2.msra.mxu0 0.0
        %1415 = vmatprep.mubr.f32.mxu0 0.0
        %1416 = vmatmul.mubr.f32.gmra.mxu0 %v1262
        %v1417 = vpop.f32.mrf.mxu0
        %v1418 = vadd.f32 0.0, %v1417
        %v1419 = vpop.f32.mrf.mxu0
        %1420 = vmatprep.mubr.f32.mxu0 0.0
        %1421 = vmatmul.mubr.f32.gmra.mxu0 %v1265
        %v1422 = vpop.f32.mrf.mxu0
        %v1423 = vadd.f32 0.0, %v1422
        %v1424 = vpop.f32.mrf.mxu0
        %1425 = vmatprep.mubr.f32.mxu0 0.0
        %1426 = vmatmul.mubr.f32.gmra.mxu0 %v1268
        %v1427 = vpop.f32.mrf.mxu0
        %v1428 = vadd.f32 0.0, %v1427
        %v1429 = vpop.f32.mrf.mxu0
        %1430 = vmatprep.mubr.f32.mxu0 0.0
        %1431 = vmatmul.mubr.f32.gmra.mxu0 %v1271
        %v1432 = vpop.f32.mrf.mxu0
        %v1433 = vadd.f32 0.0, %v1432
        %v1434 = vpop.f32.mrf.mxu0
        %1435 = vmatprep.mubr.f32.mxu0 0.0
        %1436 = vmatmul.mubr.f32.gmra.mxu0 %v1274
        %v1437 = vpop.f32.mrf.mxu0
        %v1438 = vadd.f32 0.0, %v1437
        %v1439 = vpop.f32.mrf.mxu0
        %1440 = vmatprep.mubr.f32.mxu0 0.0
        %1441 = vmatmul.mubr.f32.gmra.mxu0 %v1277
        %v1442 = vpop.f32.mrf.mxu0
        %v1443 = vadd.f32 0.0, %v1442
        %v1444 = vpop.f32.mrf.mxu0
        %1445 = vmatprep.mubr.f32.mxu0 0.0
        %1446 = vmatmul.mubr.f32.gmra.mxu0 %v1280
        %v1447 = vpop.f32.mrf.mxu0
        %v1448 = vadd.f32 0.0, %v1447
        %v1449 = vpop.f32.mrf.mxu0
        %1450 = vmatprep.mubr.f32.mxu0 0.0
        %1451 = vmatmul.mubr.f32.gmra.mxu0 %v1283
        %v1452 = vpop.f32.mrf.mxu0
        %v1453 = vadd.f32 0.0, %v1452
        %v1454 = vpop.f32.mrf.mxu0
        %1455 = vmatprep.mubr.f32.mxu0 0.0
        %1456 = vmatmul.mubr.f32.gmra.mxu0 %v1286
        %v1457 = vpop.f32.mrf.mxu0
        %v1458 = vadd.f32 0.0, %v1457
        %v1459 = vpop.f32.mrf.mxu0
        %1460 = vmatprep.mubr.f32.mxu0 0.0
        %1461 = vmatmul.mubr.f32.gmra.mxu0 %v1289
        %v1462 = vpop.f32.mrf.mxu0
        %v1463 = vadd.f32 0.0, %v1462
        %v1464 = vpop.f32.mrf.mxu0
        %1465 = vmatprep.mubr.f32.mxu0 0.0
        %1466 = vmatmul.mubr.f32.gmra.mxu0 %v1292
        %v1467 = vpop.f32.mrf.mxu0
        %v1468 = vadd.f32 0.0, %v1467
        %v1469 = vpop.f32.mrf.mxu0
        %1470 = vmatprep.mubr.f32.mxu0 0.0
        %1471 = vmatmul.mubr.f32.gmra.mxu0 %v1295
        %v1472 = vpop.f32.mrf.mxu0
        %v1473 = vadd.f32 0.0, %v1472
        %v1474 = vpop.f32.mrf.mxu0
        %1475 = vmatprep.mubr.f32.mxu0 0.0
        %1476 = vmatmul.mubr.f32.gmra.mxu0 %v1298
        %v1477 = vpop.f32.mrf.mxu0
        %v1478 = vadd.f32 0.0, %v1477
        %v1479 = vpop.f32.mrf.mxu0
        %1480 = vmatprep.mubr.f32.mxu0 0.0
        %1481 = vmatmul.mubr.f32.gmra.mxu0 %v1301
        %v1482 = vpop.f32.mrf.mxu0
        %v1483 = vadd.f32 0.0, %v1482
        %v1484 = vpop.f32.mrf.mxu0
        %1485 = vmatprep.mubr.f32.mxu0 0.0
        %1486 = vmatmul.mubr.f32.gmra.mxu0 %v1304
        %v1487 = vpop.f32.mrf.mxu0
        %v1488 = vadd.f32 0.0, %v1487
        %v1489 = vpop.f32.mrf.mxu0
        %1490 = vmatprep.mubr.f32.mxu0 0.0
        %1491 = vmatmul.mubr.f32.gmra.mxu0 %v1307
        %v1492 = vpop.f32.mrf.mxu0
        %v1493 = vadd.f32 0.0, %v1492
        %v1494 = vpop.f32.mrf.mxu0
        %1495 = vmatprep.mubr.f32.mxu0 0.0
        %1496 = vmatmul.mubr.f32.gmra.mxu0 %v1310
        %v1497 = vpop.f32.mrf.mxu0
        %v1498 = vadd.f32 0.0, %v1497
        %v1499 = vpop.f32.mrf.mxu0
        %1500 = vmatprep.mubr.f32.mxu0 0.0
        %1501 = vmatmul.mubr.f32.gmra.mxu0 %v1313
        %v1502 = vpop.f32.mrf.mxu0
        %v1503 = vadd.f32 0.0, %v1502
        %v1504 = vpop.f32.mrf.mxu0
        %1505 = vmatprep.mubr.f32.mxu0 0.0
        %1506 = vmatmul.mubr.f32.gmra.mxu0 %v1316
        %v1507 = vpop.f32.mrf.mxu0
        %v1508 = vadd.f32 0.0, %v1507
        %v1509 = vpop.f32.mrf.mxu0
        %1510 = vmatprep.mubr.f32.mxu0 0.0
        %1511 = vmatmul.mubr.f32.gmra.mxu0 %v1319
        %v1512 = vpop.f32.mrf.mxu0
        %v1513 = vadd.f32 0.0, %v1512
        %v1514 = vpop.f32.mrf.mxu0
        %1515 = vmatprep.mubr.f32.mxu0 0.0
        %1516 = vmatmul.mubr.f32.gmra.mxu0 %v1322
        %v1517 = vpop.f32.mrf.mxu0
        %v1518 = vadd.f32 0.0, %v1517
        %v1519 = vpop.f32.mrf.mxu0
        %1520 = vmatprep.mubr.f32.mxu0 0.0
        %1521 = vmatmul.mubr.f32.gmra.mxu0 %v1325
        %v1522 = vpop.f32.mrf.mxu0
        %v1523 = vadd.f32 0.0, %v1522
        %v1524 = vpop.f32.mrf.mxu0
        %1525 = vmatprep.mubr.f32.mxu0 0.0
        %1526 = vmatmul.mubr.f32.gmra.mxu0 %v1328
        %v1527 = vpop.f32.mrf.mxu0
        %v1528 = vadd.f32 0.0, %v1527
        %v1529 = vpop.f32.mrf.mxu0
        %1530 = vmatprep.mubr.f32.mxu0 0.0
        %1531 = vmatmul.mubr.f32.gmra.mxu0 %v1331
        %v1532 = vpop.f32.mrf.mxu0
        %v1533 = vadd.f32 0.0, %v1532
        %v1534 = vpop.f32.mrf.mxu0
        %1535 = vmatprep.mubr.f32.mxu0 0.0
        %1536 = vmatmul.mubr.f32.gmra.mxu0 %v1334
        %v1537 = vpop.f32.mrf.mxu0
        %v1538 = vadd.f32 0.0, %v1537
        %v1539 = vpop.f32.mrf.mxu0
        %1540 = vmatprep.mubr.f32.mxu0 0.0
        %1541 = vmatmul.mubr.f32.gmra.mxu0 %v1337
        %v1542 = vpop.f32.mrf.mxu0
        %v1543 = vadd.f32 0.0, %v1542
        %v1544 = vpop.f32.mrf.mxu0
        %1545 = vmatprep.mubr.f32.mxu0 0.0
        %1546 = vmatmul.mubr.f32.gmra.mxu0 %v1340
        %v1547 = vpop.f32.mrf.mxu0
        %v1548 = vadd.f32 0.0, %v1547
        %v1549 = vpop.f32.mrf.mxu0
        %1550 = vmatprep.mubr.f32.mxu0 0.0
        %1551 = vmatmul.mubr.f32.gmra.mxu0 %v1343
        %v1552 = vpop.f32.mrf.mxu0
        %v1553 = vadd.f32 0.0, %v1552
        %v1554 = vpop.f32.mrf.mxu0
        %1555 = vmatprep.mubr.f32.mxu0 0.0
        %1556 = vmatmul.mubr.f32.gmra.mxu0 %v1346
        %v1557 = vpop.f32.mrf.mxu0
        %v1558 = vadd.f32 0.0, %v1557
        %v1559 = vpop.f32.mrf.mxu0
        %1560 = vmatprep.mubr.f32.mxu0 0.0
        %1561 = vmatmul.mubr.f32.gmra.mxu0 %v1349
        %v1562 = vpop.f32.mrf.mxu0
        %v1563 = vadd.f32 0.0, %v1562
        %v1564 = vpop.f32.mrf.mxu0
        %1565 = vdwg.mxu0
        %v1567 = vsel %vm1145, %v1176, 0
        %v1570 = vsel %vm1145, %v1177, 0
        %v1573 = vsel %vm1145, %v1178, 0
        %v1576 = vsel %vm1145, %v1179, 0
        %v1579 = vsel %vm1145, %v1180, 0
        %v1582 = vsel %vm1145, %v1181, 0
        %v1585 = vsel %vm1145, %v1182, 0
        %v1588 = vsel %vm1145, %v1183, 0
        %v1591 = vsel %vm1145, %v1184, 0
        %v1594 = vsel %vm1145, %v1185, 0
        %v1597 = vsel %vm1145, %v1186, 0
        %v1600 = vsel %vm1145, %v1187, 0
        %v1603 = vsel %vm1145, %v1188, 0
        %v1606 = vsel %vm1145, %v1189, 0
        %v1609 = vsel %vm1145, %v1190, 0
        %v1612 = vsel %vm1145, %v1191, 0
        %v1615 = vsel %vm1145, %v1192, 0
        %v1618 = vsel %vm1145, %v1193, 0
        %v1621 = vsel %vm1145, %v1194, 0
        %v1624 = vsel %vm1145, %v1195, 0
        %v1627 = vsel %vm1145, %v1196, 0
        %v1630 = vsel %vm1145, %v1197, 0
        %v1633 = vsel %vm1145, %v1198, 0
        %v1636 = vsel %vm1145, %v1199, 0
        %v1639 = vsel %vm1145, %v1200, 0
        %v1642 = vsel %vm1145, %v1201, 0
        %v1645 = vsel %vm1145, %v1202, 0
        %v1648 = vsel %vm1145, %v1203, 0
        %v1651 = vsel %vm1145, %v1204, 0
        %v1654 = vsel %vm1145, %v1205, 0
        %1656 = vmatprep.subr.mxu0 0.0
        %1657 = vmatpush1.msra.mxu0 0.0
        %1658 = vmatprep.subr.mxu0 0.0
        %1659 = vmatpush1.msra.mxu0 0.0
        %1660 = vmatprep.subr.mxu0 0.0
        %1661 = vmatpush1.msra.mxu0 0.0
        %1662 = vmatprep.subr.mxu0 0.0
        %1663 = vmatpush1.msra.mxu0 0.0
        %1664 = vmatprep.subr.mxu0 0.0
        %1665 = vmatpush1.msra.mxu0 %v1217
        %1666 = vmatprep.subr.mxu0 0.0
        %1667 = vmatpush1.msra.mxu0 %v1216
        %1668 = vmatprep.subr.mxu0 0.0
        %1669 = vmatpush1.msra.mxu0 %v1215
        %1670 = vmatprep.subr.mxu0 0.0
        %1671 = vmatpush1.msra.mxu0 %v1214
        %1672 = vmatprep.subr.mxu0 0.0
        %1673 = vmatpush1.msra.mxu0 %v1213
        %1674 = vmatprep.subr.mxu0 0.0
        %1675 = vmatpush1.msra.mxu0 %v1212
        %1676 = vmatprep.subr.mxu0 0.0
        %1677 = vmatpush1.msra.mxu0 %v1211
        %1678 = vmatprep.subr.mxu0 0.0
        %1679 = vmatpush1.msra.mxu0 %v1210
        %1680 = vmatprep.subr.mxu0 0.0
        %1681 = vmatpush1.msra.mxu0 %v1209
        %1682 = vmatprep.subr.mxu0 0.0
        %1683 = vmatpush1.msra.mxu0 %v1208
        %1684 = vmatprep.subr.mxu0 0.0
        %1685 = vmatpush1.msra.mxu0 %v1207
        %1686 = vmatprep.subr.mxu0 0.0
        %1687 = vmatpush1.msra.mxu0 %v1206
        %1688 = vmatprep.subr.mxu0 0.0
        %1689 = vmatpush2.msra.mxu0 0.0
        %1690 = vmatprep.subr.mxu0 0.0
        %1691 = vmatpush2.msra.mxu0 0.0
        %1692 = vmatprep.subr.mxu0 0.0
        %1693 = vmatpush2.msra.mxu0 0.0
        %1694 = vmatprep.subr.mxu0 0.0
        %1695 = vmatpush2.msra.mxu0 0.0
        %1696 = vmatprep.subr.mxu0 0.0
        %1697 = vmatpush2.msra.mxu0 0.0
        %1698 = vmatprep.subr.mxu0 0.0
        %1699 = vmatpush2.msra.mxu0 0.0
        %1700 = vmatprep.subr.mxu0 0.0
        %1701 = vmatpush2.msra.mxu0 0.0
        %1702 = vmatprep.subr.mxu0 0.0
        %1703 = vmatpush2.msra.mxu0 0.0
        %1704 = vmatprep.subr.mxu0 0.0
        %1705 = vmatpush2.msra.mxu0 0.0
        %1706 = vmatprep.subr.mxu0 0.0
        %1707 = vmatpush2.msra.mxu0 0.0
        %1708 = vmatprep.subr.mxu0 0.0
        %1709 = vmatpush2.msra.mxu0 0.0
        %1710 = vmatprep.subr.mxu0 0.0
        %1711 = vmatpush2.msra.mxu0 0.0
        %1712 = vmatprep.subr.mxu0 0.0
        %1713 = vmatpush2.msra.mxu0 0.0
        %1714 = vmatprep.subr.mxu0 0.0
        %1715 = vmatpush2.msra.mxu0 0.0
        %1716 = vmatprep.subr.mxu0 0.0
        %1717 = vmatpush2.msra.mxu0 0.0
        %1718 = vmatprep.subr.mxu0 0.0
        %1719 = vmatpush2.msra.mxu0 0.0
        %1720 = vmatprep.mubr.f32.mxu0 0.0
        %1721 = vmatmul.mubr.f32.gmra.mxu0 %v1567
        %v1722 = vpop.f32.mrf.mxu0
        %v1723 = vadd.f32 %v1418, %v1722
        %v1724 = vpop.f32.mrf.mxu0
        %1725 = vmatprep.mubr.f32.mxu0 0.0
        %1726 = vmatmul.mubr.f32.gmra.mxu0 %v1570
        %v1727 = vpop.f32.mrf.mxu0
        %v1728 = vadd.f32 %v1423, %v1727
        %v1729 = vpop.f32.mrf.mxu0
        %1730 = vmatprep.mubr.f32.mxu0 0.0
        %1731 = vmatmul.mubr.f32.gmra.mxu0 %v1573
        %v1732 = vpop.f32.mrf.mxu0
        %v1733 = vadd.f32 %v1428, %v1732
        %v1734 = vpop.f32.mrf.mxu0
        %1735 = vmatprep.mubr.f32.mxu0 0.0
        %1736 = vmatmul.mubr.f32.gmra.mxu0 %v1576
        %v1737 = vpop.f32.mrf.mxu0
        %v1738 = vadd.f32 %v1433, %v1737
        %v1739 = vpop.f32.mrf.mxu0
        %1740 = vmatprep.mubr.f32.mxu0 0.0
        %1741 = vmatmul.mubr.f32.gmra.mxu0 %v1579
        %v1742 = vpop.f32.mrf.mxu0
        %v1743 = vadd.f32 %v1438, %v1742
        %v1744 = vpop.f32.mrf.mxu0
        %1745 = vmatprep.mubr.f32.mxu0 0.0
        %1746 = vmatmul.mubr.f32.gmra.mxu0 %v1582
        %v1747 = vpop.f32.mrf.mxu0
        %v1748 = vadd.f32 %v1443, %v1747
        %v1749 = vpop.f32.mrf.mxu0
        %1750 = vmatprep.mubr.f32.mxu0 0.0
        %1751 = vmatmul.mubr.f32.gmra.mxu0 %v1585
        %v1752 = vpop.f32.mrf.mxu0
        %v1753 = vadd.f32 %v1448, %v1752
        %v1754 = vpop.f32.mrf.mxu0
        %1755 = vmatprep.mubr.f32.mxu0 0.0
        %1756 = vmatmul.mubr.f32.gmra.mxu0 %v1588
        %v1757 = vpop.f32.mrf.mxu0
        %v1758 = vadd.f32 %v1453, %v1757
        %v1759 = vpop.f32.mrf.mxu0
        %1760 = vmatprep.mubr.f32.mxu0 0.0
        %1761 = vmatmul.mubr.f32.gmra.mxu0 %v1591
        %v1762 = vpop.f32.mrf.mxu0
        %v1763 = vadd.f32 %v1458, %v1762
        %v1764 = vpop.f32.mrf.mxu0
        %1765 = vmatprep.mubr.f32.mxu0 0.0
        %1766 = vmatmul.mubr.f32.gmra.mxu0 %v1594
        %v1767 = vpop.f32.mrf.mxu0
        %v1768 = vadd.f32 %v1463, %v1767
        %v1769 = vpop.f32.mrf.mxu0
        %1770 = vmatprep.mubr.f32.mxu0 0.0
        %1771 = vmatmul.mubr.f32.gmra.mxu0 %v1597
        %v1772 = vpop.f32.mrf.mxu0
        %v1773 = vadd.f32 %v1468, %v1772
        %v1774 = vpop.f32.mrf.mxu0
        %1775 = vmatprep.mubr.f32.mxu0 0.0
        %1776 = vmatmul.mubr.f32.gmra.mxu0 %v1600
        %v1777 = vpop.f32.mrf.mxu0
        %v1778 = vadd.f32 %v1473, %v1777
        %v1779 = vpop.f32.mrf.mxu0
        %1780 = vmatprep.mubr.f32.mxu0 0.0
        %1781 = vmatmul.mubr.f32.gmra.mxu0 %v1603
        %v1782 = vpop.f32.mrf.mxu0
        %v1783 = vadd.f32 %v1478, %v1782
        %v1784 = vpop.f32.mrf.mxu0
        %1785 = vmatprep.mubr.f32.mxu0 0.0
        %1786 = vmatmul.mubr.f32.gmra.mxu0 %v1606
        %v1787 = vpop.f32.mrf.mxu0
        %v1788 = vadd.f32 %v1483, %v1787
        %v1789 = vpop.f32.mrf.mxu0
        %1790 = vmatprep.mubr.f32.mxu0 0.0
        %1791 = vmatmul.mubr.f32.gmra.mxu0 %v1609
        %v1792 = vpop.f32.mrf.mxu0
        %v1793 = vadd.f32 %v1488, %v1792
        %v1794 = vpop.f32.mrf.mxu0
        %1795 = vmatprep.mubr.f32.mxu0 0.0
        %1796 = vmatmul.mubr.f32.gmra.mxu0 %v1612
        %v1797 = vpop.f32.mrf.mxu0
        %v1798 = vadd.f32 %v1493, %v1797
        %v1799 = vpop.f32.mrf.mxu0
        %1800 = vmatprep.mubr.f32.mxu0 0.0
        %1801 = vmatmul.mubr.f32.gmra.mxu0 %v1615
        %v1802 = vpop.f32.mrf.mxu0
        %v1803 = vadd.f32 %v1498, %v1802
        %v1804 = vpop.f32.mrf.mxu0
        %1805 = vmatprep.mubr.f32.mxu0 0.0
        %1806 = vmatmul.mubr.f32.gmra.mxu0 %v1618
        %v1807 = vpop.f32.mrf.mxu0
        %v1808 = vadd.f32 %v1503, %v1807
        %v1809 = vpop.f32.mrf.mxu0
        %1810 = vmatprep.mubr.f32.mxu0 0.0
        %1811 = vmatmul.mubr.f32.gmra.mxu0 %v1621
        %v1812 = vpop.f32.mrf.mxu0
        %v1813 = vadd.f32 %v1508, %v1812
        %v1814 = vpop.f32.mrf.mxu0
        %1815 = vmatprep.mubr.f32.mxu0 0.0
        %1816 = vmatmul.mubr.f32.gmra.mxu0 %v1624
        %v1817 = vpop.f32.mrf.mxu0
        %v1818 = vadd.f32 %v1513, %v1817
        %v1819 = vpop.f32.mrf.mxu0
        %1820 = vmatprep.mubr.f32.mxu0 0.0
        %1821 = vmatmul.mubr.f32.gmra.mxu0 %v1627
        %v1822 = vpop.f32.mrf.mxu0
        %v1823 = vadd.f32 %v1518, %v1822
        %v1824 = vpop.f32.mrf.mxu0
        %1825 = vmatprep.mubr.f32.mxu0 0.0
        %1826 = vmatmul.mubr.f32.gmra.mxu0 %v1630
        %v1827 = vpop.f32.mrf.mxu0
        %v1828 = vadd.f32 %v1523, %v1827
        %v1829 = vpop.f32.mrf.mxu0
        %1830 = vmatprep.mubr.f32.mxu0 0.0
        %1831 = vmatmul.mubr.f32.gmra.mxu0 %v1633
        %v1832 = vpop.f32.mrf.mxu0
        %v1833 = vadd.f32 %v1528, %v1832
        %v1834 = vpop.f32.mrf.mxu0
        %1835 = vmatprep.mubr.f32.mxu0 0.0
        %1836 = vmatmul.mubr.f32.gmra.mxu0 %v1636
        %v1837 = vpop.f32.mrf.mxu0
        %v1838 = vadd.f32 %v1533, %v1837
        %v1839 = vpop.f32.mrf.mxu0
        %1840 = vmatprep.mubr.f32.mxu0 0.0
        %1841 = vmatmul.mubr.f32.gmra.mxu0 %v1639
        %v1842 = vpop.f32.mrf.mxu0
        %v1843 = vadd.f32 %v1538, %v1842
        %v1844 = vpop.f32.mrf.mxu0
        %1845 = vmatprep.mubr.f32.mxu0 0.0
        %1846 = vmatmul.mubr.f32.gmra.mxu0 %v1642
        %v1847 = vpop.f32.mrf.mxu0
        %v1848 = vadd.f32 %v1543, %v1847
        %v1849 = vpop.f32.mrf.mxu0
        %1850 = vmatprep.mubr.f32.mxu0 0.0
        %1851 = vmatmul.mubr.f32.gmra.mxu0 %v1645
        %v1852 = vpop.f32.mrf.mxu0
        %v1853 = vadd.f32 %v1548, %v1852
        %v1854 = vpop.f32.mrf.mxu0
        %1855 = vmatprep.mubr.f32.mxu0 0.0
        %1856 = vmatmul.mubr.f32.gmra.mxu0 %v1648
        %v1857 = vpop.f32.mrf.mxu0
        %v1858 = vadd.f32 %v1553, %v1857
        %v1859 = vpop.f32.mrf.mxu0
        %1860 = vmatprep.mubr.f32.mxu0 0.0
        %1861 = vmatmul.mubr.f32.gmra.mxu0 %v1651
        %v1862 = vpop.f32.mrf.mxu0
        %v1863 = vadd.f32 %v1558, %v1862
        %v1864 = vpop.f32.mrf.mxu0
        %1865 = vmatprep.mubr.f32.mxu0 0.0
        %1866 = vmatmul.mubr.f32.gmra.mxu0 %v1654
        %v1867 = vpop.f32.mrf.mxu0
        %v1868 = vadd.f32 %v1563, %v1867
        %v1869 = vpop.f32.mrf.mxu0
        %1870 = vdwg.mxu0
        %v1871 = vld [vmem:[#allocation2 + $0x2] sm:$0xff]
        %v1872 = vld [vmem:[#allocation2 + $0xa] sm:$0xff]
        %v1873 = vld [vmem:[#allocation2 + $0x12] sm:$0xff]
        %v1874 = vld [vmem:[#allocation2 + $0x1a] sm:$0xff]
        %v1875 = vld [vmem:[#allocation2 + $0x22] sm:$0xff]
        %v1876 = vld [vmem:[#allocation2 + $0x2a] sm:$0xff]
        %v1877 = vld [vmem:[#allocation2 + $0x32] sm:$0xff]
        %v1878 = vld [vmem:[#allocation2 + $0x3a] sm:$0xff]
        %v1879 = vld [vmem:[#allocation2 + $0x42] sm:$0xff]
        %v1880 = vld [vmem:[#allocation2 + $0x4a] sm:$0xff]
        %v1881 = vld [vmem:[#allocation2 + $0x52] sm:$0xff]
        %v1882 = vld [vmem:[#allocation2 + $0x5a] sm:$0xff]
        %v1883 = vld [vmem:[#allocation2 + $0x62] sm:$0xff]
        %v1884 = vld [vmem:[#allocation2 + $0x6a] sm:$0xff]
        %v1885 = vld [vmem:[#allocation2 + $0x72] sm:$0xff]
        %v1886 = vld [vmem:[#allocation2 + $0x7a] sm:$0xff]
        %v1887 = vld [vmem:[#allocation2 + $0x82] sm:$0xff]
        %v1888 = vld [vmem:[#allocation2 + $0x8a] sm:$0xff]
        %v1889 = vld [vmem:[#allocation2 + $0x92] sm:$0xff]
        %v1890 = vld [vmem:[#allocation2 + $0x9a] sm:$0xff]
        %v1891 = vld [vmem:[#allocation2 + $0xa2] sm:$0xff]
        %v1892 = vld [vmem:[#allocation2 + $0xaa] sm:$0xff]
        %v1893 = vld [vmem:[#allocation2 + $0xb2] sm:$0xff]
        %v1894 = vld [vmem:[#allocation2 + $0xba] sm:$0xff]
        %v1895 = vld [vmem:[#allocation2 + $0xc2] sm:$0xff]
        %v1896 = vld [vmem:[#allocation2 + $0xca] sm:$0xff]
        %v1897 = vld [vmem:[#allocation2 + $0xd2] sm:$0xff]
        %v1898 = vld [vmem:[#allocation2 + $0xda] sm:$0xff]
        %v1899 = vld [vmem:[#allocation2 + $0xe2] sm:$0xff]
        %v1900 = vld [vmem:[#allocation2 + $0xea] sm:$0x3f]
        %s1901 = scalar_lea.vmem %s4, 192
        %v1902 = vld [vmem:[%s1901] sm:$0xff]
        %v1903 = vld [vmem:[%s1901 + $0x8] sm:$0xff]
        %v1904 = vld [vmem:[%s1901 + $0x10] sm:$0xff]
        %v1905 = vld [vmem:[%s1901 + $0x18] sm:$0xff]
        %v1906 = vld [vmem:[%s1901 + $0x20] sm:$0xff]
        %v1907 = vld [vmem:[%s1901 + $0x28] sm:$0xff]
        %v1908 = vld [vmem:[%s1901 + $0x30] sm:$0xff]
        %v1909 = vld [vmem:[%s1901 + $0x38] sm:$0xff]
        %v1910 = vld [vmem:[%s1901 + $0x40] sm:$0xff]
        %v1911 = vld [vmem:[%s1901 + $0x48] sm:$0xff]
        %v1912 = vld [vmem:[%s1901 + $0x50] sm:$0xff]
        %v1913 = vld [vmem:[%s1901 + $0x58] sm:$0xff]
        %v1915 = vsel %vm1145, %v1871, 0
        %v1918 = vsel %vm1145, %v1872, 0
        %v1921 = vsel %vm1145, %v1873, 0
        %v1924 = vsel %vm1145, %v1874, 0
        %v1927 = vsel %vm1145, %v1875, 0
        %v1930 = vsel %vm1145, %v1876, 0
        %v1933 = vsel %vm1145, %v1877, 0
        %v1936 = vsel %vm1145, %v1878, 0
        %v1939 = vsel %vm1145, %v1879, 0
        %v1942 = vsel %vm1145, %v1880, 0
        %v1945 = vsel %vm1145, %v1881, 0
        %v1948 = vsel %vm1145, %v1882, 0
        %v1951 = vsel %vm1145, %v1883, 0
        %v1954 = vsel %vm1145, %v1884, 0
        %v1957 = vsel %vm1145, %v1885, 0
        %v1960 = vsel %vm1145, %v1886, 0
        %v1963 = vsel %vm1145, %v1887, 0
        %v1966 = vsel %vm1145, %v1888, 0
        %v1969 = vsel %vm1145, %v1889, 0
        %v1972 = vsel %vm1145, %v1890, 0
        %v1975 = vsel %vm1145, %v1891, 0
        %v1978 = vsel %vm1145, %v1892, 0
        %v1981 = vsel %vm1145, %v1893, 0
        %v1984 = vsel %vm1145, %v1894, 0
        %v1987 = vsel %vm1145, %v1895, 0
        %v1990 = vsel %vm1145, %v1896, 0
        %v1993 = vsel %vm1145, %v1897, 0
        %v1996 = vsel %vm1145, %v1898, 0
        %v1999 = vsel %vm1145, %v1899, 0
        %v2002 = vsel %vm1145, %v1900, 0
        %2004 = vmatprep.subr.mxu0 0.0
        %2005 = vmatpush1.msra.mxu0 0.0
        %2006 = vmatprep.subr.mxu0 0.0
        %2007 = vmatpush1.msra.mxu0 0.0
        %2008 = vmatprep.subr.mxu0 0.0
        %2009 = vmatpush1.msra.mxu0 0.0
        %2010 = vmatprep.subr.mxu0 0.0
        %2011 = vmatpush1.msra.mxu0 0.0
        %2012 = vmatprep.subr.mxu0 0.0
        %2013 = vmatpush1.msra.mxu0 %v1913
        %2014 = vmatprep.subr.mxu0 0.0
        %2015 = vmatpush1.msra.mxu0 %v1912
        %2016 = vmatprep.subr.mxu0 0.0
        %2017 = vmatpush1.msra.mxu0 %v1911
        %2018 = vmatprep.subr.mxu0 0.0
        %2019 = vmatpush1.msra.mxu0 %v1910
        %2020 = vmatprep.subr.mxu0 0.0
        %2021 = vmatpush1.msra.mxu0 %v1909
        %2022 = vmatprep.subr.mxu0 0.0
        %2023 = vmatpush1.msra.mxu0 %v1908
        %2024 = vmatprep.subr.mxu0 0.0
        %2025 = vmatpush1.msra.mxu0 %v1907
        %2026 = vmatprep.subr.mxu0 0.0
        %2027 = vmatpush1.msra.mxu0 %v1906
        %2028 = vmatprep.subr.mxu0 0.0
        %2029 = vmatpush1.msra.mxu0 %v1905
        %2030 = vmatprep.subr.mxu0 0.0
        %2031 = vmatpush1.msra.mxu0 %v1904
        %2032 = vmatprep.subr.mxu0 0.0
        %2033 = vmatpush1.msra.mxu0 %v1903
        %2034 = vmatprep.subr.mxu0 0.0
        %2035 = vmatpush1.msra.mxu0 %v1902
        %2036 = vmatprep.subr.mxu0 0.0
        %2037 = vmatpush2.msra.mxu0 0.0
        %2038 = vmatprep.subr.mxu0 0.0
        %2039 = vmatpush2.msra.mxu0 0.0
        %2040 = vmatprep.subr.mxu0 0.0
        %2041 = vmatpush2.msra.mxu0 0.0
        %2042 = vmatprep.subr.mxu0 0.0
        %2043 = vmatpush2.msra.mxu0 0.0
        %2044 = vmatprep.subr.mxu0 0.0
        %2045 = vmatpush2.msra.mxu0 0.0
        %2046 = vmatprep.subr.mxu0 0.0
        %2047 = vmatpush2.msra.mxu0 0.0
        %2048 = vmatprep.subr.mxu0 0.0
        %2049 = vmatpush2.msra.mxu0 0.0
        %2050 = vmatprep.subr.mxu0 0.0
        %2051 = vmatpush2.msra.mxu0 0.0
        %2052 = vmatprep.subr.mxu0 0.0
        %2053 = vmatpush2.msra.mxu0 0.0
        %2054 = vmatprep.subr.mxu0 0.0
        %2055 = vmatpush2.msra.mxu0 0.0
        %2056 = vmatprep.subr.mxu0 0.0
        %2057 = vmatpush2.msra.mxu0 0.0
        %2058 = vmatprep.subr.mxu0 0.0
        %2059 = vmatpush2.msra.mxu0 0.0
        %2060 = vmatprep.subr.mxu0 0.0
        %2061 = vmatpush2.msra.mxu0 0.0
        %2062 = vmatprep.subr.mxu0 0.0
        %2063 = vmatpush2.msra.mxu0 0.0
        %2064 = vmatprep.subr.mxu0 0.0
        %2065 = vmatpush2.msra.mxu0 0.0
        %2066 = vmatprep.subr.mxu0 0.0
        %2067 = vmatpush2.msra.mxu0 0.0
        %2068 = vmatprep.mubr.f32.mxu0 0.0
        %2069 = vmatmul.mubr.f32.gmra.mxu0 %v1915
        %v2070 = vpop.f32.mrf.mxu0
        %v2071 = vadd.f32 0.0, %v2070
        %v2072 = vpop.f32.mrf.mxu0
        %2073 = vmatprep.mubr.f32.mxu0 0.0
        %2074 = vmatmul.mubr.f32.gmra.mxu0 %v1918
        %v2075 = vpop.f32.mrf.mxu0
        %v2076 = vadd.f32 0.0, %v2075
        %v2077 = vpop.f32.mrf.mxu0
        %2078 = vmatprep.mubr.f32.mxu0 0.0
        %2079 = vmatmul.mubr.f32.gmra.mxu0 %v1921
        %v2080 = vpop.f32.mrf.mxu0
        %v2081 = vadd.f32 0.0, %v2080
        %v2082 = vpop.f32.mrf.mxu0
        %2083 = vmatprep.mubr.f32.mxu0 0.0
        %2084 = vmatmul.mubr.f32.gmra.mxu0 %v1924
        %v2085 = vpop.f32.mrf.mxu0
        %v2086 = vadd.f32 0.0, %v2085
        %v2087 = vpop.f32.mrf.mxu0
        %2088 = vmatprep.mubr.f32.mxu0 0.0
        %2089 = vmatmul.mubr.f32.gmra.mxu0 %v1927
        %v2090 = vpop.f32.mrf.mxu0
        %v2091 = vadd.f32 0.0, %v2090
        %v2092 = vpop.f32.mrf.mxu0
        %2093 = vmatprep.mubr.f32.mxu0 0.0
        %2094 = vmatmul.mubr.f32.gmra.mxu0 %v1930
        %v2095 = vpop.f32.mrf.mxu0
        %v2096 = vadd.f32 0.0, %v2095
        %v2097 = vpop.f32.mrf.mxu0
        %2098 = vmatprep.mubr.f32.mxu0 0.0
        %2099 = vmatmul.mubr.f32.gmra.mxu0 %v1933
        %v2100 = vpop.f32.mrf.mxu0
        %v2101 = vadd.f32 0.0, %v2100
        %v2102 = vpop.f32.mrf.mxu0
        %2103 = vmatprep.mubr.f32.mxu0 0.0
        %2104 = vmatmul.mubr.f32.gmra.mxu0 %v1936
        %v2105 = vpop.f32.mrf.mxu0
        %v2106 = vadd.f32 0.0, %v2105
        %v2107 = vpop.f32.mrf.mxu0
        %2108 = vmatprep.mubr.f32.mxu0 0.0
        %2109 = vmatmul.mubr.f32.gmra.mxu0 %v1939
        %v2110 = vpop.f32.mrf.mxu0
        %v2111 = vadd.f32 0.0, %v2110
        %v2112 = vpop.f32.mrf.mxu0
        %2113 = vmatprep.mubr.f32.mxu0 0.0
        %2114 = vmatmul.mubr.f32.gmra.mxu0 %v1942
        %v2115 = vpop.f32.mrf.mxu0
        %v2116 = vadd.f32 0.0, %v2115
        %v2117 = vpop.f32.mrf.mxu0
        %2118 = vmatprep.mubr.f32.mxu0 0.0
        %2119 = vmatmul.mubr.f32.gmra.mxu0 %v1945
        %v2120 = vpop.f32.mrf.mxu0
        %v2121 = vadd.f32 0.0, %v2120
        %v2122 = vpop.f32.mrf.mxu0
        %2123 = vmatprep.mubr.f32.mxu0 0.0
        %2124 = vmatmul.mubr.f32.gmra.mxu0 %v1948
        %v2125 = vpop.f32.mrf.mxu0
        %v2126 = vadd.f32 0.0, %v2125
        %v2127 = vpop.f32.mrf.mxu0
        %2128 = vmatprep.mubr.f32.mxu0 0.0
        %2129 = vmatmul.mubr.f32.gmra.mxu0 %v1951
        %v2130 = vpop.f32.mrf.mxu0
        %v2131 = vadd.f32 0.0, %v2130
        %v2132 = vpop.f32.mrf.mxu0
        %2133 = vmatprep.mubr.f32.mxu0 0.0
        %2134 = vmatmul.mubr.f32.gmra.mxu0 %v1954
        %v2135 = vpop.f32.mrf.mxu0
        %v2136 = vadd.f32 0.0, %v2135
        %v2137 = vpop.f32.mrf.mxu0
        %2138 = vmatprep.mubr.f32.mxu0 0.0
        %2139 = vmatmul.mubr.f32.gmra.mxu0 %v1957
        %v2140 = vpop.f32.mrf.mxu0
        %v2141 = vadd.f32 0.0, %v2140
        %v2142 = vpop.f32.mrf.mxu0
        %2143 = vmatprep.mubr.f32.mxu0 0.0
        %2144 = vmatmul.mubr.f32.gmra.mxu0 %v1960
        %v2145 = vpop.f32.mrf.mxu0
        %v2146 = vadd.f32 0.0, %v2145
        %v2147 = vpop.f32.mrf.mxu0
        %2148 = vmatprep.mubr.f32.mxu0 0.0
        %2149 = vmatmul.mubr.f32.gmra.mxu0 %v1963
        %v2150 = vpop.f32.mrf.mxu0
        %v2151 = vadd.f32 0.0, %v2150
        %v2152 = vpop.f32.mrf.mxu0
        %2153 = vmatprep.mubr.f32.mxu0 0.0
        %2154 = vmatmul.mubr.f32.gmra.mxu0 %v1966
        %v2155 = vpop.f32.mrf.mxu0
        %v2156 = vadd.f32 0.0, %v2155
        %v2157 = vpop.f32.mrf.mxu0
        %2158 = vmatprep.mubr.f32.mxu0 0.0
        %2159 = vmatmul.mubr.f32.gmra.mxu0 %v1969
        %v2160 = vpop.f32.mrf.mxu0
        %v2161 = vadd.f32 0.0, %v2160
        %v2162 = vpop.f32.mrf.mxu0
        %2163 = vmatprep.mubr.f32.mxu0 0.0
        %2164 = vmatmul.mubr.f32.gmra.mxu0 %v1972
        %v2165 = vpop.f32.mrf.mxu0
        %v2166 = vadd.f32 0.0, %v2165
        %v2167 = vpop.f32.mrf.mxu0
        %2168 = vmatprep.mubr.f32.mxu0 0.0
        %2169 = vmatmul.mubr.f32.gmra.mxu0 %v1975
        %v2170 = vpop.f32.mrf.mxu0
        %v2171 = vadd.f32 0.0, %v2170
        %v2172 = vpop.f32.mrf.mxu0
        %2173 = vmatprep.mubr.f32.mxu0 0.0
        %2174 = vmatmul.mubr.f32.gmra.mxu0 %v1978
        %v2175 = vpop.f32.mrf.mxu0
        %v2176 = vadd.f32 0.0, %v2175
        %v2177 = vpop.f32.mrf.mxu0
        %2178 = vmatprep.mubr.f32.mxu0 0.0
        %2179 = vmatmul.mubr.f32.gmra.mxu0 %v1981
        %v2180 = vpop.f32.mrf.mxu0
        %v2181 = vadd.f32 0.0, %v2180
        %v2182 = vpop.f32.mrf.mxu0
        %2183 = vmatprep.mubr.f32.mxu0 0.0
        %2184 = vmatmul.mubr.f32.gmra.mxu0 %v1984
        %v2185 = vpop.f32.mrf.mxu0
        %v2186 = vadd.f32 0.0, %v2185
        %v2187 = vpop.f32.mrf.mxu0
        %2188 = vmatprep.mubr.f32.mxu0 0.0
        %2189 = vmatmul.mubr.f32.gmra.mxu0 %v1987
        %v2190 = vpop.f32.mrf.mxu0
        %v2191 = vadd.f32 0.0, %v2190
        %v2192 = vpop.f32.mrf.mxu0
        %2193 = vmatprep.mubr.f32.mxu0 0.0
        %2194 = vmatmul.mubr.f32.gmra.mxu0 %v1990
        %v2195 = vpop.f32.mrf.mxu0
        %v2196 = vadd.f32 0.0, %v2195
        %v2197 = vpop.f32.mrf.mxu0
        %2198 = vmatprep.mubr.f32.mxu0 0.0
        %2199 = vmatmul.mubr.f32.gmra.mxu0 %v1993
        %v2200 = vpop.f32.mrf.mxu0
        %v2201 = vadd.f32 0.0, %v2200
        %v2202 = vpop.f32.mrf.mxu0
        %2203 = vmatprep.mubr.f32.mxu0 0.0
        %2204 = vmatmul.mubr.f32.gmra.mxu0 %v1996
        %v2205 = vpop.f32.mrf.mxu0
        %v2206 = vadd.f32 0.0, %v2205
        %v2207 = vpop.f32.mrf.mxu0
        %2208 = vmatprep.mubr.f32.mxu0 0.0
        %2209 = vmatmul.mubr.f32.gmra.mxu0 %v1999
        %v2210 = vpop.f32.mrf.mxu0
        %v2211 = vadd.f32 0.0, %v2210
        %v2212 = vpop.f32.mrf.mxu0
        %2213 = vmatprep.mubr.f32.mxu0 0.0
        %2214 = vmatmul.mubr.f32.gmra.mxu0 %v2002
        %v2215 = vpop.f32.mrf.mxu0
        %v2216 = vadd.f32 0.0, %v2215
        %v2217 = vpop.f32.mrf.mxu0
        %2218 = vdwg.mxu0
        %v2219 = vadd.f32 %v1723, %v2071
        %v2220 = vadd.f32 %v1728, %v2076
        %v2221 = vadd.f32 %v1733, %v2081
        %v2222 = vadd.f32 %v1738, %v2086
        %v2223 = vadd.f32 %v1743, %v2091
        %v2224 = vadd.f32 %v1748, %v2096
        %v2225 = vadd.f32 %v1753, %v2101
        %v2226 = vadd.f32 %v1758, %v2106
        %v2227 = vadd.f32 %v1763, %v2111
        %v2228 = vadd.f32 %v1768, %v2116
        %v2229 = vadd.f32 %v1773, %v2121
        %v2230 = vadd.f32 %v1778, %v2126
        %v2231 = vadd.f32 %v1783, %v2131
        %v2232 = vadd.f32 %v1788, %v2136
        %v2233 = vadd.f32 %v1793, %v2141
        %v2234 = vadd.f32 %v1798, %v2146
        %v2235 = vadd.f32 %v1803, %v2151
        %v2236 = vadd.f32 %v1808, %v2156
        %v2237 = vadd.f32 %v1813, %v2161
        %v2238 = vadd.f32 %v1818, %v2166
        %v2239 = vadd.f32 %v1823, %v2171
        %v2240 = vadd.f32 %v1828, %v2176
        %v2241 = vadd.f32 %v1833, %v2181
        %v2242 = vadd.f32 %v1838, %v2186
        %v2243 = vadd.f32 %v1843, %v2191
        %v2244 = vadd.f32 %v1848, %v2196
        %v2245 = vadd.f32 %v1853, %v2201
        %v2246 = vadd.f32 %v1858, %v2206
        %v2247 = vadd.f32 %v1863, %v2211
        %v2248 = vadd.f32 %v1868, %v2216
        %v2249 = vld [vmem:[%s5] sm:$0x1]
        %v2251 = vlaneseq
        %v2252 = vshrl.u32 %v2251, 7
        %v2253 = vsub.s32 0, %v2252
        %v2254 = vrot.slane %v2249, %v2253
        %v2256 = vadd.f32 %v2219, %v2254
        %v2257 = vadd.f32 %v2220, %v2254
        %v2258 = vadd.f32 %v2221, %v2254
        %v2259 = vadd.f32 %v2222, %v2254
        %v2260 = vadd.f32 %v2223, %v2254
        %v2261 = vadd.f32 %v2224, %v2254
        %v2262 = vadd.f32 %v2225, %v2254
        %v2263 = vadd.f32 %v2226, %v2254
        %v2264 = vadd.f32 %v2227, %v2254
        %v2265 = vadd.f32 %v2228, %v2254
        %v2266 = vadd.f32 %v2229, %v2254
        %v2267 = vadd.f32 %v2230, %v2254
        %v2268 = vadd.f32 %v2231, %v2254
        %v2269 = vadd.f32 %v2232, %v2254
        %v2270 = vadd.f32 %v2233, %v2254
        %v2271 = vadd.f32 %v2234, %v2254
        %v2272 = vadd.f32 %v2235, %v2254
        %v2273 = vadd.f32 %v2236, %v2254
        %v2274 = vadd.f32 %v2237, %v2254
        %v2275 = vadd.f32 %v2238, %v2254
        %v2276 = vadd.f32 %v2239, %v2254
        %v2277 = vadd.f32 %v2240, %v2254
        %v2278 = vadd.f32 %v2241, %v2254
        %v2279 = vadd.f32 %v2242, %v2254
        %v2280 = vadd.f32 %v2243, %v2254
        %v2281 = vadd.f32 %v2244, %v2254
        %v2282 = vadd.f32 %v2245, %v2254
        %v2283 = vadd.f32 %v2246, %v2254
        %v2284 = vadd.f32 %v2247, %v2254
        %v2285 = vadd.f32 %v2248, %v2254
        %v2286 = vmul.f32 %v2256, 0.3
        %v2287 = vmul.f32 %v2257, 0.3
        %v2288 = vmul.f32 %v2258, 0.3
        %v2289 = vmul.f32 %v2259, 0.3
        %v2290 = vmul.f32 %v2260, 0.3
        %v2291 = vmul.f32 %v2261, 0.3
        %v2292 = vmul.f32 %v2262, 0.3
        %v2293 = vmul.f32 %v2263, 0.3
        %v2294 = vmul.f32 %v2264, 0.3
        %v2295 = vmul.f32 %v2265, 0.3
        %v2296 = vmul.f32 %v2266, 0.3
        %v2297 = vmul.f32 %v2267, 0.3
        %v2298 = vmul.f32 %v2268, 0.3
        %v2299 = vmul.f32 %v2269, 0.3
        %v2300 = vmul.f32 %v2270, 0.3
        %v2301 = vmul.f32 %v2271, 0.3
        %v2302 = vmul.f32 %v2272, 0.3
        %v2303 = vmul.f32 %v2273, 0.3
        %v2304 = vmul.f32 %v2274, 0.3
        %v2305 = vmul.f32 %v2275, 0.3
        %v2306 = vmul.f32 %v2276, 0.3
        %v2307 = vmul.f32 %v2277, 0.3
        %v2308 = vmul.f32 %v2278, 0.3
        %v2309 = vmul.f32 %v2279, 0.3
        %v2310 = vmul.f32 %v2280, 0.3
        %v2311 = vmul.f32 %v2281, 0.3
        %v2312 = vmul.f32 %v2282, 0.3
        %v2313 = vmul.f32 %v2283, 0.3
        %v2314 = vmul.f32 %v2284, 0.3
        %v2315 = vmul.f32 %v2285, 0.3
        %v2316 = vmax.f32 %v2256, %v2286
        %v2317 = vmax.f32 %v2257, %v2287
        %v2318 = vmax.f32 %v2258, %v2288
        %v2319 = vmax.f32 %v2259, %v2289
        %v2320 = vmax.f32 %v2260, %v2290
        %v2321 = vmax.f32 %v2261, %v2291
        %v2322 = vmax.f32 %v2262, %v2292
        %v2323 = vmax.f32 %v2263, %v2293
        %v2324 = vmax.f32 %v2264, %v2294
        %v2325 = vmax.f32 %v2265, %v2295
        %v2326 = vmax.f32 %v2266, %v2296
        %v2327 = vmax.f32 %v2267, %v2297
        %v2328 = vmax.f32 %v2268, %v2298
        %v2329 = vmax.f32 %v2269, %v2299
        %v2330 = vmax.f32 %v2270, %v2300
        %v2331 = vmax.f32 %v2271, %v2301
        %v2332 = vmax.f32 %v2272, %v2302
        %v2333 = vmax.f32 %v2273, %v2303
        %v2334 = vmax.f32 %v2274, %v2304
        %v2335 = vmax.f32 %v2275, %v2305
        %v2336 = vmax.f32 %v2276, %v2306
        %v2337 = vmax.f32 %v2277, %v2307
        %v2338 = vmax.f32 %v2278, %v2308
        %v2339 = vmax.f32 %v2279, %v2309
        %v2340 = vmax.f32 %v2280, %v2310
        %v2341 = vmax.f32 %v2281, %v2311
        %v2342 = vmax.f32 %v2282, %v2312
        %v2343 = vmax.f32 %v2283, %v2313
        %v2344 = vmax.f32 %v2284, %v2314
        %v2345 = vmax.f32 %v2285, %v2315
        %vm2346 = vcmask 261120
        %2347 = vst.msk [vmem:[#allocation3] sm:$0xff] %vm2346, %v2316
        %2348 = vst.msk [vmem:[#allocation3 + $0x8] sm:$0xff] %vm2346, %v2317
        %2349 = vst.msk [vmem:[#allocation3 + $0x10] sm:$0xff] %vm2346, %v2318
        %2350 = vst.msk [vmem:[#allocation3 + $0x18] sm:$0xff] %vm2346, %v2319
        %2351 = vst.msk [vmem:[#allocation3 + $0x20] sm:$0xff] %vm2346, %v2320
        %2352 = vst.msk [vmem:[#allocation3 + $0x28] sm:$0xff] %vm2346, %v2321
        %2353 = vst.msk [vmem:[#allocation3 + $0x30] sm:$0xff] %vm2346, %v2322
        %2354 = vst.msk [vmem:[#allocation3 + $0x38] sm:$0xff] %vm2346, %v2323
        %2355 = vst.msk [vmem:[#allocation3 + $0x40] sm:$0xff] %vm2346, %v2324
        %2356 = vst.msk [vmem:[#allocation3 + $0x48] sm:$0xff] %vm2346, %v2325
        %2357 = vst.msk [vmem:[#allocation3 + $0x50] sm:$0xff] %vm2346, %v2326
        %2358 = vst.msk [vmem:[#allocation3 + $0x58] sm:$0xff] %vm2346, %v2327
        %2359 = vst.msk [vmem:[#allocation3 + $0x60] sm:$0xff] %vm2346, %v2328
        %2360 = vst.msk [vmem:[#allocation3 + $0x68] sm:$0xff] %vm2346, %v2329
        %2361 = vst.msk [vmem:[#allocation3 + $0x70] sm:$0xff] %vm2346, %v2330
        %2362 = vst.msk [vmem:[#allocation3 + $0x78] sm:$0xff] %vm2346, %v2331
        %2363 = vst.msk [vmem:[#allocation3 + $0x80] sm:$0xff] %vm2346, %v2332
        %2364 = vst.msk [vmem:[#allocation3 + $0x88] sm:$0xff] %vm2346, %v2333
        %2365 = vst.msk [vmem:[#allocation3 + $0x90] sm:$0xff] %vm2346, %v2334
        %2366 = vst.msk [vmem:[#allocation3 + $0x98] sm:$0xff] %vm2346, %v2335
        %2367 = vst.msk [vmem:[#allocation3 + $0xa0] sm:$0xff] %vm2346, %v2336
        %2368 = vst.msk [vmem:[#allocation3 + $0xa8] sm:$0xff] %vm2346, %v2337
        %2369 = vst.msk [vmem:[#allocation3 + $0xb0] sm:$0xff] %vm2346, %v2338
        %2370 = vst.msk [vmem:[#allocation3 + $0xb8] sm:$0xff] %vm2346, %v2339
        %2371 = vst.msk [vmem:[#allocation3 + $0xc0] sm:$0xff] %vm2346, %v2340
        %2372 = vst.msk [vmem:[#allocation3 + $0xc8] sm:$0xff] %vm2346, %v2341
        %2373 = vst.msk [vmem:[#allocation3 + $0xd0] sm:$0xff] %vm2346, %v2342
        %2374 = vst.msk [vmem:[#allocation3 + $0xd8] sm:$0xff] %vm2346, %v2343
        %2375 = vst.msk [vmem:[#allocation3 + $0xe0] sm:$0xff] %vm2346, %v2344
        %vm2376 = vcmask 259072
        %2377 = vst.msk [vmem:[#allocation3 + $0xe8] sm:$0x3f] %vm2376, %v2345
        %v2378 = vld [vmem:[#allocation3] ss:$6 sm:$0xff]
        %s2379 = scalar_lea.vmem [#allocation3], 48
        %v2380 = vld [vmem:[%s2379] ss:$6 sm:$0xff]
        %s2381 = scalar_lea.vmem [#allocation3], 96
        %v2382 = vld [vmem:[%s2381] ss:$6 sm:$0xff]
        %s2383 = scalar_lea.vmem [#allocation3], 144
        %v2384 = vld [vmem:[%s2383] ss:$6 sm:$0xff]
        %s2385 = scalar_lea.vmem [#allocation3], 192
        %v2386 = vld [vmem:[%s2385] ss:$6 sm:$0x3f]
        %v2387 = vld [vmem:[%s6] sm:$0xff]
        %v2388 = vld [vmem:[%s6 + $0x8] sm:$0xff]
        %v2389 = vld [vmem:[%s6 + $0x10] sm:$0xff]
        %v2390 = vld [vmem:[%s6 + $0x18] sm:$0xff]
        %s2391 = scalar_lea.vmem [#allocation3], 1
        %v2392 = vld [vmem:[%s2391] ss:$6 sm:$0xff]
        %s2393 = scalar_lea.vmem [#allocation3], 49
        %v2394 = vld [vmem:[%s2393] ss:$6 sm:$0xff]
        %s2395 = scalar_lea.vmem [#allocation3], 97
        %v2396 = vld [vmem:[%s2395] ss:$6 sm:$0xff]
        %s2397 = scalar_lea.vmem [#allocation3], 145
        %v2398 = vld [vmem:[%s2397] ss:$6 sm:$0xff]
        %s2399 = scalar_lea.vmem [#allocation3], 193
        %v2400 = vld [vmem:[%s2399] ss:$6 sm:$0x3f]
        %s2401 = scalar_lea.vmem %s6, 32
        %v2402 = vld [vmem:[%s2401] sm:$0xff]
        %v2403 = vld [vmem:[%s2401 + $0x8] sm:$0xff]
        %v2404 = vld [vmem:[%s2401 + $0x10] sm:$0xff]
        %v2405 = vld [vmem:[%s2401 + $0x18] sm:$0xff]
        %v2407 = vsel %vm2346, %v2392, 0
        %v2410 = vsel %vm2346, %v2394, 0
        %v2413 = vsel %vm2346, %v2396, 0
        %v2416 = vsel %vm2346, %v2398, 0
        %v2419 = vsel %vm2346, %v2400, 0
        %2421 = vmatprep.subr.mxu0 0.0
        %2422 = vmatpush1.msra.mxu0 0.0
        %2423 = vmatprep.subr.mxu0 0.0
        %2424 = vmatpush1.msra.mxu0 0.0
        %2425 = vmatprep.subr.mxu0 0.0
        %2426 = vmatpush1.msra.mxu0 0.0
        %2427 = vmatprep.subr.mxu0 0.0
        %2428 = vmatpush1.msra.mxu0 0.0
        %2429 = vmatprep.subr.mxu0 0.0
        %2430 = vmatpush1.msra.mxu0 0.0
        %2431 = vmatprep.subr.mxu0 0.0
        %2432 = vmatpush1.msra.mxu0 0.0
        %2433 = vmatprep.subr.mxu0 0.0
        %2434 = vmatpush1.msra.mxu0 0.0
        %2435 = vmatprep.subr.mxu0 0.0
        %2436 = vmatpush1.msra.mxu0 0.0
        %2437 = vmatprep.subr.mxu0 0.0
        %2438 = vmatpush1.msra.mxu0 0.0
        %2439 = vmatprep.subr.mxu0 0.0
        %2440 = vmatpush1.msra.mxu0 0.0
        %2441 = vmatprep.subr.mxu0 0.0
        %2442 = vmatpush1.msra.mxu0 0.0
        %2443 = vmatprep.subr.mxu0 0.0
        %2444 = vmatpush1.msra.mxu0 0.0
        %2445 = vmatprep.subr.mxu0 0.0
        %2446 = vmatpush1.msra.mxu0 %v2405
        %2447 = vmatprep.subr.mxu0 0.0
        %2448 = vmatpush1.msra.mxu0 %v2404
        %2449 = vmatprep.subr.mxu0 0.0
        %2450 = vmatpush1.msra.mxu0 %v2403
        %2451 = vmatprep.subr.mxu0 0.0
        %2452 = vmatpush1.msra.mxu0 %v2402
        %2453 = vmatprep.subr.mxu0 0.0
        %2454 = vmatpush2.msra.mxu0 0.0
        %2455 = vmatprep.subr.mxu0 0.0
        %2456 = vmatpush2.msra.mxu0 0.0
        %2457 = vmatprep.subr.mxu0 0.0
        %2458 = vmatpush2.msra.mxu0 0.0
        %2459 = vmatprep.subr.mxu0 0.0
        %2460 = vmatpush2.msra.mxu0 0.0
        %2461 = vmatprep.subr.mxu0 0.0
        %2462 = vmatpush2.msra.mxu0 0.0
        %2463 = vmatprep.subr.mxu0 0.0
        %2464 = vmatpush2.msra.mxu0 0.0
        %2465 = vmatprep.subr.mxu0 0.0
        %2466 = vmatpush2.msra.mxu0 0.0
        %2467 = vmatprep.subr.mxu0 0.0
        %2468 = vmatpush2.msra.mxu0 0.0
        %2469 = vmatprep.subr.mxu0 0.0
        %2470 = vmatpush2.msra.mxu0 0.0
        %2471 = vmatprep.subr.mxu0 0.0
        %2472 = vmatpush2.msra.mxu0 0.0
        %2473 = vmatprep.subr.mxu0 0.0
        %2474 = vmatpush2.msra.mxu0 0.0
        %2475 = vmatprep.subr.mxu0 0.0
        %2476 = vmatpush2.msra.mxu0 0.0
        %2477 = vmatprep.subr.mxu0 0.0
        %2478 = vmatpush2.msra.mxu0 0.0
        %2479 = vmatprep.subr.mxu0 0.0
        %2480 = vmatpush2.msra.mxu0 0.0
        %2481 = vmatprep.subr.mxu0 0.0
        %2482 = vmatpush2.msra.mxu0 0.0
        %2483 = vmatprep.subr.mxu0 0.0
        %2484 = vmatpush2.msra.mxu0 0.0
        %2485 = vmatprep.mubr.f32.mxu0 0.0
        %2486 = vmatmul.mubr.f32.gmra.mxu0 %v2407
        %v2487 = vpop.f32.mrf.mxu0
        %v2488 = vadd.f32 0.0, %v2487
        %v2489 = vpop.f32.mrf.mxu0
        %2490 = vmatprep.mubr.f32.mxu0 0.0
        %2491 = vmatmul.mubr.f32.gmra.mxu0 %v2410
        %v2492 = vpop.f32.mrf.mxu0
        %v2493 = vadd.f32 0.0, %v2492
        %v2494 = vpop.f32.mrf.mxu0
        %2495 = vmatprep.mubr.f32.mxu0 0.0
        %2496 = vmatmul.mubr.f32.gmra.mxu0 %v2413
        %v2497 = vpop.f32.mrf.mxu0
        %v2498 = vadd.f32 0.0, %v2497
        %v2499 = vpop.f32.mrf.mxu0
        %2500 = vmatprep.mubr.f32.mxu0 0.0
        %2501 = vmatmul.mubr.f32.gmra.mxu0 %v2416
        %v2502 = vpop.f32.mrf.mxu0
        %v2503 = vadd.f32 0.0, %v2502
        %v2504 = vpop.f32.mrf.mxu0
        %2505 = vmatprep.mubr.f32.mxu0 0.0
        %2506 = vmatmul.mubr.f32.gmra.mxu0 %v2419
        %v2507 = vpop.f32.mrf.mxu0
        %v2508 = vadd.f32 0.0, %v2507
        %v2509 = vpop.f32.mrf.mxu0
        %2510 = vdwg.mxu0
        %v2512 = vsel %vm2346, %v2378, 0
        %v2515 = vsel %vm2346, %v2380, 0
        %v2518 = vsel %vm2346, %v2382, 0
        %v2521 = vsel %vm2346, %v2384, 0
        %v2524 = vsel %vm2346, %v2386, 0
        %2526 = vmatprep.subr.mxu0 0.0
        %2527 = vmatpush1.msra.mxu0 0.0
        %2528 = vmatprep.subr.mxu0 0.0
        %2529 = vmatpush1.msra.mxu0 0.0
        %2530 = vmatprep.subr.mxu0 0.0
        %2531 = vmatpush1.msra.mxu0 0.0
        %2532 = vmatprep.subr.mxu0 0.0
        %2533 = vmatpush1.msra.mxu0 0.0
        %2534 = vmatprep.subr.mxu0 0.0
        %2535 = vmatpush1.msra.mxu0 0.0
        %2536 = vmatprep.subr.mxu0 0.0
        %2537 = vmatpush1.msra.mxu0 0.0
        %2538 = vmatprep.subr.mxu0 0.0
        %2539 = vmatpush1.msra.mxu0 0.0
        %2540 = vmatprep.subr.mxu0 0.0
        %2541 = vmatpush1.msra.mxu0 0.0
        %2542 = vmatprep.subr.mxu0 0.0
        %2543 = vmatpush1.msra.mxu0 0.0
        %2544 = vmatprep.subr.mxu0 0.0
        %2545 = vmatpush1.msra.mxu0 0.0
        %2546 = vmatprep.subr.mxu0 0.0
        %2547 = vmatpush1.msra.mxu0 0.0
        %2548 = vmatprep.subr.mxu0 0.0
        %2549 = vmatpush1.msra.mxu0 0.0
        %2550 = vmatprep.subr.mxu0 0.0
        %2551 = vmatpush1.msra.mxu0 %v2390
        %2552 = vmatprep.subr.mxu0 0.0
        %2553 = vmatpush1.msra.mxu0 %v2389
        %2554 = vmatprep.subr.mxu0 0.0
        %2555 = vmatpush1.msra.mxu0 %v2388
        %2556 = vmatprep.subr.mxu0 0.0
        %2557 = vmatpush1.msra.mxu0 %v2387
        %2558 = vmatprep.subr.mxu0 0.0
        %2559 = vmatpush2.msra.mxu0 0.0
        %2560 = vmatprep.subr.mxu0 0.0
        %2561 = vmatpush2.msra.mxu0 0.0
        %2562 = vmatprep.subr.mxu0 0.0
        %2563 = vmatpush2.msra.mxu0 0.0
        %2564 = vmatprep.subr.mxu0 0.0
        %2565 = vmatpush2.msra.mxu0 0.0
        %2566 = vmatprep.subr.mxu0 0.0
        %2567 = vmatpush2.msra.mxu0 0.0
        %2568 = vmatprep.subr.mxu0 0.0
        %2569 = vmatpush2.msra.mxu0 0.0
        %2570 = vmatprep.subr.mxu0 0.0
        %2571 = vmatpush2.msra.mxu0 0.0
        %2572 = vmatprep.subr.mxu0 0.0
        %2573 = vmatpush2.msra.mxu0 0.0
        %2574 = vmatprep.subr.mxu0 0.0
        %2575 = vmatpush2.msra.mxu0 0.0
        %2576 = vmatprep.subr.mxu0 0.0
        %2577 = vmatpush2.msra.mxu0 0.0
        %2578 = vmatprep.subr.mxu0 0.0
        %2579 = vmatpush2.msra.mxu0 0.0
        %2580 = vmatprep.subr.mxu0 0.0
        %2581 = vmatpush2.msra.mxu0 0.0
        %2582 = vmatprep.subr.mxu0 0.0
        %2583 = vmatpush2.msra.mxu0 0.0
        %2584 = vmatprep.subr.mxu0 0.0
        %2585 = vmatpush2.msra.mxu0 0.0
        %2586 = vmatprep.subr.mxu0 0.0
        %2587 = vmatpush2.msra.mxu0 0.0
        %2588 = vmatprep.subr.mxu0 0.0
        %2589 = vmatpush2.msra.mxu0 0.0
        %2590 = vmatprep.mubr.f32.mxu0 0.0
        %2591 = vmatmul.mubr.f32.gmra.mxu0 %v2512
        %v2592 = vpop.f32.mrf.mxu0
        %v2593 = vadd.f32 %v2488, %v2592
        %v2594 = vpop.f32.mrf.mxu0
        %2595 = vmatprep.mubr.f32.mxu0 0.0
        %2596 = vmatmul.mubr.f32.gmra.mxu0 %v2515
        %v2597 = vpop.f32.mrf.mxu0
        %v2598 = vadd.f32 %v2493, %v2597
        %v2599 = vpop.f32.mrf.mxu0
        %2600 = vmatprep.mubr.f32.mxu0 0.0
        %2601 = vmatmul.mubr.f32.gmra.mxu0 %v2518
        %v2602 = vpop.f32.mrf.mxu0
        %v2603 = vadd.f32 %v2498, %v2602
        %v2604 = vpop.f32.mrf.mxu0
        %2605 = vmatprep.mubr.f32.mxu0 0.0
        %2606 = vmatmul.mubr.f32.gmra.mxu0 %v2521
        %v2607 = vpop.f32.mrf.mxu0
        %v2608 = vadd.f32 %v2503, %v2607
        %v2609 = vpop.f32.mrf.mxu0
        %2610 = vmatprep.mubr.f32.mxu0 0.0
        %2611 = vmatmul.mubr.f32.gmra.mxu0 %v2524
        %v2612 = vpop.f32.mrf.mxu0
        %v2613 = vadd.f32 %v2508, %v2612
        %v2614 = vpop.f32.mrf.mxu0
        %2615 = vdwg.mxu0
        %s2616 = scalar_lea.vmem [#allocation3], 2
        %v2617 = vld [vmem:[%s2616] ss:$6 sm:$0xff]
        %s2618 = scalar_lea.vmem [#allocation3], 50
        %v2619 = vld [vmem:[%s2618] ss:$6 sm:$0xff]
        %s2620 = scalar_lea.vmem [#allocation3], 98
        %v2621 = vld [vmem:[%s2620] ss:$6 sm:$0xff]
        %s2622 = scalar_lea.vmem [#allocation3], 146
        %v2623 = vld [vmem:[%s2622] ss:$6 sm:$0xff]
        %s2624 = scalar_lea.vmem [#allocation3], 194
        %v2625 = vld [vmem:[%s2624] ss:$6 sm:$0x3f]
        %s2626 = scalar_lea.vmem %s6, 64
        %v2627 = vld [vmem:[%s2626] sm:$0xff]
        %v2628 = vld [vmem:[%s2626 + $0x8] sm:$0xff]
        %v2629 = vld [vmem:[%s2626 + $0x10] sm:$0xff]
        %v2630 = vld [vmem:[%s2626 + $0x18] sm:$0xff]
        %v2632 = vsel %vm2346, %v2617, 0
        %v2635 = vsel %vm2346, %v2619, 0
        %v2638 = vsel %vm2346, %v2621, 0
        %v2641 = vsel %vm2346, %v2623, 0
        %v2644 = vsel %vm2346, %v2625, 0
        %2646 = vmatprep.subr.mxu0 0.0
        %2647 = vmatpush1.msra.mxu0 0.0
        %2648 = vmatprep.subr.mxu0 0.0
        %2649 = vmatpush1.msra.mxu0 0.0
        %2650 = vmatprep.subr.mxu0 0.0
        %2651 = vmatpush1.msra.mxu0 0.0
        %2652 = vmatprep.subr.mxu0 0.0
        %2653 = vmatpush1.msra.mxu0 0.0
        %2654 = vmatprep.subr.mxu0 0.0
        %2655 = vmatpush1.msra.mxu0 0.0
        %2656 = vmatprep.subr.mxu0 0.0
        %2657 = vmatpush1.msra.mxu0 0.0
        %2658 = vmatprep.subr.mxu0 0.0
        %2659 = vmatpush1.msra.mxu0 0.0
        %2660 = vmatprep.subr.mxu0 0.0
        %2661 = vmatpush1.msra.mxu0 0.0
        %2662 = vmatprep.subr.mxu0 0.0
        %2663 = vmatpush1.msra.mxu0 0.0
        %2664 = vmatprep.subr.mxu0 0.0
        %2665 = vmatpush1.msra.mxu0 0.0
        %2666 = vmatprep.subr.mxu0 0.0
        %2667 = vmatpush1.msra.mxu0 0.0
        %2668 = vmatprep.subr.mxu0 0.0
        %2669 = vmatpush1.msra.mxu0 0.0
        %2670 = vmatprep.subr.mxu0 0.0
        %2671 = vmatpush1.msra.mxu0 %v2630
        %2672 = vmatprep.subr.mxu0 0.0
        %2673 = vmatpush1.msra.mxu0 %v2629
        %2674 = vmatprep.subr.mxu0 0.0
        %2675 = vmatpush1.msra.mxu0 %v2628
        %2676 = vmatprep.subr.mxu0 0.0
        %2677 = vmatpush1.msra.mxu0 %v2627
        %2678 = vmatprep.subr.mxu0 0.0
        %2679 = vmatpush2.msra.mxu0 0.0
        %2680 = vmatprep.subr.mxu0 0.0
        %2681 = vmatpush2.msra.mxu0 0.0
        %2682 = vmatprep.subr.mxu0 0.0
        %2683 = vmatpush2.msra.mxu0 0.0
        %2684 = vmatprep.subr.mxu0 0.0
        %2685 = vmatpush2.msra.mxu0 0.0
        %2686 = vmatprep.subr.mxu0 0.0
        %2687 = vmatpush2.msra.mxu0 0.0
        %2688 = vmatprep.subr.mxu0 0.0
        %2689 = vmatpush2.msra.mxu0 0.0
        %2690 = vmatprep.subr.mxu0 0.0
        %2691 = vmatpush2.msra.mxu0 0.0
        %2692 = vmatprep.subr.mxu0 0.0
        %2693 = vmatpush2.msra.mxu0 0.0
        %2694 = vmatprep.subr.mxu0 0.0
        %2695 = vmatpush2.msra.mxu0 0.0
        %2696 = vmatprep.subr.mxu0 0.0
        %2697 = vmatpush2.msra.mxu0 0.0
        %2698 = vmatprep.subr.mxu0 0.0
        %2699 = vmatpush2.msra.mxu0 0.0
        %2700 = vmatprep.subr.mxu0 0.0
        %2701 = vmatpush2.msra.mxu0 0.0
        %2702 = vmatprep.subr.mxu0 0.0
        %2703 = vmatpush2.msra.mxu0 0.0
        %2704 = vmatprep.subr.mxu0 0.0
        %2705 = vmatpush2.msra.mxu0 0.0
        %2706 = vmatprep.subr.mxu0 0.0
        %2707 = vmatpush2.msra.mxu0 0.0
        %2708 = vmatprep.subr.mxu0 0.0
        %2709 = vmatpush2.msra.mxu0 0.0
        %2710 = vmatprep.mubr.f32.mxu0 0.0
        %2711 = vmatmul.mubr.f32.gmra.mxu0 %v2632
        %v2712 = vpop.f32.mrf.mxu0
        %v2713 = vadd.f32 0.0, %v2712
        %v2714 = vpop.f32.mrf.mxu0
        %2715 = vmatprep.mubr.f32.mxu0 0.0
        %2716 = vmatmul.mubr.f32.gmra.mxu0 %v2635
        %v2717 = vpop.f32.mrf.mxu0
        %v2718 = vadd.f32 0.0, %v2717
        %v2719 = vpop.f32.mrf.mxu0
        %2720 = vmatprep.mubr.f32.mxu0 0.0
        %2721 = vmatmul.mubr.f32.gmra.mxu0 %v2638
        %v2722 = vpop.f32.mrf.mxu0
        %v2723 = vadd.f32 0.0, %v2722
        %v2724 = vpop.f32.mrf.mxu0
        %2725 = vmatprep.mubr.f32.mxu0 0.0
        %2726 = vmatmul.mubr.f32.gmra.mxu0 %v2641
        %v2727 = vpop.f32.mrf.mxu0
        %v2728 = vadd.f32 0.0, %v2727
        %v2729 = vpop.f32.mrf.mxu0
        %2730 = vmatprep.mubr.f32.mxu0 0.0
        %2731 = vmatmul.mubr.f32.gmra.mxu0 %v2644
        %v2732 = vpop.f32.mrf.mxu0
        %v2733 = vadd.f32 0.0, %v2732
        %v2734 = vpop.f32.mrf.mxu0
        %2735 = vdwg.mxu0
        %v2736 = vadd.f32 %v2593, %v2713
        %v2737 = vadd.f32 %v2598, %v2718
        %v2738 = vadd.f32 %v2603, %v2723
        %v2739 = vadd.f32 %v2608, %v2728
        %v2740 = vadd.f32 %v2613, %v2733
        %s2741 = scalar_lea.vmem [#allocation3], 3
        %v2742 = vld [vmem:[%s2741] ss:$6 sm:$0xff]
        %s2743 = scalar_lea.vmem [#allocation3], 51
        %v2744 = vld [vmem:[%s2743] ss:$6 sm:$0xff]
        %s2745 = scalar_lea.vmem [#allocation3], 99
        %v2746 = vld [vmem:[%s2745] ss:$6 sm:$0xff]
        %s2747 = scalar_lea.vmem [#allocation3], 147
        %v2748 = vld [vmem:[%s2747] ss:$6 sm:$0xff]
        %s2749 = scalar_lea.vmem [#allocation3], 195
        %v2750 = vld [vmem:[%s2749] ss:$6 sm:$0x3f]
        %s2751 = scalar_lea.vmem %s6, 96
        %v2752 = vld [vmem:[%s2751] sm:$0xff]
        %v2753 = vld [vmem:[%s2751 + $0x8] sm:$0xff]
        %v2754 = vld [vmem:[%s2751 + $0x10] sm:$0xff]
        %v2755 = vld [vmem:[%s2751 + $0x18] sm:$0xff]
        %v2757 = vsel %vm2346, %v2742, 0
        %v2760 = vsel %vm2346, %v2744, 0
        %v2763 = vsel %vm2346, %v2746, 0
        %v2766 = vsel %vm2346, %v2748, 0
        %v2769 = vsel %vm2346, %v2750, 0
        %2771 = vmatprep.subr.mxu0 0.0
        %2772 = vmatpush1.msra.mxu0 0.0
        %2773 = vmatprep.subr.mxu0 0.0
        %2774 = vmatpush1.msra.mxu0 0.0
        %2775 = vmatprep.subr.mxu0 0.0
        %2776 = vmatpush1.msra.mxu0 0.0
        %2777 = vmatprep.subr.mxu0 0.0
        %2778 = vmatpush1.msra.mxu0 0.0
        %2779 = vmatprep.subr.mxu0 0.0
        %2780 = vmatpush1.msra.mxu0 0.0
        %2781 = vmatprep.subr.mxu0 0.0
        %2782 = vmatpush1.msra.mxu0 0.0
        %2783 = vmatprep.subr.mxu0 0.0
        %2784 = vmatpush1.msra.mxu0 0.0
        %2785 = vmatprep.subr.mxu0 0.0
        %2786 = vmatpush1.msra.mxu0 0.0
        %2787 = vmatprep.subr.mxu0 0.0
        %2788 = vmatpush1.msra.mxu0 0.0
        %2789 = vmatprep.subr.mxu0 0.0
        %2790 = vmatpush1.msra.mxu0 0.0
        %2791 = vmatprep.subr.mxu0 0.0
        %2792 = vmatpush1.msra.mxu0 0.0
        %2793 = vmatprep.subr.mxu0 0.0
        %2794 = vmatpush1.msra.mxu0 0.0
        %2795 = vmatprep.subr.mxu0 0.0
        %2796 = vmatpush1.msra.mxu0 %v2755
        %2797 = vmatprep.subr.mxu0 0.0
        %2798 = vmatpush1.msra.mxu0 %v2754
        %2799 = vmatprep.subr.mxu0 0.0
        %2800 = vmatpush1.msra.mxu0 %v2753
        %2801 = vmatprep.subr.mxu0 0.0
        %2802 = vmatpush1.msra.mxu0 %v2752
        %2803 = vmatprep.subr.mxu0 0.0
        %2804 = vmatpush2.msra.mxu0 0.0
        %2805 = vmatprep.subr.mxu0 0.0
        %2806 = vmatpush2.msra.mxu0 0.0
        %2807 = vmatprep.subr.mxu0 0.0
        %2808 = vmatpush2.msra.mxu0 0.0
        %2809 = vmatprep.subr.mxu0 0.0
        %2810 = vmatpush2.msra.mxu0 0.0
        %2811 = vmatprep.subr.mxu0 0.0
        %2812 = vmatpush2.msra.mxu0 0.0
        %2813 = vmatprep.subr.mxu0 0.0
        %2814 = vmatpush2.msra.mxu0 0.0
        %2815 = vmatprep.subr.mxu0 0.0
        %2816 = vmatpush2.msra.mxu0 0.0
        %2817 = vmatprep.subr.mxu0 0.0
        %2818 = vmatpush2.msra.mxu0 0.0
        %2819 = vmatprep.subr.mxu0 0.0
        %2820 = vmatpush2.msra.mxu0 0.0
        %2821 = vmatprep.subr.mxu0 0.0
        %2822 = vmatpush2.msra.mxu0 0.0
        %2823 = vmatprep.subr.mxu0 0.0
        %2824 = vmatpush2.msra.mxu0 0.0
        %2825 = vmatprep.subr.mxu0 0.0
        %2826 = vmatpush2.msra.mxu0 0.0
        %2827 = vmatprep.subr.mxu0 0.0
        %2828 = vmatpush2.msra.mxu0 0.0
        %2829 = vmatprep.subr.mxu0 0.0
        %2830 = vmatpush2.msra.mxu0 0.0
        %2831 = vmatprep.subr.mxu0 0.0
        %2832 = vmatpush2.msra.mxu0 0.0
        %2833 = vmatprep.subr.mxu0 0.0
        %2834 = vmatpush2.msra.mxu0 0.0
        %2835 = vmatprep.mubr.f32.mxu0 0.0
        %2836 = vmatmul.mubr.f32.gmra.mxu0 %v2757
        %v2837 = vpop.f32.mrf.mxu0
        %v2838 = vadd.f32 0.0, %v2837
        %v2839 = vpop.f32.mrf.mxu0
        %2840 = vmatprep.mubr.f32.mxu0 0.0
        %2841 = vmatmul.mubr.f32.gmra.mxu0 %v2760
        %v2842 = vpop.f32.mrf.mxu0
        %v2843 = vadd.f32 0.0, %v2842
        %v2844 = vpop.f32.mrf.mxu0
        %2845 = vmatprep.mubr.f32.mxu0 0.0
        %2846 = vmatmul.mubr.f32.gmra.mxu0 %v2763
        %v2847 = vpop.f32.mrf.mxu0
        %v2848 = vadd.f32 0.0, %v2847
        %v2849 = vpop.f32.mrf.mxu0
        %2850 = vmatprep.mubr.f32.mxu0 0.0
        %2851 = vmatmul.mubr.f32.gmra.mxu0 %v2766
        %v2852 = vpop.f32.mrf.mxu0
        %v2853 = vadd.f32 0.0, %v2852
        %v2854 = vpop.f32.mrf.mxu0
        %2855 = vmatprep.mubr.f32.mxu0 0.0
        %2856 = vmatmul.mubr.f32.gmra.mxu0 %v2769
        %v2857 = vpop.f32.mrf.mxu0
        %v2858 = vadd.f32 0.0, %v2857
        %v2859 = vpop.f32.mrf.mxu0
        %2860 = vdwg.mxu0
        %v2861 = vadd.f32 %v2736, %v2838
        %v2862 = vadd.f32 %v2737, %v2843
        %v2863 = vadd.f32 %v2738, %v2848
        %v2864 = vadd.f32 %v2739, %v2853
        %v2865 = vadd.f32 %v2740, %v2858
        %s2866 = scalar_lea.vmem [#allocation3], 4
        %v2867 = vld [vmem:[%s2866] ss:$6 sm:$0xff]
        %s2868 = scalar_lea.vmem [#allocation3], 52
        %v2869 = vld [vmem:[%s2868] ss:$6 sm:$0xff]
        %s2870 = scalar_lea.vmem [#allocation3], 100
        %v2871 = vld [vmem:[%s2870] ss:$6 sm:$0xff]
        %s2872 = scalar_lea.vmem [#allocation3], 148
        %v2873 = vld [vmem:[%s2872] ss:$6 sm:$0xff]
        %s2874 = scalar_lea.vmem [#allocation3], 196
        %v2875 = vld [vmem:[%s2874] ss:$6 sm:$0x3f]
        %s2876 = scalar_lea.vmem %s6, 128
        %v2877 = vld [vmem:[%s2876] sm:$0xff]
        %v2878 = vld [vmem:[%s2876 + $0x8] sm:$0xff]
        %v2879 = vld [vmem:[%s2876 + $0x10] sm:$0xff]
        %v2880 = vld [vmem:[%s2876 + $0x18] sm:$0xff]
        %v2882 = vsel %vm2346, %v2867, 0
        %v2885 = vsel %vm2346, %v2869, 0
        %v2888 = vsel %vm2346, %v2871, 0
        %v2891 = vsel %vm2346, %v2873, 0
        %v2894 = vsel %vm2346, %v2875, 0
        %2896 = vmatprep.subr.mxu0 0.0
        %2897 = vmatpush1.msra.mxu0 0.0
        %2898 = vmatprep.subr.mxu0 0.0
        %2899 = vmatpush1.msra.mxu0 0.0
        %2900 = vmatprep.subr.mxu0 0.0
        %2901 = vmatpush1.msra.mxu0 0.0
        %2902 = vmatprep.subr.mxu0 0.0
        %2903 = vmatpush1.msra.mxu0 0.0
        %2904 = vmatprep.subr.mxu0 0.0
        %2905 = vmatpush1.msra.mxu0 0.0
        %2906 = vmatprep.subr.mxu0 0.0
        %2907 = vmatpush1.msra.mxu0 0.0
        %2908 = vmatprep.subr.mxu0 0.0
        %2909 = vmatpush1.msra.mxu0 0.0
        %2910 = vmatprep.subr.mxu0 0.0
        %2911 = vmatpush1.msra.mxu0 0.0
        %2912 = vmatprep.subr.mxu0 0.0
        %2913 = vmatpush1.msra.mxu0 0.0
        %2914 = vmatprep.subr.mxu0 0.0
        %2915 = vmatpush1.msra.mxu0 0.0
        %2916 = vmatprep.subr.mxu0 0.0
        %2917 = vmatpush1.msra.mxu0 0.0
        %2918 = vmatprep.subr.mxu0 0.0
        %2919 = vmatpush1.msra.mxu0 0.0
        %2920 = vmatprep.subr.mxu0 0.0
        %2921 = vmatpush1.msra.mxu0 %v2880
        %2922 = vmatprep.subr.mxu0 0.0
        %2923 = vmatpush1.msra.mxu0 %v2879
        %2924 = vmatprep.subr.mxu0 0.0
        %2925 = vmatpush1.msra.mxu0 %v2878
        %2926 = vmatprep.subr.mxu0 0.0
        %2927 = vmatpush1.msra.mxu0 %v2877
        %2928 = vmatprep.subr.mxu0 0.0
        %2929 = vmatpush2.msra.mxu0 0.0
        %2930 = vmatprep.subr.mxu0 0.0
        %2931 = vmatpush2.msra.mxu0 0.0
        %2932 = vmatprep.subr.mxu0 0.0
        %2933 = vmatpush2.msra.mxu0 0.0
        %2934 = vmatprep.subr.mxu0 0.0
        %2935 = vmatpush2.msra.mxu0 0.0
        %2936 = vmatprep.subr.mxu0 0.0
        %2937 = vmatpush2.msra.mxu0 0.0
        %2938 = vmatprep.subr.mxu0 0.0
        %2939 = vmatpush2.msra.mxu0 0.0
        %2940 = vmatprep.subr.mxu0 0.0
        %2941 = vmatpush2.msra.mxu0 0.0
        %2942 = vmatprep.subr.mxu0 0.0
        %2943 = vmatpush2.msra.mxu0 0.0
        %2944 = vmatprep.subr.mxu0 0.0
        %2945 = vmatpush2.msra.mxu0 0.0
        %2946 = vmatprep.subr.mxu0 0.0
        %2947 = vmatpush2.msra.mxu0 0.0
        %2948 = vmatprep.subr.mxu0 0.0
        %2949 = vmatpush2.msra.mxu0 0.0
        %2950 = vmatprep.subr.mxu0 0.0
        %2951 = vmatpush2.msra.mxu0 0.0
        %2952 = vmatprep.subr.mxu0 0.0
        %2953 = vmatpush2.msra.mxu0 0.0
        %2954 = vmatprep.subr.mxu0 0.0
        %2955 = vmatpush2.msra.mxu0 0.0
        %2956 = vmatprep.subr.mxu0 0.0
        %2957 = vmatpush2.msra.mxu0 0.0
        %2958 = vmatprep.subr.mxu0 0.0
        %2959 = vmatpush2.msra.mxu0 0.0
        %2960 = vmatprep.mubr.f32.mxu0 0.0
        %2961 = vmatmul.mubr.f32.gmra.mxu0 %v2882
        %v2962 = vpop.f32.mrf.mxu0
        %v2963 = vadd.f32 0.0, %v2962
        %v2964 = vpop.f32.mrf.mxu0
        %2965 = vmatprep.mubr.f32.mxu0 0.0
        %2966 = vmatmul.mubr.f32.gmra.mxu0 %v2885
        %v2967 = vpop.f32.mrf.mxu0
        %v2968 = vadd.f32 0.0, %v2967
        %v2969 = vpop.f32.mrf.mxu0
        %2970 = vmatprep.mubr.f32.mxu0 0.0
        %2971 = vmatmul.mubr.f32.gmra.mxu0 %v2888
        %v2972 = vpop.f32.mrf.mxu0
        %v2973 = vadd.f32 0.0, %v2972
        %v2974 = vpop.f32.mrf.mxu0
        %2975 = vmatprep.mubr.f32.mxu0 0.0
        %2976 = vmatmul.mubr.f32.gmra.mxu0 %v2891
        %v2977 = vpop.f32.mrf.mxu0
        %v2978 = vadd.f32 0.0, %v2977
        %v2979 = vpop.f32.mrf.mxu0
        %2980 = vmatprep.mubr.f32.mxu0 0.0
        %2981 = vmatmul.mubr.f32.gmra.mxu0 %v2894
        %v2982 = vpop.f32.mrf.mxu0
        %v2983 = vadd.f32 0.0, %v2982
        %v2984 = vpop.f32.mrf.mxu0
        %2985 = vdwg.mxu0
        %v2986 = vadd.f32 %v2861, %v2963
        %v2987 = vadd.f32 %v2862, %v2968
        %v2988 = vadd.f32 %v2863, %v2973
        %v2989 = vadd.f32 %v2864, %v2978
        %v2990 = vadd.f32 %v2865, %v2983
        %s2991 = scalar_lea.vmem [#allocation3], 5
        %v2992 = vld [vmem:[%s2991] ss:$6 sm:$0xff]
        %s2993 = scalar_lea.vmem [#allocation3], 53
        %v2994 = vld [vmem:[%s2993] ss:$6 sm:$0xff]
        %s2995 = scalar_lea.vmem [#allocation3], 101
        %v2996 = vld [vmem:[%s2995] ss:$6 sm:$0xff]
        %s2997 = scalar_lea.vmem [#allocation3], 149
        %v2998 = vld [vmem:[%s2997] ss:$6 sm:$0xff]
        %s2999 = scalar_lea.vmem [#allocation3], 197
        %v3000 = vld [vmem:[%s2999] ss:$6 sm:$0x3f]
        %s3001 = scalar_lea.vmem %s6, 160
        %v3002 = vld [vmem:[%s3001] sm:$0xff]
        %v3003 = vld [vmem:[%s3001 + $0x8] sm:$0xff]
        %v3004 = vld [vmem:[%s3001 + $0x10] sm:$0xff]
        %v3005 = vld [vmem:[%s3001 + $0x18] sm:$0xff]
        %v3007 = vsel %vm2346, %v2992, 0
        %v3010 = vsel %vm2346, %v2994, 0
        %v3013 = vsel %vm2346, %v2996, 0
        %v3016 = vsel %vm2346, %v2998, 0
        %v3019 = vsel %vm2346, %v3000, 0
        %3021 = vmatprep.subr.mxu0 0.0
        %3022 = vmatpush1.msra.mxu0 0.0
        %3023 = vmatprep.subr.mxu0 0.0
        %3024 = vmatpush1.msra.mxu0 0.0
        %3025 = vmatprep.subr.mxu0 0.0
        %3026 = vmatpush1.msra.mxu0 0.0
        %3027 = vmatprep.subr.mxu0 0.0
        %3028 = vmatpush1.msra.mxu0 0.0
        %3029 = vmatprep.subr.mxu0 0.0
        %3030 = vmatpush1.msra.mxu0 0.0
        %3031 = vmatprep.subr.mxu0 0.0
        %3032 = vmatpush1.msra.mxu0 0.0
        %3033 = vmatprep.subr.mxu0 0.0
        %3034 = vmatpush1.msra.mxu0 0.0
        %3035 = vmatprep.subr.mxu0 0.0
        %3036 = vmatpush1.msra.mxu0 0.0
        %3037 = vmatprep.subr.mxu0 0.0
        %3038 = vmatpush1.msra.mxu0 0.0
        %3039 = vmatprep.subr.mxu0 0.0
        %3040 = vmatpush1.msra.mxu0 0.0
        %3041 = vmatprep.subr.mxu0 0.0
        %3042 = vmatpush1.msra.mxu0 0.0
        %3043 = vmatprep.subr.mxu0 0.0
        %3044 = vmatpush1.msra.mxu0 0.0
        %3045 = vmatprep.subr.mxu0 0.0
        %3046 = vmatpush1.msra.mxu0 %v3005
        %3047 = vmatprep.subr.mxu0 0.0
        %3048 = vmatpush1.msra.mxu0 %v3004
        %3049 = vmatprep.subr.mxu0 0.0
        %3050 = vmatpush1.msra.mxu0 %v3003
        %3051 = vmatprep.subr.mxu0 0.0
        %3052 = vmatpush1.msra.mxu0 %v3002
        %3053 = vmatprep.subr.mxu0 0.0
        %3054 = vmatpush2.msra.mxu0 0.0
        %3055 = vmatprep.subr.mxu0 0.0
        %3056 = vmatpush2.msra.mxu0 0.0
        %3057 = vmatprep.subr.mxu0 0.0
        %3058 = vmatpush2.msra.mxu0 0.0
        %3059 = vmatprep.subr.mxu0 0.0
        %3060 = vmatpush2.msra.mxu0 0.0
        %3061 = vmatprep.subr.mxu0 0.0
        %3062 = vmatpush2.msra.mxu0 0.0
        %3063 = vmatprep.subr.mxu0 0.0
        %3064 = vmatpush2.msra.mxu0 0.0
        %3065 = vmatprep.subr.mxu0 0.0
        %3066 = vmatpush2.msra.mxu0 0.0
        %3067 = vmatprep.subr.mxu0 0.0
        %3068 = vmatpush2.msra.mxu0 0.0
        %3069 = vmatprep.subr.mxu0 0.0
        %3070 = vmatpush2.msra.mxu0 0.0
        %3071 = vmatprep.subr.mxu0 0.0
        %3072 = vmatpush2.msra.mxu0 0.0
        %3073 = vmatprep.subr.mxu0 0.0
        %3074 = vmatpush2.msra.mxu0 0.0
        %3075 = vmatprep.subr.mxu0 0.0
        %3076 = vmatpush2.msra.mxu0 0.0
        %3077 = vmatprep.subr.mxu0 0.0
        %3078 = vmatpush2.msra.mxu0 0.0
        %3079 = vmatprep.subr.mxu0 0.0
        %3080 = vmatpush2.msra.mxu0 0.0
        %3081 = vmatprep.subr.mxu0 0.0
        %3082 = vmatpush2.msra.mxu0 0.0
        %3083 = vmatprep.subr.mxu0 0.0
        %3084 = vmatpush2.msra.mxu0 0.0
        %3085 = vmatprep.mubr.f32.mxu0 0.0
        %3086 = vmatmul.mubr.f32.gmra.mxu0 %v3007
        %v3087 = vpop.f32.mrf.mxu0
        %v3088 = vadd.f32 0.0, %v3087
        %v3089 = vpop.f32.mrf.mxu0
        %3090 = vmatprep.mubr.f32.mxu0 0.0
        %3091 = vmatmul.mubr.f32.gmra.mxu0 %v3010
        %v3092 = vpop.f32.mrf.mxu0
        %v3093 = vadd.f32 0.0, %v3092
        %v3094 = vpop.f32.mrf.mxu0
        %3095 = vmatprep.mubr.f32.mxu0 0.0
        %3096 = vmatmul.mubr.f32.gmra.mxu0 %v3013
        %v3097 = vpop.f32.mrf.mxu0
        %v3098 = vadd.f32 0.0, %v3097
        %v3099 = vpop.f32.mrf.mxu0
        %3100 = vmatprep.mubr.f32.mxu0 0.0
        %3101 = vmatmul.mubr.f32.gmra.mxu0 %v3016
        %v3102 = vpop.f32.mrf.mxu0
        %v3103 = vadd.f32 0.0, %v3102
        %v3104 = vpop.f32.mrf.mxu0
        %3105 = vmatprep.mubr.f32.mxu0 0.0
        %3106 = vmatmul.mubr.f32.gmra.mxu0 %v3019
        %v3107 = vpop.f32.mrf.mxu0
        %v3108 = vadd.f32 0.0, %v3107
        %v3109 = vpop.f32.mrf.mxu0
        %3110 = vdwg.mxu0
        %v3111 = vadd.f32 %v2986, %v3088
        %v3112 = vadd.f32 %v2987, %v3093
        %v3113 = vadd.f32 %v2988, %v3098
        %v3114 = vadd.f32 %v2989, %v3103
        %v3115 = vadd.f32 %v2990, %v3108
        %s3116 = scalar_lea.vmem [#allocation3], 6
        %v3117 = vld [vmem:[%s3116] ss:$6 sm:$0xff]
        %s3118 = scalar_lea.vmem [#allocation3], 54
        %v3119 = vld [vmem:[%s3118] ss:$6 sm:$0xff]
        %s3120 = scalar_lea.vmem [#allocation3], 102
        %v3121 = vld [vmem:[%s3120] ss:$6 sm:$0xff]
        %s3122 = scalar_lea.vmem [#allocation3], 150
        %v3123 = vld [vmem:[%s3122] ss:$6 sm:$0xff]
        %s3124 = scalar_lea.vmem [#allocation3], 198
        %v3125 = vld [vmem:[%s3124] ss:$6 sm:$0x3f]
        %s3126 = scalar_lea.vmem %s6, 192
        %v3127 = vld [vmem:[%s3126] sm:$0xff]
        %v3128 = vld [vmem:[%s3126 + $0x8] sm:$0xff]
        %v3129 = vld [vmem:[%s3126 + $0x10] sm:$0xff]
        %v3130 = vld [vmem:[%s3126 + $0x18] sm:$0xff]
        %v3132 = vsel %vm2346, %v3117, 0
        %v3135 = vsel %vm2346, %v3119, 0
        %v3138 = vsel %vm2346, %v3121, 0
        %v3141 = vsel %vm2346, %v3123, 0
        %v3144 = vsel %vm2346, %v3125, 0
        %3146 = vmatprep.subr.mxu0 0.0
        %3147 = vmatpush1.msra.mxu0 0.0
        %3148 = vmatprep.subr.mxu0 0.0
        %3149 = vmatpush1.msra.mxu0 0.0
        %3150 = vmatprep.subr.mxu0 0.0
        %3151 = vmatpush1.msra.mxu0 0.0
        %3152 = vmatprep.subr.mxu0 0.0
        %3153 = vmatpush1.msra.mxu0 0.0
        %3154 = vmatprep.subr.mxu0 0.0
        %3155 = vmatpush1.msra.mxu0 0.0
        %3156 = vmatprep.subr.mxu0 0.0
        %3157 = vmatpush1.msra.mxu0 0.0
        %3158 = vmatprep.subr.mxu0 0.0
        %3159 = vmatpush1.msra.mxu0 0.0
        %3160 = vmatprep.subr.mxu0 0.0
        %3161 = vmatpush1.msra.mxu0 0.0
        %3162 = vmatprep.subr.mxu0 0.0
        %3163 = vmatpush1.msra.mxu0 0.0
        %3164 = vmatprep.subr.mxu0 0.0
        %3165 = vmatpush1.msra.mxu0 0.0
        %3166 = vmatprep.subr.mxu0 0.0
        %3167 = vmatpush1.msra.mxu0 0.0
        %3168 = vmatprep.subr.mxu0 0.0
        %3169 = vmatpush1.msra.mxu0 0.0
        %3170 = vmatprep.subr.mxu0 0.0
        %3171 = vmatpush1.msra.mxu0 %v3130
        %3172 = vmatprep.subr.mxu0 0.0
        %3173 = vmatpush1.msra.mxu0 %v3129
        %3174 = vmatprep.subr.mxu0 0.0
        %3175 = vmatpush1.msra.mxu0 %v3128
        %3176 = vmatprep.subr.mxu0 0.0
        %3177 = vmatpush1.msra.mxu0 %v3127
        %3178 = vmatprep.subr.mxu0 0.0
        %3179 = vmatpush2.msra.mxu0 0.0
        %3180 = vmatprep.subr.mxu0 0.0
        %3181 = vmatpush2.msra.mxu0 0.0
        %3182 = vmatprep.subr.mxu0 0.0
        %3183 = vmatpush2.msra.mxu0 0.0
        %3184 = vmatprep.subr.mxu0 0.0
        %3185 = vmatpush2.msra.mxu0 0.0
        %3186 = vmatprep.subr.mxu0 0.0
        %3187 = vmatpush2.msra.mxu0 0.0
        %3188 = vmatprep.subr.mxu0 0.0
        %3189 = vmatpush2.msra.mxu0 0.0
        %3190 = vmatprep.subr.mxu0 0.0
        %3191 = vmatpush2.msra.mxu0 0.0
        %3192 = vmatprep.subr.mxu0 0.0
        %3193 = vmatpush2.msra.mxu0 0.0
        %3194 = vmatprep.subr.mxu0 0.0
        %3195 = vmatpush2.msra.mxu0 0.0
        %3196 = vmatprep.subr.mxu0 0.0
        %3197 = vmatpush2.msra.mxu0 0.0
        %3198 = vmatprep.subr.mxu0 0.0
        %3199 = vmatpush2.msra.mxu0 0.0
        %3200 = vmatprep.subr.mxu0 0.0
        %3201 = vmatpush2.msra.mxu0 0.0
        %3202 = vmatprep.subr.mxu0 0.0
        %3203 = vmatpush2.msra.mxu0 0.0
        %3204 = vmatprep.subr.mxu0 0.0
        %3205 = vmatpush2.msra.mxu0 0.0
        %3206 = vmatprep.subr.mxu0 0.0
        %3207 = vmatpush2.msra.mxu0 0.0
        %3208 = vmatprep.subr.mxu0 0.0
        %3209 = vmatpush2.msra.mxu0 0.0
        %3210 = vmatprep.mubr.f32.mxu0 0.0
        %3211 = vmatmul.mubr.f32.gmra.mxu0 %v3132
        %v3212 = vpop.f32.mrf.mxu0
        %v3213 = vadd.f32 0.0, %v3212
        %v3214 = vpop.f32.mrf.mxu0
        %3215 = vmatprep.mubr.f32.mxu0 0.0
        %3216 = vmatmul.mubr.f32.gmra.mxu0 %v3135
        %v3217 = vpop.f32.mrf.mxu0
        %v3218 = vadd.f32 0.0, %v3217
        %v3219 = vpop.f32.mrf.mxu0
        %3220 = vmatprep.mubr.f32.mxu0 0.0
        %3221 = vmatmul.mubr.f32.gmra.mxu0 %v3138
        %v3222 = vpop.f32.mrf.mxu0
        %v3223 = vadd.f32 0.0, %v3222
        %v3224 = vpop.f32.mrf.mxu0
        %3225 = vmatprep.mubr.f32.mxu0 0.0
        %3226 = vmatmul.mubr.f32.gmra.mxu0 %v3141
        %v3227 = vpop.f32.mrf.mxu0
        %v3228 = vadd.f32 0.0, %v3227
        %v3229 = vpop.f32.mrf.mxu0
        %3230 = vmatprep.mubr.f32.mxu0 0.0
        %3231 = vmatmul.mubr.f32.gmra.mxu0 %v3144
        %v3232 = vpop.f32.mrf.mxu0
        %v3233 = vadd.f32 0.0, %v3232
        %v3234 = vpop.f32.mrf.mxu0
        %3235 = vdwg.mxu0
        %v3236 = vadd.f32 %v3111, %v3213
        %v3237 = vadd.f32 %v3112, %v3218
        %v3238 = vadd.f32 %v3113, %v3223
        %v3239 = vadd.f32 %v3114, %v3228
        %v3240 = vadd.f32 %v3115, %v3233
        %s3241 = scalar_lea.vmem [#allocation3], 7
        %v3242 = vld [vmem:[%s3241] ss:$6 sm:$0xff]
        %s3243 = scalar_lea.vmem [#allocation3], 55
        %v3244 = vld [vmem:[%s3243] ss:$6 sm:$0xff]
        %s3245 = scalar_lea.vmem [#allocation3], 103
        %v3246 = vld [vmem:[%s3245] ss:$6 sm:$0xff]
        %s3247 = scalar_lea.vmem [#allocation3], 151
        %v3248 = vld [vmem:[%s3247] ss:$6 sm:$0xff]
        %s3249 = scalar_lea.vmem [#allocation3], 199
        %v3250 = vld [vmem:[%s3249] ss:$6 sm:$0x3f]
        %s3251 = scalar_lea.vmem %s6, 224
        %v3252 = vld [vmem:[%s3251] sm:$0xff]
        %v3253 = vld [vmem:[%s3251 + $0x8] sm:$0xff]
        %v3254 = vld [vmem:[%s3251 + $0x10] sm:$0xff]
        %v3255 = vld [vmem:[%s3251 + $0x18] sm:$0xff]
        %v3257 = vsel %vm2346, %v3242, 0
        %v3260 = vsel %vm2346, %v3244, 0
        %v3263 = vsel %vm2346, %v3246, 0
        %v3266 = vsel %vm2346, %v3248, 0
        %v3269 = vsel %vm2346, %v3250, 0
        %3271 = vmatprep.subr.mxu0 0.0
        %3272 = vmatpush1.msra.mxu0 0.0
        %3273 = vmatprep.subr.mxu0 0.0
        %3274 = vmatpush1.msra.mxu0 0.0
        %3275 = vmatprep.subr.mxu0 0.0
        %3276 = vmatpush1.msra.mxu0 0.0
        %3277 = vmatprep.subr.mxu0 0.0
        %3278 = vmatpush1.msra.mxu0 0.0
        %3279 = vmatprep.subr.mxu0 0.0
        %3280 = vmatpush1.msra.mxu0 0.0
        %3281 = vmatprep.subr.mxu0 0.0
        %3282 = vmatpush1.msra.mxu0 0.0
        %3283 = vmatprep.subr.mxu0 0.0
        %3284 = vmatpush1.msra.mxu0 0.0
        %3285 = vmatprep.subr.mxu0 0.0
        %3286 = vmatpush1.msra.mxu0 0.0
        %3287 = vmatprep.subr.mxu0 0.0
        %3288 = vmatpush1.msra.mxu0 0.0
        %3289 = vmatprep.subr.mxu0 0.0
        %3290 = vmatpush1.msra.mxu0 0.0
        %3291 = vmatprep.subr.mxu0 0.0
        %3292 = vmatpush1.msra.mxu0 0.0
        %3293 = vmatprep.subr.mxu0 0.0
        %3294 = vmatpush1.msra.mxu0 0.0
        %3295 = vmatprep.subr.mxu0 0.0
        %3296 = vmatpush1.msra.mxu0 %v3255
        %3297 = vmatprep.subr.mxu0 0.0
        %3298 = vmatpush1.msra.mxu0 %v3254
        %3299 = vmatprep.subr.mxu0 0.0
        %3300 = vmatpush1.msra.mxu0 %v3253
        %3301 = vmatprep.subr.mxu0 0.0
        %3302 = vmatpush1.msra.mxu0 %v3252
        %3303 = vmatprep.subr.mxu0 0.0
        %3304 = vmatpush2.msra.mxu0 0.0
        %3305 = vmatprep.subr.mxu0 0.0
        %3306 = vmatpush2.msra.mxu0 0.0
        %3307 = vmatprep.subr.mxu0 0.0
        %3308 = vmatpush2.msra.mxu0 0.0
        %3309 = vmatprep.subr.mxu0 0.0
        %3310 = vmatpush2.msra.mxu0 0.0
        %3311 = vmatprep.subr.mxu0 0.0
        %3312 = vmatpush2.msra.mxu0 0.0
        %3313 = vmatprep.subr.mxu0 0.0
        %3314 = vmatpush2.msra.mxu0 0.0
        %3315 = vmatprep.subr.mxu0 0.0
        %3316 = vmatpush2.msra.mxu0 0.0
        %3317 = vmatprep.subr.mxu0 0.0
        %3318 = vmatpush2.msra.mxu0 0.0
        %3319 = vmatprep.subr.mxu0 0.0
        %3320 = vmatpush2.msra.mxu0 0.0
        %3321 = vmatprep.subr.mxu0 0.0
        %3322 = vmatpush2.msra.mxu0 0.0
        %3323 = vmatprep.subr.mxu0 0.0
        %3324 = vmatpush2.msra.mxu0 0.0
        %3325 = vmatprep.subr.mxu0 0.0
        %3326 = vmatpush2.msra.mxu0 0.0
        %3327 = vmatprep.subr.mxu0 0.0
        %3328 = vmatpush2.msra.mxu0 0.0
        %3329 = vmatprep.subr.mxu0 0.0
        %3330 = vmatpush2.msra.mxu0 0.0
        %3331 = vmatprep.subr.mxu0 0.0
        %3332 = vmatpush2.msra.mxu0 0.0
        %3333 = vmatprep.subr.mxu0 0.0
        %3334 = vmatpush2.msra.mxu0 0.0
        %3335 = vmatprep.mubr.f32.mxu0 0.0
        %3336 = vmatmul.mubr.f32.gmra.mxu0 %v3257
        %v3337 = vpop.f32.mrf.mxu0
        %v3338 = vadd.f32 0.0, %v3337
        %v3339 = vpop.f32.mrf.mxu0
        %3340 = vmatprep.mubr.f32.mxu0 0.0
        %3341 = vmatmul.mubr.f32.gmra.mxu0 %v3260
        %v3342 = vpop.f32.mrf.mxu0
        %v3343 = vadd.f32 0.0, %v3342
        %v3344 = vpop.f32.mrf.mxu0
        %3345 = vmatprep.mubr.f32.mxu0 0.0
        %3346 = vmatmul.mubr.f32.gmra.mxu0 %v3263
        %v3347 = vpop.f32.mrf.mxu0
        %v3348 = vadd.f32 0.0, %v3347
        %v3349 = vpop.f32.mrf.mxu0
        %3350 = vmatprep.mubr.f32.mxu0 0.0
        %3351 = vmatmul.mubr.f32.gmra.mxu0 %v3266
        %v3352 = vpop.f32.mrf.mxu0
        %v3353 = vadd.f32 0.0, %v3352
        %v3354 = vpop.f32.mrf.mxu0
        %3355 = vmatprep.mubr.f32.mxu0 0.0
        %3356 = vmatmul.mubr.f32.gmra.mxu0 %v3269
        %v3357 = vpop.f32.mrf.mxu0
        %v3358 = vadd.f32 0.0, %v3357
        %v3359 = vpop.f32.mrf.mxu0
        %3360 = vdwg.mxu0
        %v3361 = vadd.f32 %v3236, %v3338
        %v3362 = vadd.f32 %v3237, %v3343
        %v3363 = vadd.f32 %v3238, %v3348
        %v3364 = vadd.f32 %v3239, %v3353
        %v3365 = vadd.f32 %v3240, %v3358
        %s3366 = scalar_lea.vmem [#allocation3], 8
        %v3367 = vld [vmem:[%s3366] ss:$6 sm:$0xff]
        %s3368 = scalar_lea.vmem [#allocation3], 56
        %v3369 = vld [vmem:[%s3368] ss:$6 sm:$0xff]
        %s3370 = scalar_lea.vmem [#allocation3], 104
        %v3371 = vld [vmem:[%s3370] ss:$6 sm:$0xff]
        %s3372 = scalar_lea.vmem [#allocation3], 152
        %v3373 = vld [vmem:[%s3372] ss:$6 sm:$0xff]
        %s3374 = scalar_lea.vmem [#allocation3], 200
        %v3375 = vld [vmem:[%s3374] ss:$6 sm:$0x3f]
        %s3376 = scalar_lea.vmem %s6, 256
        %v3377 = vld [vmem:[%s3376] sm:$0xff]
        %v3378 = vld [vmem:[%s3376 + $0x8] sm:$0xff]
        %v3379 = vld [vmem:[%s3376 + $0x10] sm:$0xff]
        %v3380 = vld [vmem:[%s3376 + $0x18] sm:$0xff]
        %v3382 = vsel %vm2346, %v3367, 0
        %v3385 = vsel %vm2346, %v3369, 0
        %v3388 = vsel %vm2346, %v3371, 0
        %v3391 = vsel %vm2346, %v3373, 0
        %v3394 = vsel %vm2346, %v3375, 0
        %3396 = vmatprep.subr.mxu0 0.0
        %3397 = vmatpush1.msra.mxu0 0.0
        %3398 = vmatprep.subr.mxu0 0.0
        %3399 = vmatpush1.msra.mxu0 0.0
        %3400 = vmatprep.subr.mxu0 0.0
        %3401 = vmatpush1.msra.mxu0 0.0
        %3402 = vmatprep.subr.mxu0 0.0
        %3403 = vmatpush1.msra.mxu0 0.0
        %3404 = vmatprep.subr.mxu0 0.0
        %3405 = vmatpush1.msra.mxu0 0.0
        %3406 = vmatprep.subr.mxu0 0.0
        %3407 = vmatpush1.msra.mxu0 0.0
        %3408 = vmatprep.subr.mxu0 0.0
        %3409 = vmatpush1.msra.mxu0 0.0
        %3410 = vmatprep.subr.mxu0 0.0
        %3411 = vmatpush1.msra.mxu0 0.0
        %3412 = vmatprep.subr.mxu0 0.0
        %3413 = vmatpush1.msra.mxu0 0.0
        %3414 = vmatprep.subr.mxu0 0.0
        %3415 = vmatpush1.msra.mxu0 0.0
        %3416 = vmatprep.subr.mxu0 0.0
        %3417 = vmatpush1.msra.mxu0 0.0
        %3418 = vmatprep.subr.mxu0 0.0
        %3419 = vmatpush1.msra.mxu0 0.0
        %3420 = vmatprep.subr.mxu0 0.0
        %3421 = vmatpush1.msra.mxu0 %v3380
        %3422 = vmatprep.subr.mxu0 0.0
        %3423 = vmatpush1.msra.mxu0 %v3379
        %3424 = vmatprep.subr.mxu0 0.0
        %3425 = vmatpush1.msra.mxu0 %v3378
        %3426 = vmatprep.subr.mxu0 0.0
        %3427 = vmatpush1.msra.mxu0 %v3377
        %3428 = vmatprep.subr.mxu0 0.0
        %3429 = vmatpush2.msra.mxu0 0.0
        %3430 = vmatprep.subr.mxu0 0.0
        %3431 = vmatpush2.msra.mxu0 0.0
        %3432 = vmatprep.subr.mxu0 0.0
        %3433 = vmatpush2.msra.mxu0 0.0
        %3434 = vmatprep.subr.mxu0 0.0
        %3435 = vmatpush2.msra.mxu0 0.0
        %3436 = vmatprep.subr.mxu0 0.0
        %3437 = vmatpush2.msra.mxu0 0.0
        %3438 = vmatprep.subr.mxu0 0.0
        %3439 = vmatpush2.msra.mxu0 0.0
        %3440 = vmatprep.subr.mxu0 0.0
        %3441 = vmatpush2.msra.mxu0 0.0
        %3442 = vmatprep.subr.mxu0 0.0
        %3443 = vmatpush2.msra.mxu0 0.0
        %3444 = vmatprep.subr.mxu0 0.0
        %3445 = vmatpush2.msra.mxu0 0.0
        %3446 = vmatprep.subr.mxu0 0.0
        %3447 = vmatpush2.msra.mxu0 0.0
        %3448 = vmatprep.subr.mxu0 0.0
        %3449 = vmatpush2.msra.mxu0 0.0
        %3450 = vmatprep.subr.mxu0 0.0
        %3451 = vmatpush2.msra.mxu0 0.0
        %3452 = vmatprep.subr.mxu0 0.0
        %3453 = vmatpush2.msra.mxu0 0.0
        %3454 = vmatprep.subr.mxu0 0.0
        %3455 = vmatpush2.msra.mxu0 0.0
        %3456 = vmatprep.subr.mxu0 0.0
        %3457 = vmatpush2.msra.mxu0 0.0
        %3458 = vmatprep.subr.mxu0 0.0
        %3459 = vmatpush2.msra.mxu0 0.0
        %3460 = vmatprep.mubr.f32.mxu0 0.0
        %3461 = vmatmul.mubr.f32.gmra.mxu0 %v3382
        %v3462 = vpop.f32.mrf.mxu0
        %v3463 = vadd.f32 0.0, %v3462
        %v3464 = vpop.f32.mrf.mxu0
        %3465 = vmatprep.mubr.f32.mxu0 0.0
        %3466 = vmatmul.mubr.f32.gmra.mxu0 %v3385
        %v3467 = vpop.f32.mrf.mxu0
        %v3468 = vadd.f32 0.0, %v3467
        %v3469 = vpop.f32.mrf.mxu0
        %3470 = vmatprep.mubr.f32.mxu0 0.0
        %3471 = vmatmul.mubr.f32.gmra.mxu0 %v3388
        %v3472 = vpop.f32.mrf.mxu0
        %v3473 = vadd.f32 0.0, %v3472
        %v3474 = vpop.f32.mrf.mxu0
        %3475 = vmatprep.mubr.f32.mxu0 0.0
        %3476 = vmatmul.mubr.f32.gmra.mxu0 %v3391
        %v3477 = vpop.f32.mrf.mxu0
        %v3478 = vadd.f32 0.0, %v3477
        %v3479 = vpop.f32.mrf.mxu0
        %3480 = vmatprep.mubr.f32.mxu0 0.0
        %3481 = vmatmul.mubr.f32.gmra.mxu0 %v3394
        %v3482 = vpop.f32.mrf.mxu0
        %v3483 = vadd.f32 0.0, %v3482
        %v3484 = vpop.f32.mrf.mxu0
        %3485 = vdwg.mxu0
        %v3486 = vadd.f32 %v3361, %v3463
        %v3487 = vadd.f32 %v3362, %v3468
        %v3488 = vadd.f32 %v3363, %v3473
        %v3489 = vadd.f32 %v3364, %v3478
        %v3490 = vadd.f32 %v3365, %v3483
        %s3491 = scalar_lea.vmem [#allocation3], 9
        %v3492 = vld [vmem:[%s3491] ss:$6 sm:$0xff]
        %s3493 = scalar_lea.vmem [#allocation3], 57
        %v3494 = vld [vmem:[%s3493] ss:$6 sm:$0xff]
        %s3495 = scalar_lea.vmem [#allocation3], 105
        %v3496 = vld [vmem:[%s3495] ss:$6 sm:$0xff]
        %s3497 = scalar_lea.vmem [#allocation3], 153
        %v3498 = vld [vmem:[%s3497] ss:$6 sm:$0xff]
        %s3499 = scalar_lea.vmem [#allocation3], 201
        %v3500 = vld [vmem:[%s3499] ss:$6 sm:$0x3f]
        %s3501 = scalar_lea.vmem %s6, 288
        %v3502 = vld [vmem:[%s3501] sm:$0xff]
        %v3503 = vld [vmem:[%s3501 + $0x8] sm:$0xff]
        %v3504 = vld [vmem:[%s3501 + $0x10] sm:$0xff]
        %v3505 = vld [vmem:[%s3501 + $0x18] sm:$0xff]
        %v3507 = vsel %vm2346, %v3492, 0
        %v3510 = vsel %vm2346, %v3494, 0
        %v3513 = vsel %vm2346, %v3496, 0
        %v3516 = vsel %vm2346, %v3498, 0
        %v3519 = vsel %vm2346, %v3500, 0
        %3521 = vmatprep.subr.mxu0 0.0
        %3522 = vmatpush1.msra.mxu0 0.0
        %3523 = vmatprep.subr.mxu0 0.0
        %3524 = vmatpush1.msra.mxu0 0.0
        %3525 = vmatprep.subr.mxu0 0.0
        %3526 = vmatpush1.msra.mxu0 0.0
        %3527 = vmatprep.subr.mxu0 0.0
        %3528 = vmatpush1.msra.mxu0 0.0
        %3529 = vmatprep.subr.mxu0 0.0
        %3530 = vmatpush1.msra.mxu0 0.0
        %3531 = vmatprep.subr.mxu0 0.0
        %3532 = vmatpush1.msra.mxu0 0.0
        %3533 = vmatprep.subr.mxu0 0.0
        %3534 = vmatpush1.msra.mxu0 0.0
        %3535 = vmatprep.subr.mxu0 0.0
        %3536 = vmatpush1.msra.mxu0 0.0
        %3537 = vmatprep.subr.mxu0 0.0
        %3538 = vmatpush1.msra.mxu0 0.0
        %3539 = vmatprep.subr.mxu0 0.0
        %3540 = vmatpush1.msra.mxu0 0.0
        %3541 = vmatprep.subr.mxu0 0.0
        %3542 = vmatpush1.msra.mxu0 0.0
        %3543 = vmatprep.subr.mxu0 0.0
        %3544 = vmatpush1.msra.mxu0 0.0
        %3545 = vmatprep.subr.mxu0 0.0
        %3546 = vmatpush1.msra.mxu0 %v3505
        %3547 = vmatprep.subr.mxu0 0.0
        %3548 = vmatpush1.msra.mxu0 %v3504
        %3549 = vmatprep.subr.mxu0 0.0
        %3550 = vmatpush1.msra.mxu0 %v3503
        %3551 = vmatprep.subr.mxu0 0.0
        %3552 = vmatpush1.msra.mxu0 %v3502
        %3553 = vmatprep.subr.mxu0 0.0
        %3554 = vmatpush2.msra.mxu0 0.0
        %3555 = vmatprep.subr.mxu0 0.0
        %3556 = vmatpush2.msra.mxu0 0.0
        %3557 = vmatprep.subr.mxu0 0.0
        %3558 = vmatpush2.msra.mxu0 0.0
        %3559 = vmatprep.subr.mxu0 0.0
        %3560 = vmatpush2.msra.mxu0 0.0
        %3561 = vmatprep.subr.mxu0 0.0
        %3562 = vmatpush2.msra.mxu0 0.0
        %3563 = vmatprep.subr.mxu0 0.0
        %3564 = vmatpush2.msra.mxu0 0.0
        %3565 = vmatprep.subr.mxu0 0.0
        %3566 = vmatpush2.msra.mxu0 0.0
        %3567 = vmatprep.subr.mxu0 0.0
        %3568 = vmatpush2.msra.mxu0 0.0
        %3569 = vmatprep.subr.mxu0 0.0
        %3570 = vmatpush2.msra.mxu0 0.0
        %3571 = vmatprep.subr.mxu0 0.0
        %3572 = vmatpush2.msra.mxu0 0.0
        %3573 = vmatprep.subr.mxu0 0.0
        %3574 = vmatpush2.msra.mxu0 0.0
        %3575 = vmatprep.subr.mxu0 0.0
        %3576 = vmatpush2.msra.mxu0 0.0
        %3577 = vmatprep.subr.mxu0 0.0
        %3578 = vmatpush2.msra.mxu0 0.0
        %3579 = vmatprep.subr.mxu0 0.0
        %3580 = vmatpush2.msra.mxu0 0.0
        %3581 = vmatprep.subr.mxu0 0.0
        %3582 = vmatpush2.msra.mxu0 0.0
        %3583 = vmatprep.subr.mxu0 0.0
        %3584 = vmatpush2.msra.mxu0 0.0
        %3585 = vmatprep.mubr.f32.mxu0 0.0
        %3586 = vmatmul.mubr.f32.gmra.mxu0 %v3507
        %v3587 = vpop.f32.mrf.mxu0
        %v3588 = vadd.f32 0.0, %v3587
        %v3589 = vpop.f32.mrf.mxu0
        %3590 = vmatprep.mubr.f32.mxu0 0.0
        %3591 = vmatmul.mubr.f32.gmra.mxu0 %v3510
        %v3592 = vpop.f32.mrf.mxu0
        %v3593 = vadd.f32 0.0, %v3592
        %v3594 = vpop.f32.mrf.mxu0
        %3595 = vmatprep.mubr.f32.mxu0 0.0
        %3596 = vmatmul.mubr.f32.gmra.mxu0 %v3513
        %v3597 = vpop.f32.mrf.mxu0
        %v3598 = vadd.f32 0.0, %v3597
        %v3599 = vpop.f32.mrf.mxu0
        %3600 = vmatprep.mubr.f32.mxu0 0.0
        %3601 = vmatmul.mubr.f32.gmra.mxu0 %v3516
        %v3602 = vpop.f32.mrf.mxu0
        %v3603 = vadd.f32 0.0, %v3602
        %v3604 = vpop.f32.mrf.mxu0
        %3605 = vmatprep.mubr.f32.mxu0 0.0
        %3606 = vmatmul.mubr.f32.gmra.mxu0 %v3519
        %v3607 = vpop.f32.mrf.mxu0
        %v3608 = vadd.f32 0.0, %v3607
        %v3609 = vpop.f32.mrf.mxu0
        %3610 = vdwg.mxu0
        %v3611 = vadd.f32 %v3486, %v3588
        %v3612 = vadd.f32 %v3487, %v3593
        %v3613 = vadd.f32 %v3488, %v3598
        %v3614 = vadd.f32 %v3489, %v3603
        %v3615 = vadd.f32 %v3490, %v3608
        %s3616 = scalar_lea.vmem [#allocation3], 10
        %v3617 = vld [vmem:[%s3616] ss:$6 sm:$0xff]
        %s3618 = scalar_lea.vmem [#allocation3], 58
        %v3619 = vld [vmem:[%s3618] ss:$6 sm:$0xff]
        %s3620 = scalar_lea.vmem [#allocation3], 106
        %v3621 = vld [vmem:[%s3620] ss:$6 sm:$0xff]
        %s3622 = scalar_lea.vmem [#allocation3], 154
        %v3623 = vld [vmem:[%s3622] ss:$6 sm:$0xff]
        %s3624 = scalar_lea.vmem [#allocation3], 202
        %v3625 = vld [vmem:[%s3624] ss:$6 sm:$0x3f]
        %s3626 = scalar_lea.vmem %s6, 320
        %v3627 = vld [vmem:[%s3626] sm:$0xff]
        %v3628 = vld [vmem:[%s3626 + $0x8] sm:$0xff]
        %v3629 = vld [vmem:[%s3626 + $0x10] sm:$0xff]
        %v3630 = vld [vmem:[%s3626 + $0x18] sm:$0xff]
        %v3632 = vsel %vm2346, %v3617, 0
        %v3635 = vsel %vm2346, %v3619, 0
        %v3638 = vsel %vm2346, %v3621, 0
        %v3641 = vsel %vm2346, %v3623, 0
        %v3644 = vsel %vm2346, %v3625, 0
        %3646 = vmatprep.subr.mxu0 0.0
        %3647 = vmatpush1.msra.mxu0 0.0
        %3648 = vmatprep.subr.mxu0 0.0
        %3649 = vmatpush1.msra.mxu0 0.0
        %3650 = vmatprep.subr.mxu0 0.0
        %3651 = vmatpush1.msra.mxu0 0.0
        %3652 = vmatprep.subr.mxu0 0.0
        %3653 = vmatpush1.msra.mxu0 0.0
        %3654 = vmatprep.subr.mxu0 0.0
        %3655 = vmatpush1.msra.mxu0 0.0
        %3656 = vmatprep.subr.mxu0 0.0
        %3657 = vmatpush1.msra.mxu0 0.0
        %3658 = vmatprep.subr.mxu0 0.0
        %3659 = vmatpush1.msra.mxu0 0.0
        %3660 = vmatprep.subr.mxu0 0.0
        %3661 = vmatpush1.msra.mxu0 0.0
        %3662 = vmatprep.subr.mxu0 0.0
        %3663 = vmatpush1.msra.mxu0 0.0
        %3664 = vmatprep.subr.mxu0 0.0
        %3665 = vmatpush1.msra.mxu0 0.0
        %3666 = vmatprep.subr.mxu0 0.0
        %3667 = vmatpush1.msra.mxu0 0.0
        %3668 = vmatprep.subr.mxu0 0.0
        %3669 = vmatpush1.msra.mxu0 0.0
        %3670 = vmatprep.subr.mxu0 0.0
        %3671 = vmatpush1.msra.mxu0 %v3630
        %3672 = vmatprep.subr.mxu0 0.0
        %3673 = vmatpush1.msra.mxu0 %v3629
        %3674 = vmatprep.subr.mxu0 0.0
        %3675 = vmatpush1.msra.mxu0 %v3628
        %3676 = vmatprep.subr.mxu0 0.0
        %3677 = vmatpush1.msra.mxu0 %v3627
        %3678 = vmatprep.subr.mxu0 0.0
        %3679 = vmatpush2.msra.mxu0 0.0
        %3680 = vmatprep.subr.mxu0 0.0
        %3681 = vmatpush2.msra.mxu0 0.0
        %3682 = vmatprep.subr.mxu0 0.0
        %3683 = vmatpush2.msra.mxu0 0.0
        %3684 = vmatprep.subr.mxu0 0.0
        %3685 = vmatpush2.msra.mxu0 0.0
        %3686 = vmatprep.subr.mxu0 0.0
        %3687 = vmatpush2.msra.mxu0 0.0
        %3688 = vmatprep.subr.mxu0 0.0
        %3689 = vmatpush2.msra.mxu0 0.0
        %3690 = vmatprep.subr.mxu0 0.0
        %3691 = vmatpush2.msra.mxu0 0.0
        %3692 = vmatprep.subr.mxu0 0.0
        %3693 = vmatpush2.msra.mxu0 0.0
        %3694 = vmatprep.subr.mxu0 0.0
        %3695 = vmatpush2.msra.mxu0 0.0
        %3696 = vmatprep.subr.mxu0 0.0
        %3697 = vmatpush2.msra.mxu0 0.0
        %3698 = vmatprep.subr.mxu0 0.0
        %3699 = vmatpush2.msra.mxu0 0.0
        %3700 = vmatprep.subr.mxu0 0.0
        %3701 = vmatpush2.msra.mxu0 0.0
        %3702 = vmatprep.subr.mxu0 0.0
        %3703 = vmatpush2.msra.mxu0 0.0
        %3704 = vmatprep.subr.mxu0 0.0
        %3705 = vmatpush2.msra.mxu0 0.0
        %3706 = vmatprep.subr.mxu0 0.0
        %3707 = vmatpush2.msra.mxu0 0.0
        %3708 = vmatprep.subr.mxu0 0.0
        %3709 = vmatpush2.msra.mxu0 0.0
        %3710 = vmatprep.mubr.f32.mxu0 0.0
        %3711 = vmatmul.mubr.f32.gmra.mxu0 %v3632
        %v3712 = vpop.f32.mrf.mxu0
        %v3713 = vadd.f32 0.0, %v3712
        %v3714 = vpop.f32.mrf.mxu0
        %3715 = vmatprep.mubr.f32.mxu0 0.0
        %3716 = vmatmul.mubr.f32.gmra.mxu0 %v3635
        %v3717 = vpop.f32.mrf.mxu0
        %v3718 = vadd.f32 0.0, %v3717
        %v3719 = vpop.f32.mrf.mxu0
        %3720 = vmatprep.mubr.f32.mxu0 0.0
        %3721 = vmatmul.mubr.f32.gmra.mxu0 %v3638
        %v3722 = vpop.f32.mrf.mxu0
        %v3723 = vadd.f32 0.0, %v3722
        %v3724 = vpop.f32.mrf.mxu0
        %3725 = vmatprep.mubr.f32.mxu0 0.0
        %3726 = vmatmul.mubr.f32.gmra.mxu0 %v3641
        %v3727 = vpop.f32.mrf.mxu0
        %v3728 = vadd.f32 0.0, %v3727
        %v3729 = vpop.f32.mrf.mxu0
        %3730 = vmatprep.mubr.f32.mxu0 0.0
        %3731 = vmatmul.mubr.f32.gmra.mxu0 %v3644
        %v3732 = vpop.f32.mrf.mxu0
        %v3733 = vadd.f32 0.0, %v3732
        %v3734 = vpop.f32.mrf.mxu0
        %3735 = vdwg.mxu0
        %v3736 = vadd.f32 %v3611, %v3713
        %v3737 = vadd.f32 %v3612, %v3718
        %v3738 = vadd.f32 %v3613, %v3723
        %v3739 = vadd.f32 %v3614, %v3728
        %v3740 = vadd.f32 %v3615, %v3733
        %s3741 = scalar_lea.vmem [#allocation3], 11
        %v3742 = vld [vmem:[%s3741] ss:$6 sm:$0xff]
        %s3743 = scalar_lea.vmem [#allocation3], 59
        %v3744 = vld [vmem:[%s3743] ss:$6 sm:$0xff]
        %s3745 = scalar_lea.vmem [#allocation3], 107
        %v3746 = vld [vmem:[%s3745] ss:$6 sm:$0xff]
        %s3747 = scalar_lea.vmem [#allocation3], 155
        %v3748 = vld [vmem:[%s3747] ss:$6 sm:$0xff]
        %s3749 = scalar_lea.vmem [#allocation3], 203
        %v3750 = vld [vmem:[%s3749] ss:$6 sm:$0x3f]
        %s3751 = scalar_lea.vmem %s6, 352
        %v3752 = vld [vmem:[%s3751] sm:$0xff]
        %v3753 = vld [vmem:[%s3751 + $0x8] sm:$0xff]
        %v3754 = vld [vmem:[%s3751 + $0x10] sm:$0xff]
        %v3755 = vld [vmem:[%s3751 + $0x18] sm:$0xff]
        %v3757 = vsel %vm2346, %v3742, 0
        %v3760 = vsel %vm2346, %v3744, 0
        %v3763 = vsel %vm2346, %v3746, 0
        %v3766 = vsel %vm2346, %v3748, 0
        %v3769 = vsel %vm2346, %v3750, 0
        %3771 = vmatprep.subr.mxu0 0.0
        %3772 = vmatpush1.msra.mxu0 0.0
        %3773 = vmatprep.subr.mxu0 0.0
        %3774 = vmatpush1.msra.mxu0 0.0
        %3775 = vmatprep.subr.mxu0 0.0
        %3776 = vmatpush1.msra.mxu0 0.0
        %3777 = vmatprep.subr.mxu0 0.0
        %3778 = vmatpush1.msra.mxu0 0.0
        %3779 = vmatprep.subr.mxu0 0.0
        %3780 = vmatpush1.msra.mxu0 0.0
        %3781 = vmatprep.subr.mxu0 0.0
        %3782 = vmatpush1.msra.mxu0 0.0
        %3783 = vmatprep.subr.mxu0 0.0
        %3784 = vmatpush1.msra.mxu0 0.0
        %3785 = vmatprep.subr.mxu0 0.0
        %3786 = vmatpush1.msra.mxu0 0.0
        %3787 = vmatprep.subr.mxu0 0.0
        %3788 = vmatpush1.msra.mxu0 0.0
        %3789 = vmatprep.subr.mxu0 0.0
        %3790 = vmatpush1.msra.mxu0 0.0
        %3791 = vmatprep.subr.mxu0 0.0
        %3792 = vmatpush1.msra.mxu0 0.0
        %3793 = vmatprep.subr.mxu0 0.0
        %3794 = vmatpush1.msra.mxu0 0.0
        %3795 = vmatprep.subr.mxu0 0.0
        %3796 = vmatpush1.msra.mxu0 %v3755
        %3797 = vmatprep.subr.mxu0 0.0
        %3798 = vmatpush1.msra.mxu0 %v3754
        %3799 = vmatprep.subr.mxu0 0.0
        %3800 = vmatpush1.msra.mxu0 %v3753
        %3801 = vmatprep.subr.mxu0 0.0
        %3802 = vmatpush1.msra.mxu0 %v3752
        %3803 = vmatprep.subr.mxu0 0.0
        %3804 = vmatpush2.msra.mxu0 0.0
        %3805 = vmatprep.subr.mxu0 0.0
        %3806 = vmatpush2.msra.mxu0 0.0
        %3807 = vmatprep.subr.mxu0 0.0
        %3808 = vmatpush2.msra.mxu0 0.0
        %3809 = vmatprep.subr.mxu0 0.0
        %3810 = vmatpush2.msra.mxu0 0.0
        %3811 = vmatprep.subr.mxu0 0.0
        %3812 = vmatpush2.msra.mxu0 0.0
        %3813 = vmatprep.subr.mxu0 0.0
        %3814 = vmatpush2.msra.mxu0 0.0
        %3815 = vmatprep.subr.mxu0 0.0
        %3816 = vmatpush2.msra.mxu0 0.0
        %3817 = vmatprep.subr.mxu0 0.0
        %3818 = vmatpush2.msra.mxu0 0.0
        %3819 = vmatprep.subr.mxu0 0.0
        %3820 = vmatpush2.msra.mxu0 0.0
        %3821 = vmatprep.subr.mxu0 0.0
        %3822 = vmatpush2.msra.mxu0 0.0
        %3823 = vmatprep.subr.mxu0 0.0
        %3824 = vmatpush2.msra.mxu0 0.0
        %3825 = vmatprep.subr.mxu0 0.0
        %3826 = vmatpush2.msra.mxu0 0.0
        %3827 = vmatprep.subr.mxu0 0.0
        %3828 = vmatpush2.msra.mxu0 0.0
        %3829 = vmatprep.subr.mxu0 0.0
        %3830 = vmatpush2.msra.mxu0 0.0
        %3831 = vmatprep.subr.mxu0 0.0
        %3832 = vmatpush2.msra.mxu0 0.0
        %3833 = vmatprep.subr.mxu0 0.0
        %3834 = vmatpush2.msra.mxu0 0.0
        %3835 = vmatprep.mubr.f32.mxu0 0.0
        %3836 = vmatmul.mubr.f32.gmra.mxu0 %v3757
        %v3837 = vpop.f32.mrf.mxu0
        %v3838 = vadd.f32 0.0, %v3837
        %v3839 = vpop.f32.mrf.mxu0
        %3840 = vmatprep.mubr.f32.mxu0 0.0
        %3841 = vmatmul.mubr.f32.gmra.mxu0 %v3760
        %v3842 = vpop.f32.mrf.mxu0
        %v3843 = vadd.f32 0.0, %v3842
        %v3844 = vpop.f32.mrf.mxu0
        %3845 = vmatprep.mubr.f32.mxu0 0.0
        %3846 = vmatmul.mubr.f32.gmra.mxu0 %v3763
        %v3847 = vpop.f32.mrf.mxu0
        %v3848 = vadd.f32 0.0, %v3847
        %v3849 = vpop.f32.mrf.mxu0
        %3850 = vmatprep.mubr.f32.mxu0 0.0
        %3851 = vmatmul.mubr.f32.gmra.mxu0 %v3766
        %v3852 = vpop.f32.mrf.mxu0
        %v3853 = vadd.f32 0.0, %v3852
        %v3854 = vpop.f32.mrf.mxu0
        %3855 = vmatprep.mubr.f32.mxu0 0.0
        %3856 = vmatmul.mubr.f32.gmra.mxu0 %v3769
        %v3857 = vpop.f32.mrf.mxu0
        %v3858 = vadd.f32 0.0, %v3857
        %v3859 = vpop.f32.mrf.mxu0
        %3860 = vdwg.mxu0
        %v3861 = vadd.f32 %v3736, %v3838
        %v3862 = vadd.f32 %v3737, %v3843
        %v3863 = vadd.f32 %v3738, %v3848
        %v3864 = vadd.f32 %v3739, %v3853
        %v3865 = vadd.f32 %v3740, %v3858
        %s3866 = scalar_lea.vmem [#allocation3], 12
        %v3867 = vld [vmem:[%s3866] ss:$6 sm:$0xff]
        %s3868 = scalar_lea.vmem [#allocation3], 60
        %v3869 = vld [vmem:[%s3868] ss:$6 sm:$0xff]
        %s3870 = scalar_lea.vmem [#allocation3], 108
        %v3871 = vld [vmem:[%s3870] ss:$6 sm:$0xff]
        %s3872 = scalar_lea.vmem [#allocation3], 156
        %v3873 = vld [vmem:[%s3872] ss:$6 sm:$0xff]
        %s3874 = scalar_lea.vmem [#allocation3], 204
        %v3875 = vld [vmem:[%s3874] ss:$6 sm:$0x3f]
        %s3876 = scalar_lea.vmem %s6, 384
        %v3877 = vld [vmem:[%s3876] sm:$0xff]
        %v3878 = vld [vmem:[%s3876 + $0x8] sm:$0xff]
        %v3879 = vld [vmem:[%s3876 + $0x10] sm:$0xff]
        %v3880 = vld [vmem:[%s3876 + $0x18] sm:$0xff]
        %v3882 = vsel %vm2346, %v3867, 0
        %v3885 = vsel %vm2346, %v3869, 0
        %v3888 = vsel %vm2346, %v3871, 0
        %v3891 = vsel %vm2346, %v3873, 0
        %v3894 = vsel %vm2346, %v3875, 0
        %3896 = vmatprep.subr.mxu0 0.0
        %3897 = vmatpush1.msra.mxu0 0.0
        %3898 = vmatprep.subr.mxu0 0.0
        %3899 = vmatpush1.msra.mxu0 0.0
        %3900 = vmatprep.subr.mxu0 0.0
        %3901 = vmatpush1.msra.mxu0 0.0
        %3902 = vmatprep.subr.mxu0 0.0
        %3903 = vmatpush1.msra.mxu0 0.0
        %3904 = vmatprep.subr.mxu0 0.0
        %3905 = vmatpush1.msra.mxu0 0.0
        %3906 = vmatprep.subr.mxu0 0.0
        %3907 = vmatpush1.msra.mxu0 0.0
        %3908 = vmatprep.subr.mxu0 0.0
        %3909 = vmatpush1.msra.mxu0 0.0
        %3910 = vmatprep.subr.mxu0 0.0
        %3911 = vmatpush1.msra.mxu0 0.0
        %3912 = vmatprep.subr.mxu0 0.0
        %3913 = vmatpush1.msra.mxu0 0.0
        %3914 = vmatprep.subr.mxu0 0.0
        %3915 = vmatpush1.msra.mxu0 0.0
        %3916 = vmatprep.subr.mxu0 0.0
        %3917 = vmatpush1.msra.mxu0 0.0
        %3918 = vmatprep.subr.mxu0 0.0
        %3919 = vmatpush1.msra.mxu0 0.0
        %3920 = vmatprep.subr.mxu0 0.0
        %3921 = vmatpush1.msra.mxu0 %v3880
        %3922 = vmatprep.subr.mxu0 0.0
        %3923 = vmatpush1.msra.mxu0 %v3879
        %3924 = vmatprep.subr.mxu0 0.0
        %3925 = vmatpush1.msra.mxu0 %v3878
        %3926 = vmatprep.subr.mxu0 0.0
        %3927 = vmatpush1.msra.mxu0 %v3877
        %3928 = vmatprep.subr.mxu0 0.0
        %3929 = vmatpush2.msra.mxu0 0.0
        %3930 = vmatprep.subr.mxu0 0.0
        %3931 = vmatpush2.msra.mxu0 0.0
        %3932 = vmatprep.subr.mxu0 0.0
        %3933 = vmatpush2.msra.mxu0 0.0
        %3934 = vmatprep.subr.mxu0 0.0
        %3935 = vmatpush2.msra.mxu0 0.0
        %3936 = vmatprep.subr.mxu0 0.0
        %3937 = vmatpush2.msra.mxu0 0.0
        %3938 = vmatprep.subr.mxu0 0.0
        %3939 = vmatpush2.msra.mxu0 0.0
        %3940 = vmatprep.subr.mxu0 0.0
        %3941 = vmatpush2.msra.mxu0 0.0
        %3942 = vmatprep.subr.mxu0 0.0
        %3943 = vmatpush2.msra.mxu0 0.0
        %3944 = vmatprep.subr.mxu0 0.0
        %3945 = vmatpush2.msra.mxu0 0.0
        %3946 = vmatprep.subr.mxu0 0.0
        %3947 = vmatpush2.msra.mxu0 0.0
        %3948 = vmatprep.subr.mxu0 0.0
        %3949 = vmatpush2.msra.mxu0 0.0
        %3950 = vmatprep.subr.mxu0 0.0
        %3951 = vmatpush2.msra.mxu0 0.0
        %3952 = vmatprep.subr.mxu0 0.0
        %3953 = vmatpush2.msra.mxu0 0.0
        %3954 = vmatprep.subr.mxu0 0.0
        %3955 = vmatpush2.msra.mxu0 0.0
        %3956 = vmatprep.subr.mxu0 0.0
        %3957 = vmatpush2.msra.mxu0 0.0
        %3958 = vmatprep.subr.mxu0 0.0
        %3959 = vmatpush2.msra.mxu0 0.0
        %3960 = vmatprep.mubr.f32.mxu0 0.0
        %3961 = vmatmul.mubr.f32.gmra.mxu0 %v3882
        %v3962 = vpop.f32.mrf.mxu0
        %v3963 = vadd.f32 0.0, %v3962
        %v3964 = vpop.f32.mrf.mxu0
        %3965 = vmatprep.mubr.f32.mxu0 0.0
        %3966 = vmatmul.mubr.f32.gmra.mxu0 %v3885
        %v3967 = vpop.f32.mrf.mxu0
        %v3968 = vadd.f32 0.0, %v3967
        %v3969 = vpop.f32.mrf.mxu0
        %3970 = vmatprep.mubr.f32.mxu0 0.0
        %3971 = vmatmul.mubr.f32.gmra.mxu0 %v3888
        %v3972 = vpop.f32.mrf.mxu0
        %v3973 = vadd.f32 0.0, %v3972
        %v3974 = vpop.f32.mrf.mxu0
        %3975 = vmatprep.mubr.f32.mxu0 0.0
        %3976 = vmatmul.mubr.f32.gmra.mxu0 %v3891
        %v3977 = vpop.f32.mrf.mxu0
        %v3978 = vadd.f32 0.0, %v3977
        %v3979 = vpop.f32.mrf.mxu0
        %3980 = vmatprep.mubr.f32.mxu0 0.0
        %3981 = vmatmul.mubr.f32.gmra.mxu0 %v3894
        %v3982 = vpop.f32.mrf.mxu0
        %v3983 = vadd.f32 0.0, %v3982
        %v3984 = vpop.f32.mrf.mxu0
        %3985 = vdwg.mxu0
        %v3986 = vadd.f32 %v3861, %v3963
        %v3987 = vadd.f32 %v3862, %v3968
        %v3988 = vadd.f32 %v3863, %v3973
        %v3989 = vadd.f32 %v3864, %v3978
        %v3990 = vadd.f32 %v3865, %v3983
        %s3991 = scalar_lea.vmem [#allocation3], 13
        %v3992 = vld [vmem:[%s3991] ss:$6 sm:$0xff]
        %s3993 = scalar_lea.vmem [#allocation3], 61
        %v3994 = vld [vmem:[%s3993] ss:$6 sm:$0xff]
        %s3995 = scalar_lea.vmem [#allocation3], 109
        %v3996 = vld [vmem:[%s3995] ss:$6 sm:$0xff]
        %s3997 = scalar_lea.vmem [#allocation3], 157
        %v3998 = vld [vmem:[%s3997] ss:$6 sm:$0xff]
        %s3999 = scalar_lea.vmem [#allocation3], 205
        %v4000 = vld [vmem:[%s3999] ss:$6 sm:$0x3f]
        %s4001 = scalar_lea.vmem %s6, 416
        %v4002 = vld [vmem:[%s4001] sm:$0xff]
        %v4003 = vld [vmem:[%s4001 + $0x8] sm:$0xff]
        %v4004 = vld [vmem:[%s4001 + $0x10] sm:$0xff]
        %v4005 = vld [vmem:[%s4001 + $0x18] sm:$0xff]
        %v4007 = vsel %vm2346, %v3992, 0
        %v4010 = vsel %vm2346, %v3994, 0
        %v4013 = vsel %vm2346, %v3996, 0
        %v4016 = vsel %vm2346, %v3998, 0
        %v4019 = vsel %vm2346, %v4000, 0
        %4021 = vmatprep.subr.mxu0 0.0
        %4022 = vmatpush1.msra.mxu0 0.0
        %4023 = vmatprep.subr.mxu0 0.0
        %4024 = vmatpush1.msra.mxu0 0.0
        %4025 = vmatprep.subr.mxu0 0.0
        %4026 = vmatpush1.msra.mxu0 0.0
        %4027 = vmatprep.subr.mxu0 0.0
        %4028 = vmatpush1.msra.mxu0 0.0
        %4029 = vmatprep.subr.mxu0 0.0
        %4030 = vmatpush1.msra.mxu0 0.0
        %4031 = vmatprep.subr.mxu0 0.0
        %4032 = vmatpush1.msra.mxu0 0.0
        %4033 = vmatprep.subr.mxu0 0.0
        %4034 = vmatpush1.msra.mxu0 0.0
        %4035 = vmatprep.subr.mxu0 0.0
        %4036 = vmatpush1.msra.mxu0 0.0
        %4037 = vmatprep.subr.mxu0 0.0
        %4038 = vmatpush1.msra.mxu0 0.0
        %4039 = vmatprep.subr.mxu0 0.0
        %4040 = vmatpush1.msra.mxu0 0.0
        %4041 = vmatprep.subr.mxu0 0.0
        %4042 = vmatpush1.msra.mxu0 0.0
        %4043 = vmatprep.subr.mxu0 0.0
        %4044 = vmatpush1.msra.mxu0 0.0
        %4045 = vmatprep.subr.mxu0 0.0
        %4046 = vmatpush1.msra.mxu0 %v4005
        %4047 = vmatprep.subr.mxu0 0.0
        %4048 = vmatpush1.msra.mxu0 %v4004
        %4049 = vmatprep.subr.mxu0 0.0
        %4050 = vmatpush1.msra.mxu0 %v4003
        %4051 = vmatprep.subr.mxu0 0.0
        %4052 = vmatpush1.msra.mxu0 %v4002
        %4053 = vmatprep.subr.mxu0 0.0
        %4054 = vmatpush2.msra.mxu0 0.0
        %4055 = vmatprep.subr.mxu0 0.0
        %4056 = vmatpush2.msra.mxu0 0.0
        %4057 = vmatprep.subr.mxu0 0.0
        %4058 = vmatpush2.msra.mxu0 0.0
        %4059 = vmatprep.subr.mxu0 0.0
        %4060 = vmatpush2.msra.mxu0 0.0
        %4061 = vmatprep.subr.mxu0 0.0
        %4062 = vmatpush2.msra.mxu0 0.0
        %4063 = vmatprep.subr.mxu0 0.0
        %4064 = vmatpush2.msra.mxu0 0.0
        %4065 = vmatprep.subr.mxu0 0.0
        %4066 = vmatpush2.msra.mxu0 0.0
        %4067 = vmatprep.subr.mxu0 0.0
        %4068 = vmatpush2.msra.mxu0 0.0
        %4069 = vmatprep.subr.mxu0 0.0
        %4070 = vmatpush2.msra.mxu0 0.0
        %4071 = vmatprep.subr.mxu0 0.0
        %4072 = vmatpush2.msra.mxu0 0.0
        %4073 = vmatprep.subr.mxu0 0.0
        %4074 = vmatpush2.msra.mxu0 0.0
        %4075 = vmatprep.subr.mxu0 0.0
        %4076 = vmatpush2.msra.mxu0 0.0
        %4077 = vmatprep.subr.mxu0 0.0
        %4078 = vmatpush2.msra.mxu0 0.0
        %4079 = vmatprep.subr.mxu0 0.0
        %4080 = vmatpush2.msra.mxu0 0.0
        %4081 = vmatprep.subr.mxu0 0.0
        %4082 = vmatpush2.msra.mxu0 0.0
        %4083 = vmatprep.subr.mxu0 0.0
        %4084 = vmatpush2.msra.mxu0 0.0
        %4085 = vmatprep.mubr.f32.mxu0 0.0
        %4086 = vmatmul.mubr.f32.gmra.mxu0 %v4007
        %v4087 = vpop.f32.mrf.mxu0
        %v4088 = vadd.f32 0.0, %v4087
        %v4089 = vpop.f32.mrf.mxu0
        %4090 = vmatprep.mubr.f32.mxu0 0.0
        %4091 = vmatmul.mubr.f32.gmra.mxu0 %v4010
        %v4092 = vpop.f32.mrf.mxu0
        %v4093 = vadd.f32 0.0, %v4092
        %v4094 = vpop.f32.mrf.mxu0
        %4095 = vmatprep.mubr.f32.mxu0 0.0
        %4096 = vmatmul.mubr.f32.gmra.mxu0 %v4013
        %v4097 = vpop.f32.mrf.mxu0
        %v4098 = vadd.f32 0.0, %v4097
        %v4099 = vpop.f32.mrf.mxu0
        %4100 = vmatprep.mubr.f32.mxu0 0.0
        %4101 = vmatmul.mubr.f32.gmra.mxu0 %v4016
        %v4102 = vpop.f32.mrf.mxu0
        %v4103 = vadd.f32 0.0, %v4102
        %v4104 = vpop.f32.mrf.mxu0
        %4105 = vmatprep.mubr.f32.mxu0 0.0
        %4106 = vmatmul.mubr.f32.gmra.mxu0 %v4019
        %v4107 = vpop.f32.mrf.mxu0
        %v4108 = vadd.f32 0.0, %v4107
        %v4109 = vpop.f32.mrf.mxu0
        %4110 = vdwg.mxu0
        %v4111 = vadd.f32 %v3986, %v4088
        %v4112 = vadd.f32 %v3987, %v4093
        %v4113 = vadd.f32 %v3988, %v4098
        %v4114 = vadd.f32 %v3989, %v4103
        %v4115 = vadd.f32 %v3990, %v4108
        %s4116 = scalar_lea.vmem [#allocation3], 14
        %v4117 = vld [vmem:[%s4116] ss:$6 sm:$0xff]
        %s4118 = scalar_lea.vmem [#allocation3], 62
        %v4119 = vld [vmem:[%s4118] ss:$6 sm:$0xff]
        %s4120 = scalar_lea.vmem [#allocation3], 110
        %v4121 = vld [vmem:[%s4120] ss:$6 sm:$0xff]
        %s4122 = scalar_lea.vmem [#allocation3], 158
        %v4123 = vld [vmem:[%s4122] ss:$6 sm:$0xff]
        %s4124 = scalar_lea.vmem [#allocation3], 206
        %v4125 = vld [vmem:[%s4124] ss:$6 sm:$0x3f]
        %s4126 = scalar_lea.vmem %s6, 448
        %v4127 = vld [vmem:[%s4126] sm:$0xff]
        %v4128 = vld [vmem:[%s4126 + $0x8] sm:$0xff]
        %v4129 = vld [vmem:[%s4126 + $0x10] sm:$0xff]
        %v4130 = vld [vmem:[%s4126 + $0x18] sm:$0xff]
        %v4132 = vsel %vm2346, %v4117, 0
        %v4135 = vsel %vm2346, %v4119, 0
        %v4138 = vsel %vm2346, %v4121, 0
        %v4141 = vsel %vm2346, %v4123, 0
        %v4144 = vsel %vm2346, %v4125, 0
        %4146 = vmatprep.subr.mxu0 0.0
        %4147 = vmatpush1.msra.mxu0 0.0
        %4148 = vmatprep.subr.mxu0 0.0
        %4149 = vmatpush1.msra.mxu0 0.0
        %4150 = vmatprep.subr.mxu0 0.0
        %4151 = vmatpush1.msra.mxu0 0.0
        %4152 = vmatprep.subr.mxu0 0.0
        %4153 = vmatpush1.msra.mxu0 0.0
        %4154 = vmatprep.subr.mxu0 0.0
        %4155 = vmatpush1.msra.mxu0 0.0
        %4156 = vmatprep.subr.mxu0 0.0
        %4157 = vmatpush1.msra.mxu0 0.0
        %4158 = vmatprep.subr.mxu0 0.0
        %4159 = vmatpush1.msra.mxu0 0.0
        %4160 = vmatprep.subr.mxu0 0.0
        %4161 = vmatpush1.msra.mxu0 0.0
        %4162 = vmatprep.subr.mxu0 0.0
        %4163 = vmatpush1.msra.mxu0 0.0
        %4164 = vmatprep.subr.mxu0 0.0
        %4165 = vmatpush1.msra.mxu0 0.0
        %4166 = vmatprep.subr.mxu0 0.0
        %4167 = vmatpush1.msra.mxu0 0.0
        %4168 = vmatprep.subr.mxu0 0.0
        %4169 = vmatpush1.msra.mxu0 0.0
        %4170 = vmatprep.subr.mxu0 0.0
        %4171 = vmatpush1.msra.mxu0 %v4130
        %4172 = vmatprep.subr.mxu0 0.0
        %4173 = vmatpush1.msra.mxu0 %v4129
        %4174 = vmatprep.subr.mxu0 0.0
        %4175 = vmatpush1.msra.mxu0 %v4128
        %4176 = vmatprep.subr.mxu0 0.0
        %4177 = vmatpush1.msra.mxu0 %v4127
        %4178 = vmatprep.subr.mxu0 0.0
        %4179 = vmatpush2.msra.mxu0 0.0
        %4180 = vmatprep.subr.mxu0 0.0
        %4181 = vmatpush2.msra.mxu0 0.0
        %4182 = vmatprep.subr.mxu0 0.0
        %4183 = vmatpush2.msra.mxu0 0.0
        %4184 = vmatprep.subr.mxu0 0.0
        %4185 = vmatpush2.msra.mxu0 0.0
        %4186 = vmatprep.subr.mxu0 0.0
        %4187 = vmatpush2.msra.mxu0 0.0
        %4188 = vmatprep.subr.mxu0 0.0
        %4189 = vmatpush2.msra.mxu0 0.0
        %4190 = vmatprep.subr.mxu0 0.0
        %4191 = vmatpush2.msra.mxu0 0.0
        %4192 = vmatprep.subr.mxu0 0.0
        %4193 = vmatpush2.msra.mxu0 0.0
        %4194 = vmatprep.subr.mxu0 0.0
        %4195 = vmatpush2.msra.mxu0 0.0
        %4196 = vmatprep.subr.mxu0 0.0
        %4197 = vmatpush2.msra.mxu0 0.0
        %4198 = vmatprep.subr.mxu0 0.0
        %4199 = vmatpush2.msra.mxu0 0.0
        %4200 = vmatprep.subr.mxu0 0.0
        %4201 = vmatpush2.msra.mxu0 0.0
        %4202 = vmatprep.subr.mxu0 0.0
        %4203 = vmatpush2.msra.mxu0 0.0
        %4204 = vmatprep.subr.mxu0 0.0
        %4205 = vmatpush2.msra.mxu0 0.0
        %4206 = vmatprep.subr.mxu0 0.0
        %4207 = vmatpush2.msra.mxu0 0.0
        %4208 = vmatprep.subr.mxu0 0.0
        %4209 = vmatpush2.msra.mxu0 0.0
        %4210 = vmatprep.mubr.f32.mxu0 0.0
        %4211 = vmatmul.mubr.f32.gmra.mxu0 %v4132
        %v4212 = vpop.f32.mrf.mxu0
        %v4213 = vadd.f32 0.0, %v4212
        %v4214 = vpop.f32.mrf.mxu0
        %4215 = vmatprep.mubr.f32.mxu0 0.0
        %4216 = vmatmul.mubr.f32.gmra.mxu0 %v4135
        %v4217 = vpop.f32.mrf.mxu0
        %v4218 = vadd.f32 0.0, %v4217
        %v4219 = vpop.f32.mrf.mxu0
        %4220 = vmatprep.mubr.f32.mxu0 0.0
        %4221 = vmatmul.mubr.f32.gmra.mxu0 %v4138
        %v4222 = vpop.f32.mrf.mxu0
        %v4223 = vadd.f32 0.0, %v4222
        %v4224 = vpop.f32.mrf.mxu0
        %4225 = vmatprep.mubr.f32.mxu0 0.0
        %4226 = vmatmul.mubr.f32.gmra.mxu0 %v4141
        %v4227 = vpop.f32.mrf.mxu0
        %v4228 = vadd.f32 0.0, %v4227
        %v4229 = vpop.f32.mrf.mxu0
        %4230 = vmatprep.mubr.f32.mxu0 0.0
        %4231 = vmatmul.mubr.f32.gmra.mxu0 %v4144
        %v4232 = vpop.f32.mrf.mxu0
        %v4233 = vadd.f32 0.0, %v4232
        %v4234 = vpop.f32.mrf.mxu0
        %4235 = vdwg.mxu0
        %v4236 = vadd.f32 %v4111, %v4213
        %v4237 = vadd.f32 %v4112, %v4218
        %v4238 = vadd.f32 %v4113, %v4223
        %v4239 = vadd.f32 %v4114, %v4228
        %v4240 = vadd.f32 %v4115, %v4233
        %v4241 = vld [vmem:[%s7] sm:$0x1]
        %v4243 = vlaneseq
        %v4244 = vshrl.u32 %v4243, 7
        %v4245 = vsub.s32 0, %v4244
        %v4246 = vrot.slane %v4241, %v4245
        %v4248 = vadd.f32 %v4236, %v4246
        %v4249 = vadd.f32 %v4237, %v4246
        %v4250 = vadd.f32 %v4238, %v4246
        %v4251 = vadd.f32 %v4239, %v4246
        %v4252 = vadd.f32 %v4240, %v4246
        %v4253 = vmul.f32 %v4248, 0.3
        %v4254 = vmul.f32 %v4249, 0.3
        %v4255 = vmul.f32 %v4250, 0.3
        %v4256 = vmul.f32 %v4251, 0.3
        %v4257 = vmul.f32 %v4252, 0.3
        %v4258 = vmax.f32 %v4248, %v4253
        %v4259 = vmax.f32 %v4249, %v4254
        %v4260 = vmax.f32 %v4250, %v4255
        %v4261 = vmax.f32 %v4251, %v4256
        %v4262 = vmax.f32 %v4252, %v4257
        %vm4263 = vcmask 523264
        %4264 = vst.msk [vmem:[#allocation4] sm:$0xff] %vm4263, %v4258
        %4265 = vst.msk [vmem:[#allocation4 + $0x8] sm:$0xff] %vm4263, %v4259
        %4266 = vst.msk [vmem:[#allocation4 + $0x10] sm:$0xff] %vm4263, %v4260
        %4267 = vst.msk [vmem:[#allocation4 + $0x18] sm:$0xff] %vm4263, %v4261
        %vm4268 = vcmask 521216
        %4269 = vst.msk [vmem:[#allocation4 + $0x20] sm:$0x3f] %vm4268, %v4262
        %v4270 = vld [vmem:[#allocation4] ss:$6 sm:$0xf]
        %v4271 = vld [vmem:[%s8] sm:$0xff]
        %v4272 = vld [vmem:[%s8 + $0x8] sm:$0xff]
        %v4273 = vld [vmem:[%s8 + $0x10] sm:$0xff]
        %v4274 = vld [vmem:[%s8 + $0x18] sm:$0xff]
        %v4275 = vld [vmem:[%s8 + $0x20] sm:$0xff]
        %v4276 = vld [vmem:[%s8 + $0x28] sm:$0xff]
        %v4277 = vld [vmem:[%s8 + $0x30] sm:$0xff]
        %v4278 = vld [vmem:[%s8 + $0x38] sm:$0xff]
        %s4279 = scalar_lea.vmem [#allocation4], 1
        %v4280 = vld [vmem:[%s4279] ss:$6 sm:$0xf]
        %s4281 = scalar_lea.vmem %s8, 64
        %v4282 = vld [vmem:[%s4281] sm:$0xff]
        %v4283 = vld [vmem:[%s4281 + $0x8] sm:$0xff]
        %v4284 = vld [vmem:[%s4281 + $0x10] sm:$0xff]
        %v4285 = vld [vmem:[%s4281 + $0x18] sm:$0xff]
        %v4286 = vld [vmem:[%s4281 + $0x20] sm:$0xff]
        %v4287 = vld [vmem:[%s4281 + $0x28] sm:$0xff]
        %v4288 = vld [vmem:[%s4281 + $0x30] sm:$0xff]
        %v4289 = vld [vmem:[%s4281 + $0x38] sm:$0xff]
        %v4291 = vsel %vm4263, %v4280, 0
        %4293 = vmatprep.subr.mxu0 0.0
        %4294 = vmatpush1.msra.mxu0 0.0
        %4295 = vmatprep.subr.mxu0 0.0
        %4296 = vmatpush1.msra.mxu0 0.0
        %4297 = vmatprep.subr.mxu0 0.0
        %4298 = vmatpush1.msra.mxu0 0.0
        %4299 = vmatprep.subr.mxu0 0.0
        %4300 = vmatpush1.msra.mxu0 0.0
        %4301 = vmatprep.subr.mxu0 0.0
        %4302 = vmatpush1.msra.mxu0 0.0
        %4303 = vmatprep.subr.mxu0 0.0
        %4304 = vmatpush1.msra.mxu0 0.0
        %4305 = vmatprep.subr.mxu0 0.0
        %4306 = vmatpush1.msra.mxu0 0.0
        %4307 = vmatprep.subr.mxu0 0.0
        %4308 = vmatpush1.msra.mxu0 0.0
        %4309 = vmatprep.subr.mxu0 0.0
        %4310 = vmatpush1.msra.mxu0 %v4289
        %4311 = vmatprep.subr.mxu0 0.0
        %4312 = vmatpush1.msra.mxu0 %v4288
        %4313 = vmatprep.subr.mxu0 0.0
        %4314 = vmatpush1.msra.mxu0 %v4287
        %4315 = vmatprep.subr.mxu0 0.0
        %4316 = vmatpush1.msra.mxu0 %v4286
        %4317 = vmatprep.subr.mxu0 0.0
        %4318 = vmatpush1.msra.mxu0 %v4285
        %4319 = vmatprep.subr.mxu0 0.0
        %4320 = vmatpush1.msra.mxu0 %v4284
        %4321 = vmatprep.subr.mxu0 0.0
        %4322 = vmatpush1.msra.mxu0 %v4283
        %4323 = vmatprep.subr.mxu0 0.0
        %4324 = vmatpush1.msra.mxu0 %v4282
        %4325 = vmatprep.subr.mxu0 0.0
        %4326 = vmatpush2.msra.mxu0 0.0
        %4327 = vmatprep.subr.mxu0 0.0
        %4328 = vmatpush2.msra.mxu0 0.0
        %4329 = vmatprep.subr.mxu0 0.0
        %4330 = vmatpush2.msra.mxu0 0.0
        %4331 = vmatprep.subr.mxu0 0.0
        %4332 = vmatpush2.msra.mxu0 0.0
        %4333 = vmatprep.subr.mxu0 0.0
        %4334 = vmatpush2.msra.mxu0 0.0
        %4335 = vmatprep.subr.mxu0 0.0
        %4336 = vmatpush2.msra.mxu0 0.0
        %4337 = vmatprep.subr.mxu0 0.0
        %4338 = vmatpush2.msra.mxu0 0.0
        %4339 = vmatprep.subr.mxu0 0.0
        %4340 = vmatpush2.msra.mxu0 0.0
        %4341 = vmatprep.subr.mxu0 0.0
        %4342 = vmatpush2.msra.mxu0 0.0
        %4343 = vmatprep.subr.mxu0 0.0
        %4344 = vmatpush2.msra.mxu0 0.0
        %4345 = vmatprep.subr.mxu0 0.0
        %4346 = vmatpush2.msra.mxu0 0.0
        %4347 = vmatprep.subr.mxu0 0.0
        %4348 = vmatpush2.msra.mxu0 0.0
        %4349 = vmatprep.subr.mxu0 0.0
        %4350 = vmatpush2.msra.mxu0 0.0
        %4351 = vmatprep.subr.mxu0 0.0
        %4352 = vmatpush2.msra.mxu0 0.0
        %4353 = vmatprep.subr.mxu0 0.0
        %4354 = vmatpush2.msra.mxu0 0.0
        %4355 = vmatprep.subr.mxu0 0.0
        %4356 = vmatpush2.msra.mxu0 0.0
        %4357 = vmatprep.mubr.f32.mxu0 0.0
        %4358 = vmatmul.mubr.f32.gmra.mxu0 %v4291
        %v4359 = vpop.f32.mrf.mxu0
        %v4360 = vadd.f32 0.0, %v4359
        %v4361 = vpop.f32.mrf.mxu0
        %4362 = vdwg.mxu0
        %v4364 = vsel %vm4263, %v4270, 0
        %4366 = vmatprep.subr.mxu0 0.0
        %4367 = vmatpush1.msra.mxu0 0.0
        %4368 = vmatprep.subr.mxu0 0.0
        %4369 = vmatpush1.msra.mxu0 0.0
        %4370 = vmatprep.subr.mxu0 0.0
        %4371 = vmatpush1.msra.mxu0 0.0
        %4372 = vmatprep.subr.mxu0 0.0
        %4373 = vmatpush1.msra.mxu0 0.0
        %4374 = vmatprep.subr.mxu0 0.0
        %4375 = vmatpush1.msra.mxu0 0.0
        %4376 = vmatprep.subr.mxu0 0.0
        %4377 = vmatpush1.msra.mxu0 0.0
        %4378 = vmatprep.subr.mxu0 0.0
        %4379 = vmatpush1.msra.mxu0 0.0
        %4380 = vmatprep.subr.mxu0 0.0
        %4381 = vmatpush1.msra.mxu0 0.0
        %4382 = vmatprep.subr.mxu0 0.0
        %4383 = vmatpush1.msra.mxu0 %v4278
        %4384 = vmatprep.subr.mxu0 0.0
        %4385 = vmatpush1.msra.mxu0 %v4277
        %4386 = vmatprep.subr.mxu0 0.0
        %4387 = vmatpush1.msra.mxu0 %v4276
        %4388 = vmatprep.subr.mxu0 0.0
        %4389 = vmatpush1.msra.mxu0 %v4275
        %4390 = vmatprep.subr.mxu0 0.0
        %4391 = vmatpush1.msra.mxu0 %v4274
        %4392 = vmatprep.subr.mxu0 0.0
        %4393 = vmatpush1.msra.mxu0 %v4273
        %4394 = vmatprep.subr.mxu0 0.0
        %4395 = vmatpush1.msra.mxu0 %v4272
        %4396 = vmatprep.subr.mxu0 0.0
        %4397 = vmatpush1.msra.mxu0 %v4271
        %4398 = vmatprep.subr.mxu0 0.0
        %4399 = vmatpush2.msra.mxu0 0.0
        %4400 = vmatprep.subr.mxu0 0.0
        %4401 = vmatpush2.msra.mxu0 0.0
        %4402 = vmatprep.subr.mxu0 0.0
        %4403 = vmatpush2.msra.mxu0 0.0
        %4404 = vmatprep.subr.mxu0 0.0
        %4405 = vmatpush2.msra.mxu0 0.0
        %4406 = vmatprep.subr.mxu0 0.0
        %4407 = vmatpush2.msra.mxu0 0.0
        %4408 = vmatprep.subr.mxu0 0.0
        %4409 = vmatpush2.msra.mxu0 0.0
        %4410 = vmatprep.subr.mxu0 0.0
        %4411 = vmatpush2.msra.mxu0 0.0
        %4412 = vmatprep.subr.mxu0 0.0
        %4413 = vmatpush2.msra.mxu0 0.0
        %4414 = vmatprep.subr.mxu0 0.0
        %4415 = vmatpush2.msra.mxu0 0.0
        %4416 = vmatprep.subr.mxu0 0.0
        %4417 = vmatpush2.msra.mxu0 0.0
        %4418 = vmatprep.subr.mxu0 0.0
        %4419 = vmatpush2.msra.mxu0 0.0
        %4420 = vmatprep.subr.mxu0 0.0
        %4421 = vmatpush2.msra.mxu0 0.0
        %4422 = vmatprep.subr.mxu0 0.0
        %4423 = vmatpush2.msra.mxu0 0.0
        %4424 = vmatprep.subr.mxu0 0.0
        %4425 = vmatpush2.msra.mxu0 0.0
        %4426 = vmatprep.subr.mxu0 0.0
        %4427 = vmatpush2.msra.mxu0 0.0
        %4428 = vmatprep.subr.mxu0 0.0
        %4429 = vmatpush2.msra.mxu0 0.0
        %4430 = vmatprep.mubr.f32.mxu0 0.0
        %4431 = vmatmul.mubr.f32.gmra.mxu0 %v4364
        %v4432 = vpop.f32.mrf.mxu0
        %v4433 = vadd.f32 %v4360, %v4432
        %v4434 = vpop.f32.mrf.mxu0
        %4435 = vdwg.mxu0
        %s4436 = scalar_lea.vmem [#allocation4], 2
        %v4437 = vld [vmem:[%s4436] ss:$6 sm:$0xf]
        %s4438 = scalar_lea.vmem %s8, 128
        %v4439 = vld [vmem:[%s4438] sm:$0xff]
        %v4440 = vld [vmem:[%s4438 + $0x8] sm:$0xff]
        %v4441 = vld [vmem:[%s4438 + $0x10] sm:$0xff]
        %v4442 = vld [vmem:[%s4438 + $0x18] sm:$0xff]
        %v4443 = vld [vmem:[%s4438 + $0x20] sm:$0xff]
        %v4444 = vld [vmem:[%s4438 + $0x28] sm:$0xff]
        %v4445 = vld [vmem:[%s4438 + $0x30] sm:$0xff]
        %v4446 = vld [vmem:[%s4438 + $0x38] sm:$0xff]
        %v4448 = vsel %vm4263, %v4437, 0
        %4450 = vmatprep.subr.mxu0 0.0
        %4451 = vmatpush1.msra.mxu0 0.0
        %4452 = vmatprep.subr.mxu0 0.0
        %4453 = vmatpush1.msra.mxu0 0.0
        %4454 = vmatprep.subr.mxu0 0.0
        %4455 = vmatpush1.msra.mxu0 0.0
        %4456 = vmatprep.subr.mxu0 0.0
        %4457 = vmatpush1.msra.mxu0 0.0
        %4458 = vmatprep.subr.mxu0 0.0
        %4459 = vmatpush1.msra.mxu0 0.0
        %4460 = vmatprep.subr.mxu0 0.0
        %4461 = vmatpush1.msra.mxu0 0.0
        %4462 = vmatprep.subr.mxu0 0.0
        %4463 = vmatpush1.msra.mxu0 0.0
        %4464 = vmatprep.subr.mxu0 0.0
        %4465 = vmatpush1.msra.mxu0 0.0
        %4466 = vmatprep.subr.mxu0 0.0
        %4467 = vmatpush1.msra.mxu0 %v4446
        %4468 = vmatprep.subr.mxu0 0.0
        %4469 = vmatpush1.msra.mxu0 %v4445
        %4470 = vmatprep.subr.mxu0 0.0
        %4471 = vmatpush1.msra.mxu0 %v4444
        %4472 = vmatprep.subr.mxu0 0.0
        %4473 = vmatpush1.msra.mxu0 %v4443
        %4474 = vmatprep.subr.mxu0 0.0
        %4475 = vmatpush1.msra.mxu0 %v4442
        %4476 = vmatprep.subr.mxu0 0.0
        %4477 = vmatpush1.msra.mxu0 %v4441
        %4478 = vmatprep.subr.mxu0 0.0
        %4479 = vmatpush1.msra.mxu0 %v4440
        %4480 = vmatprep.subr.mxu0 0.0
        %4481 = vmatpush1.msra.mxu0 %v4439
        %4482 = vmatprep.subr.mxu0 0.0
        %4483 = vmatpush2.msra.mxu0 0.0
        %4484 = vmatprep.subr.mxu0 0.0
        %4485 = vmatpush2.msra.mxu0 0.0
        %4486 = vmatprep.subr.mxu0 0.0
        %4487 = vmatpush2.msra.mxu0 0.0
        %4488 = vmatprep.subr.mxu0 0.0
        %4489 = vmatpush2.msra.mxu0 0.0
        %4490 = vmatprep.subr.mxu0 0.0
        %4491 = vmatpush2.msra.mxu0 0.0
        %4492 = vmatprep.subr.mxu0 0.0
        %4493 = vmatpush2.msra.mxu0 0.0
        %4494 = vmatprep.subr.mxu0 0.0
        %4495 = vmatpush2.msra.mxu0 0.0
        %4496 = vmatprep.subr.mxu0 0.0
        %4497 = vmatpush2.msra.mxu0 0.0
        %4498 = vmatprep.subr.mxu0 0.0
        %4499 = vmatpush2.msra.mxu0 0.0
        %4500 = vmatprep.subr.mxu0 0.0
        %4501 = vmatpush2.msra.mxu0 0.0
        %4502 = vmatprep.subr.mxu0 0.0
        %4503 = vmatpush2.msra.mxu0 0.0
        %4504 = vmatprep.subr.mxu0 0.0
        %4505 = vmatpush2.msra.mxu0 0.0
        %4506 = vmatprep.subr.mxu0 0.0
        %4507 = vmatpush2.msra.mxu0 0.0
        %4508 = vmatprep.subr.mxu0 0.0
        %4509 = vmatpush2.msra.mxu0 0.0
        %4510 = vmatprep.subr.mxu0 0.0
        %4511 = vmatpush2.msra.mxu0 0.0
        %4512 = vmatprep.subr.mxu0 0.0
        %4513 = vmatpush2.msra.mxu0 0.0
        %4514 = vmatprep.mubr.f32.mxu0 0.0
        %4515 = vmatmul.mubr.f32.gmra.mxu0 %v4448
        %v4516 = vpop.f32.mrf.mxu0
        %v4517 = vadd.f32 0.0, %v4516
        %v4518 = vpop.f32.mrf.mxu0
        %4519 = vdwg.mxu0
        %v4520 = vadd.f32 %v4433, %v4517
        %s4521 = scalar_lea.vmem [#allocation4], 3
        %v4522 = vld [vmem:[%s4521] ss:$6 sm:$0xf]
        %s4523 = scalar_lea.vmem %s8, 192
        %v4524 = vld [vmem:[%s4523] sm:$0xff]
        %v4525 = vld [vmem:[%s4523 + $0x8] sm:$0xff]
        %v4526 = vld [vmem:[%s4523 + $0x10] sm:$0xff]
        %v4527 = vld [vmem:[%s4523 + $0x18] sm:$0xff]
        %v4528 = vld [vmem:[%s4523 + $0x20] sm:$0xff]
        %v4529 = vld [vmem:[%s4523 + $0x28] sm:$0xff]
        %v4530 = vld [vmem:[%s4523 + $0x30] sm:$0xff]
        %v4531 = vld [vmem:[%s4523 + $0x38] sm:$0xff]
        %v4533 = vsel %vm4263, %v4522, 0
        %4535 = vmatprep.subr.mxu0 0.0
        %4536 = vmatpush1.msra.mxu0 0.0
        %4537 = vmatprep.subr.mxu0 0.0
        %4538 = vmatpush1.msra.mxu0 0.0
        %4539 = vmatprep.subr.mxu0 0.0
        %4540 = vmatpush1.msra.mxu0 0.0
        %4541 = vmatprep.subr.mxu0 0.0
        %4542 = vmatpush1.msra.mxu0 0.0
        %4543 = vmatprep.subr.mxu0 0.0
        %4544 = vmatpush1.msra.mxu0 0.0
        %4545 = vmatprep.subr.mxu0 0.0
        %4546 = vmatpush1.msra.mxu0 0.0
        %4547 = vmatprep.subr.mxu0 0.0
        %4548 = vmatpush1.msra.mxu0 0.0
        %4549 = vmatprep.subr.mxu0 0.0
        %4550 = vmatpush1.msra.mxu0 0.0
        %4551 = vmatprep.subr.mxu0 0.0
        %4552 = vmatpush1.msra.mxu0 %v4531
        %4553 = vmatprep.subr.mxu0 0.0
        %4554 = vmatpush1.msra.mxu0 %v4530
        %4555 = vmatprep.subr.mxu0 0.0
        %4556 = vmatpush1.msra.mxu0 %v4529
        %4557 = vmatprep.subr.mxu0 0.0
        %4558 = vmatpush1.msra.mxu0 %v4528
        %4559 = vmatprep.subr.mxu0 0.0
        %4560 = vmatpush1.msra.mxu0 %v4527
        %4561 = vmatprep.subr.mxu0 0.0
        %4562 = vmatpush1.msra.mxu0 %v4526
        %4563 = vmatprep.subr.mxu0 0.0
        %4564 = vmatpush1.msra.mxu0 %v4525
        %4565 = vmatprep.subr.mxu0 0.0
        %4566 = vmatpush1.msra.mxu0 %v4524
        %4567 = vmatprep.subr.mxu0 0.0
        %4568 = vmatpush2.msra.mxu0 0.0
        %4569 = vmatprep.subr.mxu0 0.0
        %4570 = vmatpush2.msra.mxu0 0.0
        %4571 = vmatprep.subr.mxu0 0.0
        %4572 = vmatpush2.msra.mxu0 0.0
        %4573 = vmatprep.subr.mxu0 0.0
        %4574 = vmatpush2.msra.mxu0 0.0
        %4575 = vmatprep.subr.mxu0 0.0
        %4576 = vmatpush2.msra.mxu0 0.0
        %4577 = vmatprep.subr.mxu0 0.0
        %4578 = vmatpush2.msra.mxu0 0.0
        %4579 = vmatprep.subr.mxu0 0.0
        %4580 = vmatpush2.msra.mxu0 0.0
        %4581 = vmatprep.subr.mxu0 0.0
        %4582 = vmatpush2.msra.mxu0 0.0
        %4583 = vmatprep.subr.mxu0 0.0
        %4584 = vmatpush2.msra.mxu0 0.0
        %4585 = vmatprep.subr.mxu0 0.0
        %4586 = vmatpush2.msra.mxu0 0.0
        %4587 = vmatprep.subr.mxu0 0.0
        %4588 = vmatpush2.msra.mxu0 0.0
        %4589 = vmatprep.subr.mxu0 0.0
        %4590 = vmatpush2.msra.mxu0 0.0
        %4591 = vmatprep.subr.mxu0 0.0
        %4592 = vmatpush2.msra.mxu0 0.0
        %4593 = vmatprep.subr.mxu0 0.0
        %4594 = vmatpush2.msra.mxu0 0.0
        %4595 = vmatprep.subr.mxu0 0.0
        %4596 = vmatpush2.msra.mxu0 0.0
        %4597 = vmatprep.subr.mxu0 0.0
        %4598 = vmatpush2.msra.mxu0 0.0
        %4599 = vmatprep.mubr.f32.mxu0 0.0
        %4600 = vmatmul.mubr.f32.gmra.mxu0 %v4533
        %v4601 = vpop.f32.mrf.mxu0
        %v4602 = vadd.f32 0.0, %v4601
        %v4603 = vpop.f32.mrf.mxu0
        %4604 = vdwg.mxu0
        %v4605 = vadd.f32 %v4520, %v4602
        %s4606 = scalar_lea.vmem [#allocation4], 4
        %v4607 = vld [vmem:[%s4606] ss:$6 sm:$0xf]
        %s4608 = scalar_lea.vmem %s8, 256
        %v4609 = vld [vmem:[%s4608] sm:$0xff]
        %v4610 = vld [vmem:[%s4608 + $0x8] sm:$0xff]
        %v4611 = vld [vmem:[%s4608 + $0x10] sm:$0xff]
        %v4612 = vld [vmem:[%s4608 + $0x18] sm:$0xff]
        %v4613 = vld [vmem:[%s4608 + $0x20] sm:$0xff]
        %v4614 = vld [vmem:[%s4608 + $0x28] sm:$0xff]
        %v4615 = vld [vmem:[%s4608 + $0x30] sm:$0xff]
        %v4616 = vld [vmem:[%s4608 + $0x38] sm:$0xff]
        %v4618 = vsel %vm4263, %v4607, 0
        %4620 = vmatprep.subr.mxu0 0.0
        %4621 = vmatpush1.msra.mxu0 0.0
        %4622 = vmatprep.subr.mxu0 0.0
        %4623 = vmatpush1.msra.mxu0 0.0
        %4624 = vmatprep.subr.mxu0 0.0
        %4625 = vmatpush1.msra.mxu0 0.0
        %4626 = vmatprep.subr.mxu0 0.0
        %4627 = vmatpush1.msra.mxu0 0.0
        %4628 = vmatprep.subr.mxu0 0.0
        %4629 = vmatpush1.msra.mxu0 0.0
        %4630 = vmatprep.subr.mxu0 0.0
        %4631 = vmatpush1.msra.mxu0 0.0
        %4632 = vmatprep.subr.mxu0 0.0
        %4633 = vmatpush1.msra.mxu0 0.0
        %4634 = vmatprep.subr.mxu0 0.0
        %4635 = vmatpush1.msra.mxu0 0.0
        %4636 = vmatprep.subr.mxu0 0.0
        %4637 = vmatpush1.msra.mxu0 %v4616
        %4638 = vmatprep.subr.mxu0 0.0
        %4639 = vmatpush1.msra.mxu0 %v4615
        %4640 = vmatprep.subr.mxu0 0.0
        %4641 = vmatpush1.msra.mxu0 %v4614
        %4642 = vmatprep.subr.mxu0 0.0
        %4643 = vmatpush1.msra.mxu0 %v4613
        %4644 = vmatprep.subr.mxu0 0.0
        %4645 = vmatpush1.msra.mxu0 %v4612
        %4646 = vmatprep.subr.mxu0 0.0
        %4647 = vmatpush1.msra.mxu0 %v4611
        %4648 = vmatprep.subr.mxu0 0.0
        %4649 = vmatpush1.msra.mxu0 %v4610
        %4650 = vmatprep.subr.mxu0 0.0
        %4651 = vmatpush1.msra.mxu0 %v4609
        %4652 = vmatprep.subr.mxu0 0.0
        %4653 = vmatpush2.msra.mxu0 0.0
        %4654 = vmatprep.subr.mxu0 0.0
        %4655 = vmatpush2.msra.mxu0 0.0
        %4656 = vmatprep.subr.mxu0 0.0
        %4657 = vmatpush2.msra.mxu0 0.0
        %4658 = vmatprep.subr.mxu0 0.0
        %4659 = vmatpush2.msra.mxu0 0.0
        %4660 = vmatprep.subr.mxu0 0.0
        %4661 = vmatpush2.msra.mxu0 0.0
        %4662 = vmatprep.subr.mxu0 0.0
        %4663 = vmatpush2.msra.mxu0 0.0
        %4664 = vmatprep.subr.mxu0 0.0
        %4665 = vmatpush2.msra.mxu0 0.0
        %4666 = vmatprep.subr.mxu0 0.0
        %4667 = vmatpush2.msra.mxu0 0.0
        %4668 = vmatprep.subr.mxu0 0.0
        %4669 = vmatpush2.msra.mxu0 0.0
        %4670 = vmatprep.subr.mxu0 0.0
        %4671 = vmatpush2.msra.mxu0 0.0
        %4672 = vmatprep.subr.mxu0 0.0
        %4673 = vmatpush2.msra.mxu0 0.0
        %4674 = vmatprep.subr.mxu0 0.0
        %4675 = vmatpush2.msra.mxu0 0.0
        %4676 = vmatprep.subr.mxu0 0.0
        %4677 = vmatpush2.msra.mxu0 0.0
        %4678 = vmatprep.subr.mxu0 0.0
        %4679 = vmatpush2.msra.mxu0 0.0
        %4680 = vmatprep.subr.mxu0 0.0
        %4681 = vmatpush2.msra.mxu0 0.0
        %4682 = vmatprep.subr.mxu0 0.0
        %4683 = vmatpush2.msra.mxu0 0.0
        %4684 = vmatprep.mubr.f32.mxu0 0.0
        %4685 = vmatmul.mubr.f32.gmra.mxu0 %v4618
        %v4686 = vpop.f32.mrf.mxu0
        %v4687 = vadd.f32 0.0, %v4686
        %v4688 = vpop.f32.mrf.mxu0
        %4689 = vdwg.mxu0
        %v4690 = vadd.f32 %v4605, %v4687
        %s4691 = scalar_lea.vmem [#allocation4], 5
        %v4692 = vld [vmem:[%s4691] ss:$6 sm:$0xf]
        %s4693 = scalar_lea.vmem %s8, 320
        %v4694 = vld [vmem:[%s4693] sm:$0xff]
        %v4695 = vld [vmem:[%s4693 + $0x8] sm:$0xff]
        %v4696 = vld [vmem:[%s4693 + $0x10] sm:$0xff]
        %v4697 = vld [vmem:[%s4693 + $0x18] sm:$0xff]
        %v4698 = vld [vmem:[%s4693 + $0x20] sm:$0xff]
        %v4699 = vld [vmem:[%s4693 + $0x28] sm:$0xff]
        %v4700 = vld [vmem:[%s4693 + $0x30] sm:$0xff]
        %v4701 = vld [vmem:[%s4693 + $0x38] sm:$0xff]
        %v4703 = vsel %vm4263, %v4692, 0
        %4705 = vmatprep.subr.mxu0 0.0
        %4706 = vmatpush1.msra.mxu0 0.0
        %4707 = vmatprep.subr.mxu0 0.0
        %4708 = vmatpush1.msra.mxu0 0.0
        %4709 = vmatprep.subr.mxu0 0.0
        %4710 = vmatpush1.msra.mxu0 0.0
        %4711 = vmatprep.subr.mxu0 0.0
        %4712 = vmatpush1.msra.mxu0 0.0
        %4713 = vmatprep.subr.mxu0 0.0
        %4714 = vmatpush1.msra.mxu0 0.0
        %4715 = vmatprep.subr.mxu0 0.0
        %4716 = vmatpush1.msra.mxu0 0.0
        %4717 = vmatprep.subr.mxu0 0.0
        %4718 = vmatpush1.msra.mxu0 0.0
        %4719 = vmatprep.subr.mxu0 0.0
        %4720 = vmatpush1.msra.mxu0 0.0
        %4721 = vmatprep.subr.mxu0 0.0
        %4722 = vmatpush1.msra.mxu0 %v4701
        %4723 = vmatprep.subr.mxu0 0.0
        %4724 = vmatpush1.msra.mxu0 %v4700
        %4725 = vmatprep.subr.mxu0 0.0
        %4726 = vmatpush1.msra.mxu0 %v4699
        %4727 = vmatprep.subr.mxu0 0.0
        %4728 = vmatpush1.msra.mxu0 %v4698
        %4729 = vmatprep.subr.mxu0 0.0
        %4730 = vmatpush1.msra.mxu0 %v4697
        %4731 = vmatprep.subr.mxu0 0.0
        %4732 = vmatpush1.msra.mxu0 %v4696
        %4733 = vmatprep.subr.mxu0 0.0
        %4734 = vmatpush1.msra.mxu0 %v4695
        %4735 = vmatprep.subr.mxu0 0.0
        %4736 = vmatpush1.msra.mxu0 %v4694
        %4737 = vmatprep.subr.mxu0 0.0
        %4738 = vmatpush2.msra.mxu0 0.0
        %4739 = vmatprep.subr.mxu0 0.0
        %4740 = vmatpush2.msra.mxu0 0.0
        %4741 = vmatprep.subr.mxu0 0.0
        %4742 = vmatpush2.msra.mxu0 0.0
        %4743 = vmatprep.subr.mxu0 0.0
        %4744 = vmatpush2.msra.mxu0 0.0
        %4745 = vmatprep.subr.mxu0 0.0
        %4746 = vmatpush2.msra.mxu0 0.0
        %4747 = vmatprep.subr.mxu0 0.0
        %4748 = vmatpush2.msra.mxu0 0.0
        %4749 = vmatprep.subr.mxu0 0.0
        %4750 = vmatpush2.msra.mxu0 0.0
        %4751 = vmatprep.subr.mxu0 0.0
        %4752 = vmatpush2.msra.mxu0 0.0
        %4753 = vmatprep.subr.mxu0 0.0
        %4754 = vmatpush2.msra.mxu0 0.0
        %4755 = vmatprep.subr.mxu0 0.0
        %4756 = vmatpush2.msra.mxu0 0.0
        %4757 = vmatprep.subr.mxu0 0.0
        %4758 = vmatpush2.msra.mxu0 0.0
        %4759 = vmatprep.subr.mxu0 0.0
        %4760 = vmatpush2.msra.mxu0 0.0
        %4761 = vmatprep.subr.mxu0 0.0
        %4762 = vmatpush2.msra.mxu0 0.0
        %4763 = vmatprep.subr.mxu0 0.0
        %4764 = vmatpush2.msra.mxu0 0.0
        %4765 = vmatprep.subr.mxu0 0.0
        %4766 = vmatpush2.msra.mxu0 0.0
        %4767 = vmatprep.subr.mxu0 0.0
        %4768 = vmatpush2.msra.mxu0 0.0
        %4769 = vmatprep.mubr.f32.mxu0 0.0
        %4770 = vmatmul.mubr.f32.gmra.mxu0 %v4703
        %v4771 = vpop.f32.mrf.mxu0
        %v4772 = vadd.f32 0.0, %v4771
        %v4773 = vpop.f32.mrf.mxu0
        %4774 = vdwg.mxu0
        %v4775 = vadd.f32 %v4690, %v4772
        %s4776 = scalar_lea.vmem [#allocation4], 6
        %v4777 = vld [vmem:[%s4776] ss:$6 sm:$0xf]
        %s4778 = scalar_lea.vmem %s8, 384
        %v4779 = vld [vmem:[%s4778] sm:$0xff]
        %v4780 = vld [vmem:[%s4778 + $0x8] sm:$0xff]
        %v4781 = vld [vmem:[%s4778 + $0x10] sm:$0xff]
        %v4782 = vld [vmem:[%s4778 + $0x18] sm:$0xff]
        %v4783 = vld [vmem:[%s4778 + $0x20] sm:$0xff]
        %v4784 = vld [vmem:[%s4778 + $0x28] sm:$0xff]
        %v4785 = vld [vmem:[%s4778 + $0x30] sm:$0xff]
        %v4786 = vld [vmem:[%s4778 + $0x38] sm:$0xff]
        %v4788 = vsel %vm4263, %v4777, 0
        %4790 = vmatprep.subr.mxu0 0.0
        %4791 = vmatpush1.msra.mxu0 0.0
        %4792 = vmatprep.subr.mxu0 0.0
        %4793 = vmatpush1.msra.mxu0 0.0
        %4794 = vmatprep.subr.mxu0 0.0
        %4795 = vmatpush1.msra.mxu0 0.0
        %4796 = vmatprep.subr.mxu0 0.0
        %4797 = vmatpush1.msra.mxu0 0.0
        %4798 = vmatprep.subr.mxu0 0.0
        %4799 = vmatpush1.msra.mxu0 0.0
        %4800 = vmatprep.subr.mxu0 0.0
        %4801 = vmatpush1.msra.mxu0 0.0
        %4802 = vmatprep.subr.mxu0 0.0
        %4803 = vmatpush1.msra.mxu0 0.0
        %4804 = vmatprep.subr.mxu0 0.0
        %4805 = vmatpush1.msra.mxu0 0.0
        %4806 = vmatprep.subr.mxu0 0.0
        %4807 = vmatpush1.msra.mxu0 %v4786
        %4808 = vmatprep.subr.mxu0 0.0
        %4809 = vmatpush1.msra.mxu0 %v4785
        %4810 = vmatprep.subr.mxu0 0.0
        %4811 = vmatpush1.msra.mxu0 %v4784
        %4812 = vmatprep.subr.mxu0 0.0
        %4813 = vmatpush1.msra.mxu0 %v4783
        %4814 = vmatprep.subr.mxu0 0.0
        %4815 = vmatpush1.msra.mxu0 %v4782
        %4816 = vmatprep.subr.mxu0 0.0
        %4817 = vmatpush1.msra.mxu0 %v4781
        %4818 = vmatprep.subr.mxu0 0.0
        %4819 = vmatpush1.msra.mxu0 %v4780
        %4820 = vmatprep.subr.mxu0 0.0
        %4821 = vmatpush1.msra.mxu0 %v4779
        %4822 = vmatprep.subr.mxu0 0.0
        %4823 = vmatpush2.msra.mxu0 0.0
        %4824 = vmatprep.subr.mxu0 0.0
        %4825 = vmatpush2.msra.mxu0 0.0
        %4826 = vmatprep.subr.mxu0 0.0
        %4827 = vmatpush2.msra.mxu0 0.0
        %4828 = vmatprep.subr.mxu0 0.0
        %4829 = vmatpush2.msra.mxu0 0.0
        %4830 = vmatprep.subr.mxu0 0.0
        %4831 = vmatpush2.msra.mxu0 0.0
        %4832 = vmatprep.subr.mxu0 0.0
        %4833 = vmatpush2.msra.mxu0 0.0
        %4834 = vmatprep.subr.mxu0 0.0
        %4835 = vmatpush2.msra.mxu0 0.0
        %4836 = vmatprep.subr.mxu0 0.0
        %4837 = vmatpush2.msra.mxu0 0.0
        %4838 = vmatprep.subr.mxu0 0.0
        %4839 = vmatpush2.msra.mxu0 0.0
        %4840 = vmatprep.subr.mxu0 0.0
        %4841 = vmatpush2.msra.mxu0 0.0
        %4842 = vmatprep.subr.mxu0 0.0
        %4843 = vmatpush2.msra.mxu0 0.0
        %4844 = vmatprep.subr.mxu0 0.0
        %4845 = vmatpush2.msra.mxu0 0.0
        %4846 = vmatprep.subr.mxu0 0.0
        %4847 = vmatpush2.msra.mxu0 0.0
        %4848 = vmatprep.subr.mxu0 0.0
        %4849 = vmatpush2.msra.mxu0 0.0
        %4850 = vmatprep.subr.mxu0 0.0
        %4851 = vmatpush2.msra.mxu0 0.0
        %4852 = vmatprep.subr.mxu0 0.0
        %4853 = vmatpush2.msra.mxu0 0.0
        %4854 = vmatprep.mubr.f32.mxu0 0.0
        %4855 = vmatmul.mubr.f32.gmra.mxu0 %v4788
        %v4856 = vpop.f32.mrf.mxu0
        %v4857 = vadd.f32 0.0, %v4856
        %v4858 = vpop.f32.mrf.mxu0
        %4859 = vdwg.mxu0
        %v4860 = vadd.f32 %v4775, %v4857
        %s4861 = scalar_lea.vmem [#allocation4], 7
        %v4862 = vld [vmem:[%s4861] ss:$6 sm:$0xf]
        %s4863 = scalar_lea.vmem %s8, 448
        %v4864 = vld [vmem:[%s4863] sm:$0xff]
        %v4865 = vld [vmem:[%s4863 + $0x8] sm:$0xff]
        %v4866 = vld [vmem:[%s4863 + $0x10] sm:$0xff]
        %v4867 = vld [vmem:[%s4863 + $0x18] sm:$0xff]
        %v4868 = vld [vmem:[%s4863 + $0x20] sm:$0xff]
        %v4869 = vld [vmem:[%s4863 + $0x28] sm:$0xff]
        %v4870 = vld [vmem:[%s4863 + $0x30] sm:$0xff]
        %v4871 = vld [vmem:[%s4863 + $0x38] sm:$0xff]
        %v4873 = vsel %vm4263, %v4862, 0
        %4875 = vmatprep.subr.mxu0 0.0
        %4876 = vmatpush1.msra.mxu0 0.0
        %4877 = vmatprep.subr.mxu0 0.0
        %4878 = vmatpush1.msra.mxu0 0.0
        %4879 = vmatprep.subr.mxu0 0.0
        %4880 = vmatpush1.msra.mxu0 0.0
        %4881 = vmatprep.subr.mxu0 0.0
        %4882 = vmatpush1.msra.mxu0 0.0
        %4883 = vmatprep.subr.mxu0 0.0
        %4884 = vmatpush1.msra.mxu0 0.0
        %4885 = vmatprep.subr.mxu0 0.0
        %4886 = vmatpush1.msra.mxu0 0.0
        %4887 = vmatprep.subr.mxu0 0.0
        %4888 = vmatpush1.msra.mxu0 0.0
        %4889 = vmatprep.subr.mxu0 0.0
        %4890 = vmatpush1.msra.mxu0 0.0
        %4891 = vmatprep.subr.mxu0 0.0
        %4892 = vmatpush1.msra.mxu0 %v4871
        %4893 = vmatprep.subr.mxu0 0.0
        %4894 = vmatpush1.msra.mxu0 %v4870
        %4895 = vmatprep.subr.mxu0 0.0
        %4896 = vmatpush1.msra.mxu0 %v4869
        %4897 = vmatprep.subr.mxu0 0.0
        %4898 = vmatpush1.msra.mxu0 %v4868
        %4899 = vmatprep.subr.mxu0 0.0
        %4900 = vmatpush1.msra.mxu0 %v4867
        %4901 = vmatprep.subr.mxu0 0.0
        %4902 = vmatpush1.msra.mxu0 %v4866
        %4903 = vmatprep.subr.mxu0 0.0
        %4904 = vmatpush1.msra.mxu0 %v4865
        %4905 = vmatprep.subr.mxu0 0.0
        %4906 = vmatpush1.msra.mxu0 %v4864
        %4907 = vmatprep.subr.mxu0 0.0
        %4908 = vmatpush2.msra.mxu0 0.0
        %4909 = vmatprep.subr.mxu0 0.0
        %4910 = vmatpush2.msra.mxu0 0.0
        %4911 = vmatprep.subr.mxu0 0.0
        %4912 = vmatpush2.msra.mxu0 0.0
        %4913 = vmatprep.subr.mxu0 0.0
        %4914 = vmatpush2.msra.mxu0 0.0
        %4915 = vmatprep.subr.mxu0 0.0
        %4916 = vmatpush2.msra.mxu0 0.0
        %4917 = vmatprep.subr.mxu0 0.0
        %4918 = vmatpush2.msra.mxu0 0.0
        %4919 = vmatprep.subr.mxu0 0.0
        %4920 = vmatpush2.msra.mxu0 0.0
        %4921 = vmatprep.subr.mxu0 0.0
        %4922 = vmatpush2.msra.mxu0 0.0
        %4923 = vmatprep.subr.mxu0 0.0
        %4924 = vmatpush2.msra.mxu0 0.0
        %4925 = vmatprep.subr.mxu0 0.0
        %4926 = vmatpush2.msra.mxu0 0.0
        %4927 = vmatprep.subr.mxu0 0.0
        %4928 = vmatpush2.msra.mxu0 0.0
        %4929 = vmatprep.subr.mxu0 0.0
        %4930 = vmatpush2.msra.mxu0 0.0
        %4931 = vmatprep.subr.mxu0 0.0
        %4932 = vmatpush2.msra.mxu0 0.0
        %4933 = vmatprep.subr.mxu0 0.0
        %4934 = vmatpush2.msra.mxu0 0.0
        %4935 = vmatprep.subr.mxu0 0.0
        %4936 = vmatpush2.msra.mxu0 0.0
        %4937 = vmatprep.subr.mxu0 0.0
        %4938 = vmatpush2.msra.mxu0 0.0
        %4939 = vmatprep.mubr.f32.mxu0 0.0
        %4940 = vmatmul.mubr.f32.gmra.mxu0 %v4873
        %v4941 = vpop.f32.mrf.mxu0
        %v4942 = vadd.f32 0.0, %v4941
        %v4943 = vpop.f32.mrf.mxu0
        %4944 = vdwg.mxu0
        %v4945 = vadd.f32 %v4860, %v4942
        %s4946 = scalar_lea.vmem [#allocation4], 8
        %v4947 = vld [vmem:[%s4946] ss:$6 sm:$0xf]
        %s4948 = scalar_lea.vmem %s8, 512
        %v4949 = vld [vmem:[%s4948] sm:$0xff]
        %v4950 = vld [vmem:[%s4948 + $0x8] sm:$0xff]
        %v4951 = vld [vmem:[%s4948 + $0x10] sm:$0xff]
        %v4952 = vld [vmem:[%s4948 + $0x18] sm:$0xff]
        %v4953 = vld [vmem:[%s4948 + $0x20] sm:$0xff]
        %v4954 = vld [vmem:[%s4948 + $0x28] sm:$0xff]
        %v4955 = vld [vmem:[%s4948 + $0x30] sm:$0xff]
        %v4956 = vld [vmem:[%s4948 + $0x38] sm:$0xff]
        %v4958 = vsel %vm4263, %v4947, 0
        %4960 = vmatprep.subr.mxu0 0.0
        %4961 = vmatpush1.msra.mxu0 0.0
        %4962 = vmatprep.subr.mxu0 0.0
        %4963 = vmatpush1.msra.mxu0 0.0
        %4964 = vmatprep.subr.mxu0 0.0
        %4965 = vmatpush1.msra.mxu0 0.0
        %4966 = vmatprep.subr.mxu0 0.0
        %4967 = vmatpush1.msra.mxu0 0.0
        %4968 = vmatprep.subr.mxu0 0.0
        %4969 = vmatpush1.msra.mxu0 0.0
        %4970 = vmatprep.subr.mxu0 0.0
        %4971 = vmatpush1.msra.mxu0 0.0
        %4972 = vmatprep.subr.mxu0 0.0
        %4973 = vmatpush1.msra.mxu0 0.0
        %4974 = vmatprep.subr.mxu0 0.0
        %4975 = vmatpush1.msra.mxu0 0.0
        %4976 = vmatprep.subr.mxu0 0.0
        %4977 = vmatpush1.msra.mxu0 %v4956
        %4978 = vmatprep.subr.mxu0 0.0
        %4979 = vmatpush1.msra.mxu0 %v4955
        %4980 = vmatprep.subr.mxu0 0.0
        %4981 = vmatpush1.msra.mxu0 %v4954
        %4982 = vmatprep.subr.mxu0 0.0
        %4983 = vmatpush1.msra.mxu0 %v4953
        %4984 = vmatprep.subr.mxu0 0.0
        %4985 = vmatpush1.msra.mxu0 %v4952
        %4986 = vmatprep.subr.mxu0 0.0
        %4987 = vmatpush1.msra.mxu0 %v4951
        %4988 = vmatprep.subr.mxu0 0.0
        %4989 = vmatpush1.msra.mxu0 %v4950
        %4990 = vmatprep.subr.mxu0 0.0
        %4991 = vmatpush1.msra.mxu0 %v4949
        %4992 = vmatprep.subr.mxu0 0.0
        %4993 = vmatpush2.msra.mxu0 0.0
        %4994 = vmatprep.subr.mxu0 0.0
        %4995 = vmatpush2.msra.mxu0 0.0
        %4996 = vmatprep.subr.mxu0 0.0
        %4997 = vmatpush2.msra.mxu0 0.0
        %4998 = vmatprep.subr.mxu0 0.0
        %4999 = vmatpush2.msra.mxu0 0.0
        %5000 = vmatprep.subr.mxu0 0.0
        %5001 = vmatpush2.msra.mxu0 0.0
        %5002 = vmatprep.subr.mxu0 0.0
        %5003 = vmatpush2.msra.mxu0 0.0
        %5004 = vmatprep.subr.mxu0 0.0
        %5005 = vmatpush2.msra.mxu0 0.0
        %5006 = vmatprep.subr.mxu0 0.0
        %5007 = vmatpush2.msra.mxu0 0.0
        %5008 = vmatprep.subr.mxu0 0.0
        %5009 = vmatpush2.msra.mxu0 0.0
        %5010 = vmatprep.subr.mxu0 0.0
        %5011 = vmatpush2.msra.mxu0 0.0
        %5012 = vmatprep.subr.mxu0 0.0
        %5013 = vmatpush2.msra.mxu0 0.0
        %5014 = vmatprep.subr.mxu0 0.0
        %5015 = vmatpush2.msra.mxu0 0.0
        %5016 = vmatprep.subr.mxu0 0.0
        %5017 = vmatpush2.msra.mxu0 0.0
        %5018 = vmatprep.subr.mxu0 0.0
        %5019 = vmatpush2.msra.mxu0 0.0
        %5020 = vmatprep.subr.mxu0 0.0
        %5021 = vmatpush2.msra.mxu0 0.0
        %5022 = vmatprep.subr.mxu0 0.0
        %5023 = vmatpush2.msra.mxu0 0.0
        %5024 = vmatprep.mubr.f32.mxu0 0.0
        %5025 = vmatmul.mubr.f32.gmra.mxu0 %v4958
        %v5026 = vpop.f32.mrf.mxu0
        %v5027 = vadd.f32 0.0, %v5026
        %v5028 = vpop.f32.mrf.mxu0
        %5029 = vdwg.mxu0
        %v5030 = vadd.f32 %v4945, %v5027
        %s5031 = scalar_lea.vmem [#allocation4], 9
        %v5032 = vld [vmem:[%s5031] ss:$6 sm:$0xf]
        %s5033 = scalar_lea.vmem %s8, 576
        %v5034 = vld [vmem:[%s5033] sm:$0xff]
        %v5035 = vld [vmem:[%s5033 + $0x8] sm:$0xff]
        %v5036 = vld [vmem:[%s5033 + $0x10] sm:$0xff]
        %v5037 = vld [vmem:[%s5033 + $0x18] sm:$0xff]
        %v5038 = vld [vmem:[%s5033 + $0x20] sm:$0xff]
        %v5039 = vld [vmem:[%s5033 + $0x28] sm:$0xff]
        %v5040 = vld [vmem:[%s5033 + $0x30] sm:$0xff]
        %v5041 = vld [vmem:[%s5033 + $0x38] sm:$0xff]
        %v5043 = vsel %vm4263, %v5032, 0
        %5045 = vmatprep.subr.mxu0 0.0
        %5046 = vmatpush1.msra.mxu0 0.0
        %5047 = vmatprep.subr.mxu0 0.0
        %5048 = vmatpush1.msra.mxu0 0.0
        %5049 = vmatprep.subr.mxu0 0.0
        %5050 = vmatpush1.msra.mxu0 0.0
        %5051 = vmatprep.subr.mxu0 0.0
        %5052 = vmatpush1.msra.mxu0 0.0
        %5053 = vmatprep.subr.mxu0 0.0
        %5054 = vmatpush1.msra.mxu0 0.0
        %5055 = vmatprep.subr.mxu0 0.0
        %5056 = vmatpush1.msra.mxu0 0.0
        %5057 = vmatprep.subr.mxu0 0.0
        %5058 = vmatpush1.msra.mxu0 0.0
        %5059 = vmatprep.subr.mxu0 0.0
        %5060 = vmatpush1.msra.mxu0 0.0
        %5061 = vmatprep.subr.mxu0 0.0
        %5062 = vmatpush1.msra.mxu0 %v5041
        %5063 = vmatprep.subr.mxu0 0.0
        %5064 = vmatpush1.msra.mxu0 %v5040
        %5065 = vmatprep.subr.mxu0 0.0
        %5066 = vmatpush1.msra.mxu0 %v5039
        %5067 = vmatprep.subr.mxu0 0.0
        %5068 = vmatpush1.msra.mxu0 %v5038
        %5069 = vmatprep.subr.mxu0 0.0
        %5070 = vmatpush1.msra.mxu0 %v5037
        %5071 = vmatprep.subr.mxu0 0.0
        %5072 = vmatpush1.msra.mxu0 %v5036
        %5073 = vmatprep.subr.mxu0 0.0
        %5074 = vmatpush1.msra.mxu0 %v5035
        %5075 = vmatprep.subr.mxu0 0.0
        %5076 = vmatpush1.msra.mxu0 %v5034
        %5077 = vmatprep.subr.mxu0 0.0
        %5078 = vmatpush2.msra.mxu0 0.0
        %5079 = vmatprep.subr.mxu0 0.0
        %5080 = vmatpush2.msra.mxu0 0.0
        %5081 = vmatprep.subr.mxu0 0.0
        %5082 = vmatpush2.msra.mxu0 0.0
        %5083 = vmatprep.subr.mxu0 0.0
        %5084 = vmatpush2.msra.mxu0 0.0
        %5085 = vmatprep.subr.mxu0 0.0
        %5086 = vmatpush2.msra.mxu0 0.0
        %5087 = vmatprep.subr.mxu0 0.0
        %5088 = vmatpush2.msra.mxu0 0.0
        %5089 = vmatprep.subr.mxu0 0.0
        %5090 = vmatpush2.msra.mxu0 0.0
        %5091 = vmatprep.subr.mxu0 0.0
        %5092 = vmatpush2.msra.mxu0 0.0
        %5093 = vmatprep.subr.mxu0 0.0
        %5094 = vmatpush2.msra.mxu0 0.0
        %5095 = vmatprep.subr.mxu0 0.0
        %5096 = vmatpush2.msra.mxu0 0.0
        %5097 = vmatprep.subr.mxu0 0.0
        %5098 = vmatpush2.msra.mxu0 0.0
        %5099 = vmatprep.subr.mxu0 0.0
        %5100 = vmatpush2.msra.mxu0 0.0
        %5101 = vmatprep.subr.mxu0 0.0
        %5102 = vmatpush2.msra.mxu0 0.0
        %5103 = vmatprep.subr.mxu0 0.0
        %5104 = vmatpush2.msra.mxu0 0.0
        %5105 = vmatprep.subr.mxu0 0.0
        %5106 = vmatpush2.msra.mxu0 0.0
        %5107 = vmatprep.subr.mxu0 0.0
        %5108 = vmatpush2.msra.mxu0 0.0
        %5109 = vmatprep.mubr.f32.mxu0 0.0
        %5110 = vmatmul.mubr.f32.gmra.mxu0 %v5043
        %v5111 = vpop.f32.mrf.mxu0
        %v5112 = vadd.f32 0.0, %v5111
        %v5113 = vpop.f32.mrf.mxu0
        %5114 = vdwg.mxu0
        %v5115 = vadd.f32 %v5030, %v5112
        %s5116 = scalar_lea.vmem [#allocation4], 10
        %v5117 = vld [vmem:[%s5116] ss:$6 sm:$0xf]
        %s5118 = scalar_lea.vmem %s8, 640
        %v5119 = vld [vmem:[%s5118] sm:$0xff]
        %v5120 = vld [vmem:[%s5118 + $0x8] sm:$0xff]
        %v5121 = vld [vmem:[%s5118 + $0x10] sm:$0xff]
        %v5122 = vld [vmem:[%s5118 + $0x18] sm:$0xff]
        %v5123 = vld [vmem:[%s5118 + $0x20] sm:$0xff]
        %v5124 = vld [vmem:[%s5118 + $0x28] sm:$0xff]
        %v5125 = vld [vmem:[%s5118 + $0x30] sm:$0xff]
        %v5126 = vld [vmem:[%s5118 + $0x38] sm:$0xff]
        %v5128 = vsel %vm4263, %v5117, 0
        %5130 = vmatprep.subr.mxu0 0.0
        %5131 = vmatpush1.msra.mxu0 0.0
        %5132 = vmatprep.subr.mxu0 0.0
        %5133 = vmatpush1.msra.mxu0 0.0
        %5134 = vmatprep.subr.mxu0 0.0
        %5135 = vmatpush1.msra.mxu0 0.0
        %5136 = vmatprep.subr.mxu0 0.0
        %5137 = vmatpush1.msra.mxu0 0.0
        %5138 = vmatprep.subr.mxu0 0.0
        %5139 = vmatpush1.msra.mxu0 0.0
        %5140 = vmatprep.subr.mxu0 0.0
        %5141 = vmatpush1.msra.mxu0 0.0
        %5142 = vmatprep.subr.mxu0 0.0
        %5143 = vmatpush1.msra.mxu0 0.0
        %5144 = vmatprep.subr.mxu0 0.0
        %5145 = vmatpush1.msra.mxu0 0.0
        %5146 = vmatprep.subr.mxu0 0.0
        %5147 = vmatpush1.msra.mxu0 %v5126
        %5148 = vmatprep.subr.mxu0 0.0
        %5149 = vmatpush1.msra.mxu0 %v5125
        %5150 = vmatprep.subr.mxu0 0.0
        %5151 = vmatpush1.msra.mxu0 %v5124
        %5152 = vmatprep.subr.mxu0 0.0
        %5153 = vmatpush1.msra.mxu0 %v5123
        %5154 = vmatprep.subr.mxu0 0.0
        %5155 = vmatpush1.msra.mxu0 %v5122
        %5156 = vmatprep.subr.mxu0 0.0
        %5157 = vmatpush1.msra.mxu0 %v5121
        %5158 = vmatprep.subr.mxu0 0.0
        %5159 = vmatpush1.msra.mxu0 %v5120
        %5160 = vmatprep.subr.mxu0 0.0
        %5161 = vmatpush1.msra.mxu0 %v5119
        %5162 = vmatprep.subr.mxu0 0.0
        %5163 = vmatpush2.msra.mxu0 0.0
        %5164 = vmatprep.subr.mxu0 0.0
        %5165 = vmatpush2.msra.mxu0 0.0
        %5166 = vmatprep.subr.mxu0 0.0
        %5167 = vmatpush2.msra.mxu0 0.0
        %5168 = vmatprep.subr.mxu0 0.0
        %5169 = vmatpush2.msra.mxu0 0.0
        %5170 = vmatprep.subr.mxu0 0.0
        %5171 = vmatpush2.msra.mxu0 0.0
        %5172 = vmatprep.subr.mxu0 0.0
        %5173 = vmatpush2.msra.mxu0 0.0
        %5174 = vmatprep.subr.mxu0 0.0
        %5175 = vmatpush2.msra.mxu0 0.0
        %5176 = vmatprep.subr.mxu0 0.0
        %5177 = vmatpush2.msra.mxu0 0.0
        %5178 = vmatprep.subr.mxu0 0.0
        %5179 = vmatpush2.msra.mxu0 0.0
        %5180 = vmatprep.subr.mxu0 0.0
        %5181 = vmatpush2.msra.mxu0 0.0
        %5182 = vmatprep.subr.mxu0 0.0
        %5183 = vmatpush2.msra.mxu0 0.0
        %5184 = vmatprep.subr.mxu0 0.0
        %5185 = vmatpush2.msra.mxu0 0.0
        %5186 = vmatprep.subr.mxu0 0.0
        %5187 = vmatpush2.msra.mxu0 0.0
        %5188 = vmatprep.subr.mxu0 0.0
        %5189 = vmatpush2.msra.mxu0 0.0
        %5190 = vmatprep.subr.mxu0 0.0
        %5191 = vmatpush2.msra.mxu0 0.0
        %5192 = vmatprep.subr.mxu0 0.0
        %5193 = vmatpush2.msra.mxu0 0.0
        %5194 = vmatprep.mubr.f32.mxu0 0.0
        %5195 = vmatmul.mubr.f32.gmra.mxu0 %v5128
        %v5196 = vpop.f32.mrf.mxu0
        %v5197 = vadd.f32 0.0, %v5196
        %v5198 = vpop.f32.mrf.mxu0
        %5199 = vdwg.mxu0
        %v5200 = vadd.f32 %v5115, %v5197
        %s5201 = scalar_lea.vmem [#allocation4], 11
        %v5202 = vld [vmem:[%s5201] ss:$6 sm:$0xf]
        %s5203 = scalar_lea.vmem %s8, 704
        %v5204 = vld [vmem:[%s5203] sm:$0xff]
        %v5205 = vld [vmem:[%s5203 + $0x8] sm:$0xff]
        %v5206 = vld [vmem:[%s5203 + $0x10] sm:$0xff]
        %v5207 = vld [vmem:[%s5203 + $0x18] sm:$0xff]
        %v5208 = vld [vmem:[%s5203 + $0x20] sm:$0xff]
        %v5209 = vld [vmem:[%s5203 + $0x28] sm:$0xff]
        %v5210 = vld [vmem:[%s5203 + $0x30] sm:$0xff]
        %v5211 = vld [vmem:[%s5203 + $0x38] sm:$0xff]
        %v5213 = vsel %vm4263, %v5202, 0
        %5215 = vmatprep.subr.mxu0 0.0
        %5216 = vmatpush1.msra.mxu0 0.0
        %5217 = vmatprep.subr.mxu0 0.0
        %5218 = vmatpush1.msra.mxu0 0.0
        %5219 = vmatprep.subr.mxu0 0.0
        %5220 = vmatpush1.msra.mxu0 0.0
        %5221 = vmatprep.subr.mxu0 0.0
        %5222 = vmatpush1.msra.mxu0 0.0
        %5223 = vmatprep.subr.mxu0 0.0
        %5224 = vmatpush1.msra.mxu0 0.0
        %5225 = vmatprep.subr.mxu0 0.0
        %5226 = vmatpush1.msra.mxu0 0.0
        %5227 = vmatprep.subr.mxu0 0.0
        %5228 = vmatpush1.msra.mxu0 0.0
        %5229 = vmatprep.subr.mxu0 0.0
        %5230 = vmatpush1.msra.mxu0 0.0
        %5231 = vmatprep.subr.mxu0 0.0
        %5232 = vmatpush1.msra.mxu0 %v5211
        %5233 = vmatprep.subr.mxu0 0.0
        %5234 = vmatpush1.msra.mxu0 %v5210
        %5235 = vmatprep.subr.mxu0 0.0
        %5236 = vmatpush1.msra.mxu0 %v5209
        %5237 = vmatprep.subr.mxu0 0.0
        %5238 = vmatpush1.msra.mxu0 %v5208
        %5239 = vmatprep.subr.mxu0 0.0
        %5240 = vmatpush1.msra.mxu0 %v5207
        %5241 = vmatprep.subr.mxu0 0.0
        %5242 = vmatpush1.msra.mxu0 %v5206
        %5243 = vmatprep.subr.mxu0 0.0
        %5244 = vmatpush1.msra.mxu0 %v5205
        %5245 = vmatprep.subr.mxu0 0.0
        %5246 = vmatpush1.msra.mxu0 %v5204
        %5247 = vmatprep.subr.mxu0 0.0
        %5248 = vmatpush2.msra.mxu0 0.0
        %5249 = vmatprep.subr.mxu0 0.0
        %5250 = vmatpush2.msra.mxu0 0.0
        %5251 = vmatprep.subr.mxu0 0.0
        %5252 = vmatpush2.msra.mxu0 0.0
        %5253 = vmatprep.subr.mxu0 0.0
        %5254 = vmatpush2.msra.mxu0 0.0
        %5255 = vmatprep.subr.mxu0 0.0
        %5256 = vmatpush2.msra.mxu0 0.0
        %5257 = vmatprep.subr.mxu0 0.0
        %5258 = vmatpush2.msra.mxu0 0.0
        %5259 = vmatprep.subr.mxu0 0.0
        %5260 = vmatpush2.msra.mxu0 0.0
        %5261 = vmatprep.subr.mxu0 0.0
        %5262 = vmatpush2.msra.mxu0 0.0
        %5263 = vmatprep.subr.mxu0 0.0
        %5264 = vmatpush2.msra.mxu0 0.0
        %5265 = vmatprep.subr.mxu0 0.0
        %5266 = vmatpush2.msra.mxu0 0.0
        %5267 = vmatprep.subr.mxu0 0.0
        %5268 = vmatpush2.msra.mxu0 0.0
        %5269 = vmatprep.subr.mxu0 0.0
        %5270 = vmatpush2.msra.mxu0 0.0
        %5271 = vmatprep.subr.mxu0 0.0
        %5272 = vmatpush2.msra.mxu0 0.0
        %5273 = vmatprep.subr.mxu0 0.0
        %5274 = vmatpush2.msra.mxu0 0.0
        %5275 = vmatprep.subr.mxu0 0.0
        %5276 = vmatpush2.msra.mxu0 0.0
        %5277 = vmatprep.subr.mxu0 0.0
        %5278 = vmatpush2.msra.mxu0 0.0
        %5279 = vmatprep.mubr.f32.mxu0 0.0
        %5280 = vmatmul.mubr.f32.gmra.mxu0 %v5213
        %v5281 = vpop.f32.mrf.mxu0
        %v5282 = vadd.f32 0.0, %v5281
        %v5283 = vpop.f32.mrf.mxu0
        %5284 = vdwg.mxu0
        %v5285 = vadd.f32 %v5200, %v5282
        %s5286 = scalar_lea.vmem [#allocation4], 12
        %v5287 = vld [vmem:[%s5286] ss:$6 sm:$0xf]
        %s5288 = scalar_lea.vmem %s8, 768
        %v5289 = vld [vmem:[%s5288] sm:$0xff]
        %v5290 = vld [vmem:[%s5288 + $0x8] sm:$0xff]
        %v5291 = vld [vmem:[%s5288 + $0x10] sm:$0xff]
        %v5292 = vld [vmem:[%s5288 + $0x18] sm:$0xff]
        %v5293 = vld [vmem:[%s5288 + $0x20] sm:$0xff]
        %v5294 = vld [vmem:[%s5288 + $0x28] sm:$0xff]
        %v5295 = vld [vmem:[%s5288 + $0x30] sm:$0xff]
        %v5296 = vld [vmem:[%s5288 + $0x38] sm:$0xff]
        %v5298 = vsel %vm4263, %v5287, 0
        %5300 = vmatprep.subr.mxu0 0.0
        %5301 = vmatpush1.msra.mxu0 0.0
        %5302 = vmatprep.subr.mxu0 0.0
        %5303 = vmatpush1.msra.mxu0 0.0
        %5304 = vmatprep.subr.mxu0 0.0
        %5305 = vmatpush1.msra.mxu0 0.0
        %5306 = vmatprep.subr.mxu0 0.0
        %5307 = vmatpush1.msra.mxu0 0.0
        %5308 = vmatprep.subr.mxu0 0.0
        %5309 = vmatpush1.msra.mxu0 0.0
        %5310 = vmatprep.subr.mxu0 0.0
        %5311 = vmatpush1.msra.mxu0 0.0
        %5312 = vmatprep.subr.mxu0 0.0
        %5313 = vmatpush1.msra.mxu0 0.0
        %5314 = vmatprep.subr.mxu0 0.0
        %5315 = vmatpush1.msra.mxu0 0.0
        %5316 = vmatprep.subr.mxu0 0.0
        %5317 = vmatpush1.msra.mxu0 %v5296
        %5318 = vmatprep.subr.mxu0 0.0
        %5319 = vmatpush1.msra.mxu0 %v5295
        %5320 = vmatprep.subr.mxu0 0.0
        %5321 = vmatpush1.msra.mxu0 %v5294
        %5322 = vmatprep.subr.mxu0 0.0
        %5323 = vmatpush1.msra.mxu0 %v5293
        %5324 = vmatprep.subr.mxu0 0.0
        %5325 = vmatpush1.msra.mxu0 %v5292
        %5326 = vmatprep.subr.mxu0 0.0
        %5327 = vmatpush1.msra.mxu0 %v5291
        %5328 = vmatprep.subr.mxu0 0.0
        %5329 = vmatpush1.msra.mxu0 %v5290
        %5330 = vmatprep.subr.mxu0 0.0
        %5331 = vmatpush1.msra.mxu0 %v5289
        %5332 = vmatprep.subr.mxu0 0.0
        %5333 = vmatpush2.msra.mxu0 0.0
        %5334 = vmatprep.subr.mxu0 0.0
        %5335 = vmatpush2.msra.mxu0 0.0
        %5336 = vmatprep.subr.mxu0 0.0
        %5337 = vmatpush2.msra.mxu0 0.0
        %5338 = vmatprep.subr.mxu0 0.0
        %5339 = vmatpush2.msra.mxu0 0.0
        %5340 = vmatprep.subr.mxu0 0.0
        %5341 = vmatpush2.msra.mxu0 0.0
        %5342 = vmatprep.subr.mxu0 0.0
        %5343 = vmatpush2.msra.mxu0 0.0
        %5344 = vmatprep.subr.mxu0 0.0
        %5345 = vmatpush2.msra.mxu0 0.0
        %5346 = vmatprep.subr.mxu0 0.0
        %5347 = vmatpush2.msra.mxu0 0.0
        %5348 = vmatprep.subr.mxu0 0.0
        %5349 = vmatpush2.msra.mxu0 0.0
        %5350 = vmatprep.subr.mxu0 0.0
        %5351 = vmatpush2.msra.mxu0 0.0
        %5352 = vmatprep.subr.mxu0 0.0
        %5353 = vmatpush2.msra.mxu0 0.0
        %5354 = vmatprep.subr.mxu0 0.0
        %5355 = vmatpush2.msra.mxu0 0.0
        %5356 = vmatprep.subr.mxu0 0.0
        %5357 = vmatpush2.msra.mxu0 0.0
        %5358 = vmatprep.subr.mxu0 0.0
        %5359 = vmatpush2.msra.mxu0 0.0
        %5360 = vmatprep.subr.mxu0 0.0
        %5361 = vmatpush2.msra.mxu0 0.0
        %5362 = vmatprep.subr.mxu0 0.0
        %5363 = vmatpush2.msra.mxu0 0.0
        %5364 = vmatprep.mubr.f32.mxu0 0.0
        %5365 = vmatmul.mubr.f32.gmra.mxu0 %v5298
        %v5366 = vpop.f32.mrf.mxu0
        %v5367 = vadd.f32 0.0, %v5366
        %v5368 = vpop.f32.mrf.mxu0
        %5369 = vdwg.mxu0
        %v5370 = vadd.f32 %v5285, %v5367
        %s5371 = scalar_lea.vmem [#allocation4], 13
        %v5372 = vld [vmem:[%s5371] ss:$6 sm:$0xf]
        %s5373 = scalar_lea.vmem %s8, 832
        %v5374 = vld [vmem:[%s5373] sm:$0xff]
        %v5375 = vld [vmem:[%s5373 + $0x8] sm:$0xff]
        %v5376 = vld [vmem:[%s5373 + $0x10] sm:$0xff]
        %v5377 = vld [vmem:[%s5373 + $0x18] sm:$0xff]
        %v5378 = vld [vmem:[%s5373 + $0x20] sm:$0xff]
        %v5379 = vld [vmem:[%s5373 + $0x28] sm:$0xff]
        %v5380 = vld [vmem:[%s5373 + $0x30] sm:$0xff]
        %v5381 = vld [vmem:[%s5373 + $0x38] sm:$0xff]
        %v5383 = vsel %vm4263, %v5372, 0
        %5385 = vmatprep.subr.mxu0 0.0
        %5386 = vmatpush1.msra.mxu0 0.0
        %5387 = vmatprep.subr.mxu0 0.0
        %5388 = vmatpush1.msra.mxu0 0.0
        %5389 = vmatprep.subr.mxu0 0.0
        %5390 = vmatpush1.msra.mxu0 0.0
        %5391 = vmatprep.subr.mxu0 0.0
        %5392 = vmatpush1.msra.mxu0 0.0
        %5393 = vmatprep.subr.mxu0 0.0
        %5394 = vmatpush1.msra.mxu0 0.0
        %5395 = vmatprep.subr.mxu0 0.0
        %5396 = vmatpush1.msra.mxu0 0.0
        %5397 = vmatprep.subr.mxu0 0.0
        %5398 = vmatpush1.msra.mxu0 0.0
        %5399 = vmatprep.subr.mxu0 0.0
        %5400 = vmatpush1.msra.mxu0 0.0
        %5401 = vmatprep.subr.mxu0 0.0
        %5402 = vmatpush1.msra.mxu0 %v5381
        %5403 = vmatprep.subr.mxu0 0.0
        %5404 = vmatpush1.msra.mxu0 %v5380
        %5405 = vmatprep.subr.mxu0 0.0
        %5406 = vmatpush1.msra.mxu0 %v5379
        %5407 = vmatprep.subr.mxu0 0.0
        %5408 = vmatpush1.msra.mxu0 %v5378
        %5409 = vmatprep.subr.mxu0 0.0
        %5410 = vmatpush1.msra.mxu0 %v5377
        %5411 = vmatprep.subr.mxu0 0.0
        %5412 = vmatpush1.msra.mxu0 %v5376
        %5413 = vmatprep.subr.mxu0 0.0
        %5414 = vmatpush1.msra.mxu0 %v5375
        %5415 = vmatprep.subr.mxu0 0.0
        %5416 = vmatpush1.msra.mxu0 %v5374
        %5417 = vmatprep.subr.mxu0 0.0
        %5418 = vmatpush2.msra.mxu0 0.0
        %5419 = vmatprep.subr.mxu0 0.0
        %5420 = vmatpush2.msra.mxu0 0.0
        %5421 = vmatprep.subr.mxu0 0.0
        %5422 = vmatpush2.msra.mxu0 0.0
        %5423 = vmatprep.subr.mxu0 0.0
        %5424 = vmatpush2.msra.mxu0 0.0
        %5425 = vmatprep.subr.mxu0 0.0
        %5426 = vmatpush2.msra.mxu0 0.0
        %5427 = vmatprep.subr.mxu0 0.0
        %5428 = vmatpush2.msra.mxu0 0.0
        %5429 = vmatprep.subr.mxu0 0.0
        %5430 = vmatpush2.msra.mxu0 0.0
        %5431 = vmatprep.subr.mxu0 0.0
        %5432 = vmatpush2.msra.mxu0 0.0
        %5433 = vmatprep.subr.mxu0 0.0
        %5434 = vmatpush2.msra.mxu0 0.0
        %5435 = vmatprep.subr.mxu0 0.0
        %5436 = vmatpush2.msra.mxu0 0.0
        %5437 = vmatprep.subr.mxu0 0.0
        %5438 = vmatpush2.msra.mxu0 0.0
        %5439 = vmatprep.subr.mxu0 0.0
        %5440 = vmatpush2.msra.mxu0 0.0
        %5441 = vmatprep.subr.mxu0 0.0
        %5442 = vmatpush2.msra.mxu0 0.0
        %5443 = vmatprep.subr.mxu0 0.0
        %5444 = vmatpush2.msra.mxu0 0.0
        %5445 = vmatprep.subr.mxu0 0.0
        %5446 = vmatpush2.msra.mxu0 0.0
        %5447 = vmatprep.subr.mxu0 0.0
        %5448 = vmatpush2.msra.mxu0 0.0
        %5449 = vmatprep.mubr.f32.mxu0 0.0
        %5450 = vmatmul.mubr.f32.gmra.mxu0 %v5383
        %v5451 = vpop.f32.mrf.mxu0
        %v5452 = vadd.f32 0.0, %v5451
        %v5453 = vpop.f32.mrf.mxu0
        %5454 = vdwg.mxu0
        %v5455 = vadd.f32 %v5370, %v5452
        %s5456 = scalar_lea.vmem [#allocation4], 14
        %v5457 = vld [vmem:[%s5456] ss:$6 sm:$0xf]
        %s5458 = scalar_lea.vmem %s8, 896
        %v5459 = vld [vmem:[%s5458] sm:$0xff]
        %v5460 = vld [vmem:[%s5458 + $0x8] sm:$0xff]
        %v5461 = vld [vmem:[%s5458 + $0x10] sm:$0xff]
        %v5462 = vld [vmem:[%s5458 + $0x18] sm:$0xff]
        %v5463 = vld [vmem:[%s5458 + $0x20] sm:$0xff]
        %v5464 = vld [vmem:[%s5458 + $0x28] sm:$0xff]
        %v5465 = vld [vmem:[%s5458 + $0x30] sm:$0xff]
        %v5466 = vld [vmem:[%s5458 + $0x38] sm:$0xff]
        %v5468 = vsel %vm4263, %v5457, 0
        %5470 = vmatprep.subr.mxu0 0.0
        %5471 = vmatpush1.msra.mxu0 0.0
        %5472 = vmatprep.subr.mxu0 0.0
        %5473 = vmatpush1.msra.mxu0 0.0
        %5474 = vmatprep.subr.mxu0 0.0
        %5475 = vmatpush1.msra.mxu0 0.0
        %5476 = vmatprep.subr.mxu0 0.0
        %5477 = vmatpush1.msra.mxu0 0.0
        %5478 = vmatprep.subr.mxu0 0.0
        %5479 = vmatpush1.msra.mxu0 0.0
        %5480 = vmatprep.subr.mxu0 0.0
        %5481 = vmatpush1.msra.mxu0 0.0
        %5482 = vmatprep.subr.mxu0 0.0
        %5483 = vmatpush1.msra.mxu0 0.0
        %5484 = vmatprep.subr.mxu0 0.0
        %5485 = vmatpush1.msra.mxu0 0.0
        %5486 = vmatprep.subr.mxu0 0.0
        %5487 = vmatpush1.msra.mxu0 %v5466
        %5488 = vmatprep.subr.mxu0 0.0
        %5489 = vmatpush1.msra.mxu0 %v5465
        %5490 = vmatprep.subr.mxu0 0.0
        %5491 = vmatpush1.msra.mxu0 %v5464
        %5492 = vmatprep.subr.mxu0 0.0
        %5493 = vmatpush1.msra.mxu0 %v5463
        %5494 = vmatprep.subr.mxu0 0.0
        %5495 = vmatpush1.msra.mxu0 %v5462
        %5496 = vmatprep.subr.mxu0 0.0
        %5497 = vmatpush1.msra.mxu0 %v5461
        %5498 = vmatprep.subr.mxu0 0.0
        %5499 = vmatpush1.msra.mxu0 %v5460
        %5500 = vmatprep.subr.mxu0 0.0
        %5501 = vmatpush1.msra.mxu0 %v5459
        %5502 = vmatprep.subr.mxu0 0.0
        %5503 = vmatpush2.msra.mxu0 0.0
        %5504 = vmatprep.subr.mxu0 0.0
        %5505 = vmatpush2.msra.mxu0 0.0
        %5506 = vmatprep.subr.mxu0 0.0
        %5507 = vmatpush2.msra.mxu0 0.0
        %5508 = vmatprep.subr.mxu0 0.0
        %5509 = vmatpush2.msra.mxu0 0.0
        %5510 = vmatprep.subr.mxu0 0.0
        %5511 = vmatpush2.msra.mxu0 0.0
        %5512 = vmatprep.subr.mxu0 0.0
        %5513 = vmatpush2.msra.mxu0 0.0
        %5514 = vmatprep.subr.mxu0 0.0
        %5515 = vmatpush2.msra.mxu0 0.0
        %5516 = vmatprep.subr.mxu0 0.0
        %5517 = vmatpush2.msra.mxu0 0.0
        %5518 = vmatprep.subr.mxu0 0.0
        %5519 = vmatpush2.msra.mxu0 0.0
        %5520 = vmatprep.subr.mxu0 0.0
        %5521 = vmatpush2.msra.mxu0 0.0
        %5522 = vmatprep.subr.mxu0 0.0
        %5523 = vmatpush2.msra.mxu0 0.0
        %5524 = vmatprep.subr.mxu0 0.0
        %5525 = vmatpush2.msra.mxu0 0.0
        %5526 = vmatprep.subr.mxu0 0.0
        %5527 = vmatpush2.msra.mxu0 0.0
        %5528 = vmatprep.subr.mxu0 0.0
        %5529 = vmatpush2.msra.mxu0 0.0
        %5530 = vmatprep.subr.mxu0 0.0
        %5531 = vmatpush2.msra.mxu0 0.0
        %5532 = vmatprep.subr.mxu0 0.0
        %5533 = vmatpush2.msra.mxu0 0.0
        %5534 = vmatprep.mubr.f32.mxu0 0.0
        %5535 = vmatmul.mubr.f32.gmra.mxu0 %v5468
        %v5536 = vpop.f32.mrf.mxu0
        %v5537 = vadd.f32 0.0, %v5536
        %v5538 = vpop.f32.mrf.mxu0
        %5539 = vdwg.mxu0
        %v5540 = vadd.f32 %v5455, %v5537
        %v5541 = vld [vmem:[%s9] sm:$0x1]
        %v5543 = vlaneseq
        %v5544 = vshrl.u32 %v5543, 7
        %v5545 = vsub.s32 0, %v5544
        %v5546 = vrot.slane %v5541, %v5545
        %v5548 = vadd.f32 %v5540, %v5546
        %vm5549 = vcmask 257024
        %5550 = vst.msk [vmem:[%s352] sm:$0xf] %vm5549, %v5548
        %s5551 = sand.u32 %s247, 1
        %s5552 = scalar_lea.sflag [#allocation6], %s5551
        %s5553 = sand.u32 %s247, 1
        %s5554 = smul.addr %s5553, 4
        %s5555 = scalar_lea.vmem [#allocation5], %s5554
        // Predicated region
        $region61: #{wav_encoder_forward.1} parent=59 // pred_check
          %p5556 = pneg %p257
        $region62: #{wav_encoder_forward.1} parent=59 // pred_check_branch
          %5558 = sbr.rel (%p5556) target = $region64
        $region63: #{wav_encoder_forward.1} parent=59 // pred_region
          %s5560 = ssub.s32 64, 64
          %5561 = vsyncadd %s5552, %s5560
          %s5562 = smul.addr %s24, 64
          %s5563 = scalar_lea.hbm %s10, %s5562
          %s5565 = sshll.u32 %s5555, 4
          %s5566 = int_to_ptr.vmem [resolvable:$true] %s5565
          %5568 = dma.vmem_to_hbm [thread:$0]  %s5566, 64, %s5563, %s5552
        $region64: #{wav_encoder_forward.1} parent=59 // pred_fallthru
          _
      $region60: #{wav_encoder_forward.1} parent=5 // pred_fallthru
        _
      %p5569 = scmp.le.s32.totalorder 2, %s19
      // Predicated region
      $region65: #{wav_encoder_forward.1} parent=5 // pred_check
        %p5570 = pneg %p5569
      $region66: #{wav_encoder_forward.1} parent=5 // pred_check_branch
        %5572 = sbr.rel (%p5570) target = $region68
      $region67: #{wav_encoder_forward.1} parent=5 // pred_region
        %s5573 = ssub.s32 %s19, 2
        // Predicated region
        $region69: #{wav_encoder_forward.1} parent=67 // pred_check
          %p5574 = pneg %p263
        $region70: #{wav_encoder_forward.1} parent=67 // pred_check_branch
          %5576 = sbr.rel (%p5574) target = $region72
        $region71: #{wav_encoder_forward.1} parent=67 // pred_region
          %s5577 = sand.u32 %s248, 1
          %s5578 = scalar_lea.sflag [#allocation6], %s5577
          %s5579 = sand.u32 %s248, 1
          %s5580 = smul.addr %s5579, 4
          %s5581 = scalar_lea.vmem [#allocation5], %s5580
          %5582 = dma.done %s5578, 64
        $region72: #{wav_encoder_forward.1} parent=67 // pred_fallthru
          _
      $region68: #{wav_encoder_forward.1} parent=5 // pred_fallthru
        _
    $region6: #{wav_encoder_forward.1} parent=1 // loop_footer
      %s23 = sadd.s32 1, %s19
    $region7: #{wav_encoder_forward.1} parent=1 // loop_footer_branch
      %18 = sbr.rel target = $region3
    $region8: #{wav_encoder_forward.1} parent=1 // loop_exit
      _
    %5583 = vsyncpa [#allocation6], 1
    %s5584 = scalar_lea.sflag [#allocation6], 1
    %5585 = vsyncpa %s5584, 1

</llo_original>
